<compile_context>
chip_gen: v7x
topology: tpu7x:2x2x1
jax: 0.10.0
libtpu: 0.0.40
codegen_flags: <defaults>
</compile_context>

<pallas_src>
import functools

import jax
import jax.numpy as jnp
from jax.experimental import pallas as pl
from jax.experimental.pallas import tpu as pltpu


_DENSE_BM = 512  # M-tile (rows) for the batched dense kernels


def _m_tiling(M, bm_max=_DENSE_BM):
    """Pick an M tile: full array when small, 512-row tiles when large."""
    if M <= bm_max:
        return M, 1
    return bm_max, pl.cdiv(M, bm_max)


def _pick_time_block(T, cap=8):
    """Largest divisor of T that is <= cap (timesteps per grid step)."""
    tb = min(cap, T)
    while T % tb:
        tb -= 1
    return tb


# ---------------------------------------------------------------------------
# Fused highway MLP kernel: relu(relu(x @ W1 + b1) @ W2 + b2), tiled over M.
# ---------------------------------------------------------------------------
def _highway_kernel(x_ref, w1_ref, b1_ref, w2_ref, b2_ref, o_ref):
    h1 = jnp.dot(x_ref[...], w1_ref[...], preferred_element_type=jnp.float32)
    h1 = jnp.maximum(h1 + b1_ref[...], 0.0)
    h2 = jnp.dot(h1, w2_ref[...], preferred_element_type=jnp.float32)
    o_ref[...] = jnp.maximum(h2 + b2_ref[...], 0.0)


def highway(x, w1, b1, w2, b2):
    """x: (M, Fin), w1: (Fin, H), w2: (H, H), b*: (1, H) -> (M, H)."""
    M, Fin = x.shape
    H = w1.shape[1]
    bm, gm = _m_tiling(M)
    return pl.pallas_call(
        _highway_kernel,
        grid=(gm,),
        in_specs=[
            pl.BlockSpec((bm, Fin), lambda i: (i, 0)),
            pl.BlockSpec((Fin, H), lambda i: (0, 0)),
            pl.BlockSpec((1, H), lambda i: (0, 0)),
            pl.BlockSpec((H, H), lambda i: (0, 0)),
            pl.BlockSpec((1, H), lambda i: (0, 0)),
        ],
        out_specs=pl.BlockSpec((bm, H), lambda i: (i, 0)),
        out_shape=jax.ShapeDtypeStruct((M, H), jnp.float32),
        compiler_params=pltpu.CompilerParams(dimension_semantics=("parallel",)),
    )(x, w1, b1, w2, b2)


# ---------------------------------------------------------------------------
# Fused dual-direction input projection:
#   y = x @ [W_ih_fwd^T | W_ih_bwd^T] + [b_fwd | b_bwd]   -> split into fwd/bwd
# ---------------------------------------------------------------------------
def _dual_proj_kernel(x_ref, w_ref, b_ref, of_ref, ob_ref, *, g3):
    y = jnp.dot(x_ref[...], w_ref[...], preferred_element_type=jnp.float32)
    y = y + b_ref[...]
    of_ref[...] = y[:, :g3]
    ob_ref[...] = y[:, g3:]


def dual_input_proj(x, w_cat, b_cat, H):
    """x: (M, F), w_cat: (F, 6H), b_cat: (1, 6H) -> two (M, 3H) gate tensors."""
    M, F = x.shape
    g3 = 3 * H
    bm, gm = _m_tiling(M)
    return pl.pallas_call(
        functools.partial(_dual_proj_kernel, g3=g3),
        grid=(gm,),
        in_specs=[
            pl.BlockSpec((bm, F), lambda i: (i, 0)),
            pl.BlockSpec((F, 2 * g3), lambda i: (0, 0)),
            pl.BlockSpec((1, 2 * g3), lambda i: (0, 0)),
        ],
        out_specs=(
            pl.BlockSpec((bm, g3), lambda i: (i, 0)),
            pl.BlockSpec((bm, g3), lambda i: (i, 0)),
        ),
        out_shape=(
            jax.ShapeDtypeStruct((M, g3), jnp.float32),
            jax.ShapeDtypeStruct((M, g3), jnp.float32),
        ),
        compiler_params=pltpu.CompilerParams(dimension_semantics=("parallel",)),
    )(x, w_cat, b_cat)


# ---------------------------------------------------------------------------
# Fused bidirectional GRU scan kernel.
# grid = (T // Tb,) walks time sequentially; each grid step processes Tb
# timesteps for BOTH directions (forward reads time block t, backward reads
# the mirrored block nb-1-t).  Hidden states live in VMEM scratch.
# PyTorch gate order: r, z, n.
# ---------------------------------------------------------------------------
def _bigru_scan_kernel(gxf_ref, gxb_ref, whf_ref, bhf_ref, whb_ref, bhb_ref,
                       outf_ref, outb_ref, hf_scr, hb_scr, *, hidden, tb):
    @pl.when(pl.program_id(0) == 0)
    def _():
        hf_scr[...] = jnp.zeros_like(hf_scr)
        hb_scr[...] = jnp.zeros_like(hb_scr)

    H = hidden
    # Hoist block / weight loads out of the unrolled time loop.
    gxf = gxf_ref[...]          # (B, Tb, 3H) : x-gates, forward time block
    gxb = gxb_ref[...]          # (B, Tb, 3H) : x-gates, mirrored time block
    whf = whf_ref[...]          # (H, 3H)
    bhf = bhf_ref[...]          # (1, 3H)
    whb = whb_ref[...]
    bhb = bhb_ref[...]
    hf = hf_scr[...]            # (B, H)
    hb = hb_scr[...]

    def cell(gx, h, wh, bh):
        gh = jnp.dot(h, wh, preferred_element_type=jnp.float32) + bh
        r = jax.nn.sigmoid(gx[:, :H] + gh[:, :H])
        z = jax.nn.sigmoid(gx[:, H:2 * H] + gh[:, H:2 * H])
        n = jnp.tanh(gx[:, 2 * H:] + r * gh[:, 2 * H:])
        return (1.0 - z) * n + z * h

    outs_f = []
    outs_b = []
    # Static (fully unrolled) loop over the Tb timesteps of this block:
    # amortizes the per-grid-step overhead over Tb recurrent updates.
    for s in range(tb):
        hf = cell(gxf[:, s, :], hf, whf, bhf)
        outs_f.append(hf)
        hb = cell(gxb[:, tb - 1 - s, :], hb, whb, bhb)
        outs_b.append(hb)

    hf_scr[...] = hf
    hb_scr[...] = hb
    # One dense block store per direction instead of Tb tiny masked stores.
    outf_ref[...] = jnp.stack(outs_f, axis=1)           # (B, Tb, H)
    outb_ref[...] = jnp.stack(outs_b[::-1], axis=1)     # back to time order


def bigru_layer(x, w_ih_f, w_hh_f, b_ih_f, b_hh_f,
                w_ih_b, w_hh_b, b_ih_b, b_hh_b, *, time_block=8):
    """One bidirectional GRU layer.  x: (B, T, F).

    Returns out: (B, T, 2H), h_n_fwd: (B, H), h_n_bwd: (B, H).
    """
    B, T, F = x.shape
    H = w_hh_f.shape[1]
    Tb = _pick_time_block(T, time_block)
    nb = T // Tb

    # Fused input projection for both directions (one wide matmul).
    w_cat = jnp.concatenate([w_ih_f.T, w_ih_b.T], axis=1)        # (F, 6H)
    b_cat = jnp.concatenate([b_ih_f, b_ih_b])[None, :]           # (1, 6H)
    gxf, gxb = dual_input_proj(x.reshape(B * T, F), w_cat, b_cat, H)
    gxf = gxf.reshape(B, T, 3 * H)
    gxb = gxb.reshape(B, T, 3 * H)

    out_f, out_b = pl.pallas_call(
        functools.partial(_bigru_scan_kernel, hidden=H, tb=Tb),
        grid=(nb,),
        in_specs=[
            pl.BlockSpec((B, Tb, 3 * H), lambda t: (0, t, 0)),            # fwd gates
            pl.BlockSpec((B, Tb, 3 * H), lambda t: (0, nb - 1 - t, 0)),   # bwd gates
            pl.BlockSpec((H, 3 * H), lambda t: (0, 0)),                   # W_hh fwd^T
            pl.BlockSpec((1, 3 * H), lambda t: (0, 0)),                   # b_hh fwd
            pl.BlockSpec((H, 3 * H), lambda t: (0, 0)),                   # W_hh bwd^T
            pl.BlockSpec((1, 3 * H), lambda t: (0, 0)),                   # b_hh bwd
        ],
        out_specs=(
            pl.BlockSpec((B, Tb, H), lambda t: (0, t, 0)),
            pl.BlockSpec((B, Tb, H), lambda t: (0, nb - 1 - t, 0)),
        ),
        out_shape=(
            jax.ShapeDtypeStruct((B, T, H), jnp.float32),
            jax.ShapeDtypeStruct((B, T, H), jnp.float32),
        ),
        scratch_shapes=[
            pltpu.VMEM((B, H), jnp.float32),
            pltpu.VMEM((B, H), jnp.float32),
        ],
        compiler_params=pltpu.CompilerParams(
            dimension_semantics=("arbitrary",)),   # time scan is sequential
    )(gxf, gxb, w_hh_f.T, b_hh_f[None, :], w_hh_b.T, b_hh_b[None, :])

    out = jnp.concatenate([out_f, out_b], axis=-1)       # (B, T, 2H)
    return out, out_f[:, T - 1, :], out_b[:, 0, :]


# ---------------------------------------------------------------------------
# Full GRUEncoder forward (eval mode).
# ---------------------------------------------------------------------------
def gru_encoder_forward(x, params, hidden_size, num_layers, time_block=8):
    B, T, Fin = x.shape
    H = hidden_size

    cur = highway(
        x.reshape(B * T, Fin),
        params["hw_w1"].T, params["hw_b1"][None, :],
        params["hw_w2"].T, params["hw_b2"][None, :],
    ).reshape(B, T, H)

    hiddens = []
    for layer in range(num_layers):
        f = f"l{layer}"
        b = f"l{layer}_reverse"
        cur, hf, hb = bigru_layer(
            cur,
            params[f"w_ih_{f}"], params[f"w_hh_{f}"],
            params[f"b_ih_{f}"], params[f"b_hh_{f}"],
            params[f"w_ih_{b}"], params[f"w_hh_{b}"],
            params[f"b_ih_{b}"], params[f"b_hh_{b}"],
            time_block=time_block,
        )
        hiddens.append(hf)
        hiddens.append(hb)

    out = cur                                # (B, T, 2H)
    hidden = jnp.stack(hiddens, axis=0)      # (num_layers*2, B, H)

    # nn.Dropout / GRU inter-layer dropout are identity in eval mode.
    # TODO(synk): training-mode dropout (p=0.2) with pltpu PRNG masks not implemented.
    return out, hidden


# ---------------------------------------------------------------------------
# Deterministic parameter init (shapes follow the PyTorch module's __init__).
# ---------------------------------------------------------------------------
def init_params(key, in_features, hidden, num_layers):
    params = {}
    bound = 1.0 / jnp.sqrt(hidden).astype(jnp.float32)
    keys = iter(jax.random.split(key, 4 + num_layers * 8))

    def u(shape):
        return jax.random.uniform(next(keys), shape, jnp.float32, -bound, bound)

    params["hw_w1"] = u((hidden, in_features))
    params["hw_b1"] = u((hidden,))
    params["hw_w2"] = u((hidden, hidden))
    params["hw_b2"] = u((hidden,))

    for layer in range(num_layers):
        in_sz = hidden if layer == 0 else 2 * hidden
        for d in range(2):
            sfx = f"l{layer}" + ("_reverse" if d == 1 else "")
            params[f"w_ih_{sfx}"] = u((3 * hidden, in_sz))
            params[f"w_hh_{sfx}"] = u((3 * hidden, hidden))
            params[f"b_ih_{sfx}"] = u((3 * hidden,))
            params[f"b_hh_{sfx}"] = u((3 * hidden,))
    return params


# ---------------------------------------------------------------------------
# Pure-JAX reference (mirrors torch.nn.GRU semantics) for a correctness check.
# ---------------------------------------------------------------------------
def _ref_gru_dir(x, w_ih, w_hh, b_ih, b_hh, reverse, H):
    B, T, _ = x.shape
    h = jnp.zeros((B, H), jnp.float32)
    outs = [None] * T
    time_order = range(T - 1, -1, -1) if reverse else range(T)
    for t in time_order:
        gi = x[:, t] @ w_ih.T + b_ih
        gh = h @ w_hh.T + b_hh
        r = jax.nn.sigmoid(gi[:, :H] + gh[:, :H])
        z = jax.nn.sigmoid(gi[:, H:2 * H] + gh[:, H:2 * H])
        n = jnp.tanh(gi[:, 2 * H:] + r * gh[:, 2 * H:])
        h = (1.0 - z) * n + z * h
        outs[t] = h
    return jnp.stack(outs, axis=1), h


def reference_forward(x, params, hidden_size, num_layers):
    B, T, Fin = x.shape
    H = hidden_size
    h1 = jnp.maximum(x.reshape(B * T, Fin) @ params["hw_w1"].T + params["hw_b1"], 0.0)
    h2 = jnp.maximum(h1 @ params["hw_w2"].T + params["hw_b2"], 0.0)
    cur = h2.reshape(B, T, H)
    hiddens = []
    for layer in range(num_layers):
        outs = []
        for d in range(2):
            sfx = f"l{layer}" + ("_reverse" if d == 1 else "")
            o, hn = _ref_gru_dir(
                cur, params[f"w_ih_{sfx}"], params[f"w_hh_{sfx}"],
                params[f"b_ih_{sfx}"], params[f"b_hh_{sfx}"],
                reverse=(d == 1), H=H,
            )
            outs.append(o)
            hiddens.append(hn)
        cur = jnp.concatenate(outs, axis=-1)
    return cur, jnp.stack(hiddens, axis=0)


if __name__ == "__main__":
    # T=16 with time_block=8 -> 2 grid steps per layer: exercises the
    # cross-block hidden-state carry and mirrored backward block indexing.
    B, T, IN_FEATURES, HIDDEN, LAYERS = 2, 16, 12, 32, 2

    key = jax.random.PRNGKey(0)
    kx, kp = jax.random.split(key)
    x = jax.random.normal(kx, (B, T, IN_FEATURES), jnp.float32)
    params = init_params(kp, IN_FEATURES, HIDDEN, LAYERS)

    fwd = jax.jit(gru_encoder_forward, static_argnums=(2, 3, 4))
    out, hidden = fwd(x, params, HIDDEN, LAYERS, 8)
    out, hidden = jax.block_until_ready((out, hidden))

    assert out.shape == (B, T, 2 * HIDDEN), out.shape
    assert hidden.shape == (2 * LAYERS, B, HIDDEN), hidden.shape

    ref_out, ref_hidden = reference_forward(x, params, HIDDEN, LAYERS)
    assert jnp.allclose(out, ref_out, atol=2e-3, rtol=2e-3), (
        float(jnp.max(jnp.abs(out - ref_out))))
    assert jnp.allclose(hidden, ref_hidden, atol=2e-3, rtol=2e-3), (
        float(jnp.max(jnp.abs(hidden - ref_hidden))))

    print("KERNEL_OK")
</pallas_src>

<mosaic_0001>
module attributes {stable_mosaic.version = 11 : i64} {
  func.func @_highway_kernel(%arg0: i32, %arg1: memref<32x12xf32, #tpu.memory_space<vmem>>, %arg2: memref<12x32xf32, #tpu.memory_space<vmem>>, %arg3: memref<1x32xf32, #tpu.memory_space<vmem>>, %arg4: memref<32x32xf32, #tpu.memory_space<vmem>>, %arg5: memref<1x32xf32, #tpu.memory_space<vmem>>, %arg6: memref<32x32xf32, #tpu.memory_space<vmem>>) attributes {dimension_semantics = [#tpu.dimension_semantics<parallel>], iteration_bounds = array<i64: 1>, scalar_prefetch = 0 : i64, scratch_operands = 0 : i64, tpu.core_type = #tpu.core_type<tc>, window_params = [{transform_indices = @transform_0, window_bounds = array<i64: 32, 12>}, {pipeline_mode = #tpu.pipeline_mode<synchronous>, transform_indices = @transform_1, window_bounds = array<i64: 12, 32>}, {pipeline_mode = #tpu.pipeline_mode<synchronous>, transform_indices = @transform_2, window_bounds = array<i64: 1, 32>}, {pipeline_mode = #tpu.pipeline_mode<synchronous>, transform_indices = @transform_3, window_bounds = array<i64: 32, 32>}, {pipeline_mode = #tpu.pipeline_mode<synchronous>, transform_indices = @transform_4, window_bounds = array<i64: 1, 32>}, {transform_indices = @transform_5, window_bounds = array<i64: 32, 32>}]} {
    %c0 = arith.constant 0 : index
    %c0_0 = arith.constant 0 : index
    %0 = vector.load %arg1[%c0, %c0_0] : memref<32x12xf32, #tpu.memory_space<vmem>>, vector<32x12xf32>
    %c0_1 = arith.constant 0 : index
    %c0_2 = arith.constant 0 : index
    %1 = vector.load %arg2[%c0_1, %c0_2] : memref<12x32xf32, #tpu.memory_space<vmem>>, vector<12x32xf32>
    %cst = arith.constant dense<0.000000e+00> : vector<32x32xf32>
    %2 = tpu.matmul %0, %1, %cst {dimension_numbers = #tpu.dot_dimension_numbers<[1], [0], [0], [1], [0, 0, 1, 1], [], []>} : vector<32x12xf32>, vector<12x32xf32>, vector<32x32xf32> -> vector<32x32xf32>
    %c0_3 = arith.constant 0 : index
    %c0_4 = arith.constant 0 : index
    %3 = vector.load %arg3[%c0_3, %c0_4] : memref<1x32xf32, #tpu.memory_space<vmem>>, vector<1x32xf32>
    %4 = vector.broadcast %3 : vector<1x32xf32> to vector<32x32xf32>
    %5 = arith.addf %2, %4 : vector<32x32xf32>
    %cst_5 = arith.constant 0.000000e+00 : f32
    %6 = vector.broadcast %cst_5 : f32 to vector<32x32xf32>
    %7 = arith.maximumf %5, %6 : vector<32x32xf32>
    %c0_6 = arith.constant 0 : index
    %c0_7 = arith.constant 0 : index
    %8 = vector.load %arg4[%c0_6, %c0_7] : memref<32x32xf32, #tpu.memory_space<vmem>>, vector<32x32xf32>
    %cst_8 = arith.constant dense<0.000000e+00> : vector<32x32xf32>
    %9 = tpu.matmul %7, %8, %cst_8 {dimension_numbers = #tpu.dot_dimension_numbers<[1], [0], [0], [1], [0, 0, 1, 1], [], []>} : vector<32x32xf32>, vector<32x32xf32>, vector<32x32xf32> -> vector<32x32xf32>
    %c0_9 = arith.constant 0 : index
    %c0_10 = arith.constant 0 : index
    %10 = vector.load %arg5[%c0_9, %c0_10] : memref<1x32xf32, #tpu.memory_space<vmem>>, vector<1x32xf32>
    %11 = vector.broadcast %10 : vector<1x32xf32> to vector<32x32xf32>
    %12 = arith.addf %9, %11 : vector<32x32xf32>
    %cst_11 = arith.constant 0.000000e+00 : f32
    %13 = vector.broadcast %cst_11 : f32 to vector<32x32xf32>
    %14 = arith.maximumf %12, %13 : vector<32x32xf32>
    %c0_12 = arith.constant 0 : index
    %c0_13 = arith.constant 0 : index
    %15 = vector.load %arg6[%c0_12, %c0_13] : memref<32x32xf32, #tpu.memory_space<vmem>>, vector<32x32xf32>
    tpu.vector_store %arg6[%c0_12, %c0_13], %14 {strides = array<i32>} : memref<32x32xf32, #tpu.memory_space<vmem>>, vector<32x32xf32>,
    return
  }
  func.func @transform_0(%arg0: i32) -> (i32, i32) {
    %c0_i32 = arith.constant 0 : i32
    %c0_i32_0 = arith.constant 0 : i32
    return %arg0, %c0_i32 : i32, i32
  }
  func.func @transform_1(%arg0: i32) -> (i32, i32) {
    %c0_i32 = arith.constant 0 : i32
    %c0_i32_0 = arith.constant 0 : i32
    %c0_i32_1 = arith.constant 0 : i32
    return %c0_i32, %c0_i32_0 : i32, i32
  }
  func.func @transform_2(%arg0: i32) -> (i32, i32) {
    %c0_i32 = arith.constant 0 : i32
    %c0_i32_0 = arith.constant 0 : i32
    %c0_i32_1 = arith.constant 0 : i32
    return %c0_i32, %c0_i32_0 : i32, i32
  }
  func.func @transform_3(%arg0: i32) -> (i32, i32) {
    %c0_i32 = arith.constant 0 : i32
    %c0_i32_0 = arith.constant 0 : i32
    %c0_i32_1 = arith.constant 0 : i32
    return %c0_i32, %c0_i32_0 : i32, i32
  }
  func.func @transform_4(%arg0: i32) -> (i32, i32) {
    %c0_i32 = arith.constant 0 : i32
    %c0_i32_0 = arith.constant 0 : i32
    %c0_i32_1 = arith.constant 0 : i32
    return %c0_i32, %c0_i32_0 : i32, i32
  }
  func.func @transform_5(%arg0: i32) -> (i32, i32) {
    %c0_i32 = arith.constant 0 : i32
    %c0_i32_0 = arith.constant 0 : i32
    return %arg0, %c0_i32 : i32, i32
  }
}

module attributes {stable_mosaic.version = 11 : i64} {
  func.func @_dual_proj_kernel(%arg0: i32, %arg1: memref<32x32xf32, #tpu.memory_space<vmem>>, %arg2: memref<32x192xf32, #tpu.memory_space<vmem>>, %arg3: memref<1x192xf32, #tpu.memory_space<vmem>>, %arg4: memref<32x96xf32, #tpu.memory_space<vmem>>, %arg5: memref<32x96xf32, #tpu.memory_space<vmem>>) attributes {dimension_semantics = [#tpu.dimension_semantics<parallel>], iteration_bounds = array<i64: 1>, scalar_prefetch = 0 : i64, scratch_operands = 0 : i64, tpu.core_type = #tpu.core_type<tc>, window_params = [{transform_indices = @transform_0, window_bounds = array<i64: 32, 32>}, {pipeline_mode = #tpu.pipeline_mode<synchronous>, transform_indices = @transform_1, window_bounds = array<i64: 32, 192>}, {pipeline_mode = #tpu.pipeline_mode<synchronous>, transform_indices = @transform_2, window_bounds = array<i64: 1, 192>}, {transform_indices = @transform_3, window_bounds = array<i64: 32, 96>}, {transform_indices = @transform_4, window_bounds = array<i64: 32, 96>}]} {
    %c0 = arith.constant 0 : index
    %c0_0 = arith.constant 0 : index
    %0 = vector.load %arg1[%c0, %c0_0] : memref<32x32xf32, #tpu.memory_space<vmem>>, vector<32x32xf32>
    %c0_1 = arith.constant 0 : index
    %c0_2 = arith.constant 0 : index
    %1 = vector.load %arg2[%c0_1, %c0_2] : memref<32x192xf32, #tpu.memory_space<vmem>>, vector<32x192xf32>
    %cst = arith.constant dense<0.000000e+00> : vector<32x192xf32>
    %2 = tpu.matmul %0, %1, %cst {dimension_numbers = #tpu.dot_dimension_numbers<[1], [0], [0], [1], [0, 0, 1, 1], [], []>} : vector<32x32xf32>, vector<32x192xf32>, vector<32x192xf32> -> vector<32x192xf32>
    %c0_3 = arith.constant 0 : index
    %c0_4 = arith.constant 0 : index
    %3 = vector.load %arg3[%c0_3, %c0_4] : memref<1x192xf32, #tpu.memory_space<vmem>>, vector<1x192xf32>
    %4 = vector.broadcast %3 : vector<1x192xf32> to vector<32x192xf32>
    %5 = arith.addf %2, %4 : vector<32x192xf32>
    %6 = vector.extract_strided_slice %5 {offsets = [0, 0], sizes = [32, 96], strides = [1, 1]} : vector<32x192xf32> to vector<32x96xf32>
    %c0_5 = arith.constant 0 : index
    %c0_6 = arith.constant 0 : index
    %7 = vector.load %arg4[%c0_5, %c0_6] : memref<32x96xf32, #tpu.memory_space<vmem>>, vector<32x96xf32>
    tpu.vector_store %arg4[%c0_5, %c0_6], %6 {strides = array<i32>} : memref<32x96xf32, #tpu.memory_space<vmem>>, vector<32x96xf32>,
    %8 = vector.extract_strided_slice %5 {offsets = [0, 96], sizes = [32, 96], strides = [1, 1]} : vector<32x192xf32> to vector<32x96xf32>
    %c0_7 = arith.constant 0 : index
    %c0_8 = arith.constant 0 : index
    %9 = vector.load %arg5[%c0_7, %c0_8] : memref<32x96xf32, #tpu.memory_space<vmem>>, vector<32x96xf32>
    tpu.vector_store %arg5[%c0_7, %c0_8], %8 {strides = array<i32>} : memref<32x96xf32, #tpu.memory_space<vmem>>, vector<32x96xf32>,
    return
  }
  func.func @transform_0(%arg0: i32) -> (i32, i32) {
    %c0_i32 = arith.constant 0 : i32
    %c0_i32_0 = arith.constant 0 : i32
    return %arg0, %c0_i32 : i32, i32
  }
  func.func @transform_1(%arg0: i32) -> (i32, i32) {
    %c0_i32 = arith.constant 0 : i32
    %c0_i32_0 = arith.constant 0 : i32
    %c0_i32_1 = arith.constant 0 : i32
    return %c0_i32, %c0_i32_0 : i32, i32
  }
  func.func @transform_2(%arg0: i32) -> (i32, i32) {
    %c0_i32 = arith.constant 0 : i32
    %c0_i32_0 = arith.constant 0 : i32
    %c0_i32_1 = arith.constant 0 : i32
    return %c0_i32, %c0_i32_0 : i32, i32
  }
  func.func @transform_3(%arg0: i32) -> (i32, i32) {
    %c0_i32 = arith.constant 0 : i32
    %c0_i32_0 = arith.constant 0 : i32
    return %arg0, %c0_i32 : i32, i32
  }
  func.func @transform_4(%arg0: i32) -> (i32, i32) {
    %c0_i32 = arith.constant 0 : i32
    %c0_i32_0 = arith.constant 0 : i32
    return %arg0, %c0_i32 : i32, i32
  }
}

module attributes {stable_mosaic.version = 11 : i64} {
  func.func @_bigru_scan_kernel(%arg0: i32, %arg1: memref<2x8x96xf32, #tpu.memory_space<vmem>>, %arg2: memref<2x8x96xf32, #tpu.memory_space<vmem>>, %arg3: memref<32x96xf32, #tpu.memory_space<vmem>>, %arg4: memref<1x96xf32, #tpu.memory_space<vmem>>, %arg5: memref<32x96xf32, #tpu.memory_space<vmem>>, %arg6: memref<1x96xf32, #tpu.memory_space<vmem>>, %arg7: memref<2x8x32xf32, #tpu.memory_space<vmem>>, %arg8: memref<2x8x32xf32, #tpu.memory_space<vmem>>, %arg9: memref<2x32xf32, #tpu.memory_space<vmem>>, %arg10: memref<2x32xf32, #tpu.memory_space<vmem>>) attributes {dimension_semantics = [#tpu.dimension_semantics<arbitrary>], iteration_bounds = array<i64: 2>, scalar_prefetch = 0 : i64, scratch_operands = 2 : i64, tpu.core_type = #tpu.core_type<tc>, window_params = [{transform_indices = @transform_0, window_bounds = array<i64: 2, 8, 96>}, {transform_indices = @transform_1, window_bounds = array<i64: 2, 8, 96>}, {pipeline_mode = #tpu.pipeline_mode<synchronous>, transform_indices = @transform_2, window_bounds = array<i64: 32, 96>}, {pipeline_mode = #tpu.pipeline_mode<synchronous>, transform_indices = @transform_3, window_bounds = array<i64: 1, 96>}, {pipeline_mode = #tpu.pipeline_mode<synchronous>, transform_indices = @transform_4, window_bounds = array<i64: 32, 96>}, {pipeline_mode = #tpu.pipeline_mode<synchronous>, transform_indices = @transform_5, window_bounds = array<i64: 1, 96>}, {transform_indices = @transform_6, window_bounds = array<i64: 2, 8, 32>}, {transform_indices = @transform_7, window_bounds = array<i64: 2, 8, 32>}]} {
    %c0_i32 = arith.constant 0 : i32
    %0 = arith.cmpi eq, %arg0, %c0_i32 : i32
    %1 = arith.extui %0 : i1 to i32
    %c0_i32_0 = arith.constant 0 : i32
    %2 = arith.cmpi ne, %1, %c0_i32_0 : i32
    scf.if %2 {
      %cst_91 = arith.constant 0.000000e+00 : f32
      %529 = vector.broadcast %cst_91 : f32 to vector<2x32xf32>
      %c0_92 = arith.constant 0 : index
      %c0_93 = arith.constant 0 : index
      %530 = vector.load %arg9[%c0_92, %c0_93] : memref<2x32xf32, #tpu.memory_space<vmem>>, vector<2x32xf32>
      tpu.vector_store %arg9[%c0_92, %c0_93], %529 {strides = array<i32>} : memref<2x32xf32, #tpu.memory_space<vmem>>, vector<2x32xf32>,
      %cst_94 = arith.constant 0.000000e+00 : f32
      %531 = vector.broadcast %cst_94 : f32 to vector<2x32xf32>
      %c0_95 = arith.constant 0 : index
      %c0_96 = arith.constant 0 : index
      %532 = vector.load %arg10[%c0_95, %c0_96] : memref<2x32xf32, #tpu.memory_space<vmem>>, vector<2x32xf32>
      tpu.vector_store %arg10[%c0_95, %c0_96], %531 {strides = array<i32>} : memref<2x32xf32, #tpu.memory_space<vmem>>, vector<2x32xf32>,
    } else {
    }
    %c0 = arith.constant 0 : index
    %c0_1 = arith.constant 0 : index
    %c0_2 = arith.constant 0 : index
    %3 = vector.load %arg1[%c0, %c0_1, %c0_2] : memref<2x8x96xf32, #tpu.memory_space<vmem>>, vector<2x8x96xf32>
    %c0_3 = arith.constant 0 : index
    %c0_4 = arith.constant 0 : index
    %c0_5 = arith.constant 0 : index
    %4 = vector.load %arg2[%c0_3, %c0_4, %c0_5] : memref<2x8x96xf32, #tpu.memory_space<vmem>>, vector<2x8x96xf32>
    %c0_6 = arith.constant 0 : index
    %c0_7 = arith.constant 0 : index
    %5 = vector.load %arg3[%c0_6, %c0_7] : memref<32x96xf32, #tpu.memory_space<vmem>>, vector<32x96xf32>
    %c0_8 = arith.constant 0 : index
    %c0_9 = arith.constant 0 : index
    %6 = vector.load %arg4[%c0_8, %c0_9] : memref<1x96xf32, #tpu.memory_space<vmem>>, vector<1x96xf32>
    %c0_10 = arith.constant 0 : index
    %c0_11 = arith.constant 0 : index
    %7 = vector.load %arg5[%c0_10, %c0_11] : memref<32x96xf32, #tpu.memory_space<vmem>>, vector<32x96xf32>
    %c0_12 = arith.constant 0 : index
    %c0_13 = arith.constant 0 : index
    %8 = vector.load %arg6[%c0_12, %c0_13] : memref<1x96xf32, #tpu.memory_space<vmem>>, vector<1x96xf32>
    %c0_14 = arith.constant 0 : index
    %c0_15 = arith.constant 0 : index
    %9 = vector.load %arg9[%c0_14, %c0_15] : memref<2x32xf32, #tpu.memory_space<vmem>>, vector<2x32xf32>
    %c0_16 = arith.constant 0 : index
    %c0_17 = arith.constant 0 : index
    %10 = vector.load %arg10[%c0_16, %c0_17] : memref<2x32xf32, #tpu.memory_space<vmem>>, vector<2x32xf32>
    %11 = vector.extract_strided_slice %3 {offsets = [0, 0, 0], sizes = [2, 1, 96], strides = [1, 1, 1]} : vector<2x8x96xf32> to vector<2x1x96xf32>
    %12 = vector.shape_cast %11 : vector<2x1x96xf32> to vector<2x96xf32>
    %cst = arith.constant dense<0.000000e+00> : vector<2x96xf32>
    %13 = tpu.matmul %9, %5, %cst {dimension_numbers = #tpu.dot_dimension_numbers<[1], [0], [0], [1], [0, 0, 1, 1], [], []>} : vector<2x32xf32>, vector<32x96xf32>, vector<2x96xf32> -> vector<2x96xf32>
    %14 = vector.broadcast %6 : vector<1x96xf32> to vector<2x96xf32>
    %15 = arith.addf %13, %14 : vector<2x96xf32>
    %16 = vector.extract_strided_slice %12 {offsets = [0, 0], sizes = [2, 32], strides = [1, 1]} : vector<2x96xf32> to vector<2x32xf32>
    %17 = vector.extract_strided_slice %15 {offsets = [0, 0], sizes = [2, 32], strides = [1, 1]} : vector<2x96xf32> to vector<2x32xf32>
    %18 = arith.addf %16, %17 : vector<2x32xf32>
    %19 = arith.negf %18 : vector<2x32xf32>
    %20 = math.exp %19 : vector<2x32xf32>
    %cst_18 = arith.constant 1.000000e+00 : f32
    %21 = vector.broadcast %cst_18 : f32 to vector<2x32xf32>
    %22 = arith.addf %21, %20 : vector<2x32xf32>
    %23 = arith.divf %21, %22 : vector<2x32xf32>
    %24 = vector.extract_strided_slice %12 {offsets = [0, 32], sizes = [2, 32], strides = [1, 1]} : vector<2x96xf32> to vector<2x32xf32>
    %25 = vector.extract_strided_slice %15 {offsets = [0, 32], sizes = [2, 32], strides = [1, 1]} : vector<2x96xf32> to vector<2x32xf32>
    %26 = arith.addf %24, %25 : vector<2x32xf32>
    %27 = arith.negf %26 : vector<2x32xf32>
    %28 = math.exp %27 : vector<2x32xf32>
    %cst_19 = arith.constant 1.000000e+00 : f32
    %29 = vector.broadcast %cst_19 : f32 to vector<2x32xf32>
    %30 = arith.addf %29, %28 : vector<2x32xf32>
    %31 = arith.divf %29, %30 : vector<2x32xf32>
    %32 = vector.extract_strided_slice %12 {offsets = [0, 64], sizes = [2, 32], strides = [1, 1]} : vector<2x96xf32> to vector<2x32xf32>
    %33 = vector.extract_strided_slice %15 {offsets = [0, 64], sizes = [2, 32], strides = [1, 1]} : vector<2x96xf32> to vector<2x32xf32>
    %34 = arith.mulf %23, %33 : vector<2x32xf32>
    %35 = arith.addf %32, %34 : vector<2x32xf32>
    %36 = math.tanh %35 : vector<2x32xf32>
    %cst_20 = arith.constant 1.000000e+00 : f32
    %37 = vector.broadcast %cst_20 : f32 to vector<2x32xf32>
    %38 = arith.subf %37, %31 : vector<2x32xf32>
    %39 = arith.mulf %38, %36 : vector<2x32xf32>
    %40 = arith.mulf %31, %9 : vector<2x32xf32>
    %41 = arith.addf %39, %40 : vector<2x32xf32>
    %42 = vector.extract_strided_slice %4 {offsets = [0, 7, 0], sizes = [2, 1, 96], strides = [1, 1, 1]} : vector<2x8x96xf32> to vector<2x1x96xf32>
    %43 = vector.shape_cast %42 : vector<2x1x96xf32> to vector<2x96xf32>
    %cst_21 = arith.constant dense<0.000000e+00> : vector<2x96xf32>
    %44 = tpu.matmul %10, %7, %cst_21 {dimension_numbers = #tpu.dot_dimension_numbers<[1], [0], [0], [1], [0, 0, 1, 1], [], []>} : vector<2x32xf32>, vector<32x96xf32>, vector<2x96xf32> -> vector<2x96xf32>
    %45 = vector.broadcast %8 : vector<1x96xf32> to vector<2x96xf32>
    %46 = arith.addf %44, %45 : vector<2x96xf32>
    %47 = vector.extract_strided_slice %43 {offsets = [0, 0], sizes = [2, 32], strides = [1, 1]} : vector<2x96xf32> to vector<2x32xf32>
    %48 = vector.extract_strided_slice %46 {offsets = [0, 0], sizes = [2, 32], strides = [1, 1]} : vector<2x96xf32> to vector<2x32xf32>
    %49 = arith.addf %47, %48 : vector<2x32xf32>
    %50 = arith.negf %49 : vector<2x32xf32>
    %51 = math.exp %50 : vector<2x32xf32>
    %cst_22 = arith.constant 1.000000e+00 : f32
    %52 = vector.broadcast %cst_22 : f32 to vector<2x32xf32>
    %53 = arith.addf %52, %51 : vector<2x32xf32>
    %54 = arith.divf %52, %53 : vector<2x32xf32>
    %55 = vector.extract_strided_slice %43 {offsets = [0, 32], sizes = [2, 32], strides = [1, 1]} : vector<2x96xf32> to vector<2x32xf32>
    %56 = vector.extract_strided_slice %46 {offsets = [0, 32], sizes = [2, 32], strides = [1, 1]} : vector<2x96xf32> to vector<2x32xf32>
    %57 = arith.addf %55, %56 : vector<2x32xf32>
    %58 = arith.negf %57 : vector<2x32xf32>
    %59 = math.exp %58 : vector<2x32xf32>
    %cst_23 = arith.constant 1.000000e+00 : f32
    %60 = vector.broadcast %cst_23 : f32 to vector<2x32xf32>
    %61 = arith.addf %60, %59 : vector<2x32xf32>
    %62 = arith.divf %60, %61 : vector<2x32xf32>
    %63 = vector.extract_strided_slice %43 {offsets = [0, 64], sizes = [2, 32], strides = [1, 1]} : vector<2x96xf32> to vector<2x32xf32>
    %64 = vector.extract_strided_slice %46 {offsets = [0, 64], sizes = [2, 32], strides = [1, 1]} : vector<2x96xf32> to vector<2x32xf32>
    %65 = arith.mulf %54, %64 : vector<2x32xf32>
    %66 = arith.addf %63, %65 : vector<2x32xf32>
    %67 = math.tanh %66 : vector<2x32xf32>
    %cst_24 = arith.constant 1.000000e+00 : f32
    %68 = vector.broadcast %cst_24 : f32 to vector<2x32xf32>
    %69 = arith.subf %68, %62 : vector<2x32xf32>
    %70 = arith.mulf %69, %67 : vector<2x32xf32>
    %71 = arith.mulf %62, %10 : vector<2x32xf32>
    %72 = arith.addf %70, %71 : vector<2x32xf32>
    %73 = vector.extract_strided_slice %3 {offsets = [0, 1, 0], sizes = [2, 1, 96], strides = [1, 1, 1]} : vector<2x8x96xf32> to vector<2x1x96xf32>
    %74 = vector.shape_cast %73 : vector<2x1x96xf32> to vector<2x96xf32>
    %cst_25 = arith.constant dense<0.000000e+00> : vector<2x96xf32>
    %75 = tpu.matmul %41, %5, %cst_25 {dimension_numbers = #tpu.dot_dimension_numbers<[1], [0], [0], [1], [0, 0, 1, 1], [], []>} : vector<2x32xf32>, vector<32x96xf32>, vector<2x96xf32> -> vector<2x96xf32>
    %76 = vector.broadcast %6 : vector<1x96xf32> to vector<2x96xf32>
    %77 = arith.addf %75, %76 : vector<2x96xf32>
    %78 = vector.extract_strided_slice %74 {offsets = [0, 0], sizes = [2, 32], strides = [1, 1]} : vector<2x96xf32> to vector<2x32xf32>
    %79 = vector.extract_strided_slice %77 {offsets = [0, 0], sizes = [2, 32], strides = [1, 1]} : vector<2x96xf32> to vector<2x32xf32>
    %80 = arith.addf %78, %79 : vector<2x32xf32>
    %81 = arith.negf %80 : vector<2x32xf32>
    %82 = math.exp %81 : vector<2x32xf32>
    %cst_26 = arith.constant 1.000000e+00 : f32
    %83 = vector.broadcast %cst_26 : f32 to vector<2x32xf32>
    %84 = arith.addf %83, %82 : vector<2x32xf32>
    %85 = arith.divf %83, %84 : vector<2x32xf32>
    %86 = vector.extract_strided_slice %74 {offsets = [0, 32], sizes = [2, 32], strides = [1, 1]} : vector<2x96xf32> to vector<2x32xf32>
    %87 = vector.extract_strided_slice %77 {offsets = [0, 32], sizes = [2, 32], strides = [1, 1]} : vector<2x96xf32> to vector<2x32xf32>
    %88 = arith.addf %86, %87 : vector<2x32xf32>
    %89 = arith.negf %88 : vector<2x32xf32>
    %90 = math.exp %89 : vector<2x32xf32>
    %cst_27 = arith.constant 1.000000e+00 : f32
    %91 = vector.broadcast %cst_27 : f32 to vector<2x32xf32>
    %92 = arith.addf %91, %90 : vector<2x32xf32>
    %93 = arith.divf %91, %92 : vector<2x32xf32>
    %94 = vector.extract_strided_slice %74 {offsets = [0, 64], sizes = [2, 32], strides = [1, 1]} : vector<2x96xf32> to vector<2x32xf32>
    %95 = vector.extract_strided_slice %77 {offsets = [0, 64], sizes = [2, 32], strides = [1, 1]} : vector<2x96xf32> to vector<2x32xf32>
    %96 = arith.mulf %85, %95 : vector<2x32xf32>
    %97 = arith.addf %94, %96 : vector<2x32xf32>
    %98 = math.tanh %97 : vector<2x32xf32>
    %cst_28 = arith.constant 1.000000e+00 : f32
    %99 = vector.broadcast %cst_28 : f32 to vector<2x32xf32>
    %100 = arith.subf %99, %93 : vector<2x32xf32>
    %101 = arith.mulf %100, %98 : vector<2x32xf32>
    %102 = arith.mulf %93, %41 : vector<2x32xf32>
    %103 = arith.addf %101, %102 : vector<2x32xf32>
    %104 = vector.extract_strided_slice %4 {offsets = [0, 6, 0], sizes = [2, 1, 96], strides = [1, 1, 1]} : vector<2x8x96xf32> to vector<2x1x96xf32>
    %105 = vector.shape_cast %104 : vector<2x1x96xf32> to vector<2x96xf32>
    %cst_29 = arith.constant dense<0.000000e+00> : vector<2x96xf32>
    %106 = tpu.matmul %72, %7, %cst_29 {dimension_numbers = #tpu.dot_dimension_numbers<[1], [0], [0], [1], [0, 0, 1, 1], [], []>} : vector<2x32xf32>, vector<32x96xf32>, vector<2x96xf32> -> vector<2x96xf32>
    %107 = vector.broadcast %8 : vector<1x96xf32> to vector<2x96xf32>
    %108 = arith.addf %106, %107 : vector<2x96xf32>
    %109 = vector.extract_strided_slice %105 {offsets = [0, 0], sizes = [2, 32], strides = [1, 1]} : vector<2x96xf32> to vector<2x32xf32>
    %110 = vector.extract_strided_slice %108 {offsets = [0, 0], sizes = [2, 32], strides = [1, 1]} : vector<2x96xf32> to vector<2x32xf32>
    %111 = arith.addf %109, %110 : vector<2x32xf32>
    %112 = arith.negf %111 : vector<2x32xf32>
    %113 = math.exp %112 : vector<2x32xf32>
    %cst_30 = arith.constant 1.000000e+00 : f32
    %114 = vector.broadcast %cst_30 : f32 to vector<2x32xf32>
    %115 = arith.addf %114, %113 : vector<2x32xf32>
    %116 = arith.divf %114, %115 : vector<2x32xf32>
    %117 = vector.extract_strided_slice %105 {offsets = [0, 32], sizes = [2, 32], strides = [1, 1]} : vector<2x96xf32> to vector<2x32xf32>
    %118 = vector.extract_strided_slice %108 {offsets = [0, 32], sizes = [2, 32], strides = [1, 1]} : vector<2x96xf32> to vector<2x32xf32>
    %119 = arith.addf %117, %118 : vector<2x32xf32>
    %120 = arith.negf %119 : vector<2x32xf32>
    %121 = math.exp %120 : vector<2x32xf32>
    %cst_31 = arith.constant 1.000000e+00 : f32
    %122 = vector.broadcast %cst_31 : f32 to vector<2x32xf32>
    %123 = arith.addf %122, %121 : vector<2x32xf32>
    %124 = arith.divf %122, %123 : vector<2x32xf32>
    %125 = vector.extract_strided_slice %105 {offsets = [0, 64], sizes = [2, 32], strides = [1, 1]} : vector<2x96xf32> to vector<2x32xf32>
    %126 = vector.extract_strided_slice %108 {offsets = [0, 64], sizes = [2, 32], strides = [1, 1]} : vector<2x96xf32> to vector<2x32xf32>
    %127 = arith.mulf %116, %126 : vector<2x32xf32>
    %128 = arith.addf %125, %127 : vector<2x32xf32>
    %129 = math.tanh %128 : vector<2x32xf32>
    %cst_32 = arith.constant 1.000000e+00 : f32
    %130 = vector.broadcast %cst_32 : f32 to vector<2x32xf32>
    %131 = arith.subf %130, %124 : vector<2x32xf32>
    %132 = arith.mulf %131, %129 : vector<2x32xf32>
    %133 = arith.mulf %124, %72 : vector<2x32xf32>
    %134 = arith.addf %132, %133 : vector<2x32xf32>
    %135 = vector.extract_strided_slice %3 {offsets = [0, 2, 0], sizes = [2, 1, 96], strides = [1, 1, 1]} : vector<2x8x96xf32> to vector<2x1x96xf32>
    %136 = vector.shape_cast %135 : vector<2x1x96xf32> to vector<2x96xf32>
    %cst_33 = arith.constant dense<0.000000e+00> : vector<2x96xf32>
    %137 = tpu.matmul %103, %5, %cst_33 {dimension_numbers = #tpu.dot_dimension_numbers<[1], [0], [0], [1], [0, 0, 1, 1], [], []>} : vector<2x32xf32>, vector<32x96xf32>, vector<2x96xf32> -> vector<2x96xf32>
    %138 = vector.broadcast %6 : vector<1x96xf32> to vector<2x96xf32>
    %139 = arith.addf %137, %138 : vector<2x96xf32>
    %140 = vector.extract_strided_slice %136 {offsets = [0, 0], sizes = [2, 32], strides = [1, 1]} : vector<2x96xf32> to vector<2x32xf32>
    %141 = vector.extract_strided_slice %139 {offsets = [0, 0], sizes = [2, 32], strides = [1, 1]} : vector<2x96xf32> to vector<2x32xf32>
    %142 = arith.addf %140, %141 : vector<2x32xf32>
    %143 = arith.negf %142 : vector<2x32xf32>
    %144 = math.exp %143 : vector<2x32xf32>
    %cst_34 = arith.constant 1.000000e+00 : f32
    %145 = vector.broadcast %cst_34 : f32 to vector<2x32xf32>
    %146 = arith.addf %145, %144 : vector<2x32xf32>
    %147 = arith.divf %145, %146 : vector<2x32xf32>
    %148 = vector.extract_strided_slice %136 {offsets = [0, 32], sizes = [2, 32], strides = [1, 1]} : vector<2x96xf32> to vector<2x32xf32>
    %149 = vector.extract_strided_slice %139 {offsets = [0, 32], sizes = [2, 32], strides = [1, 1]} : vector<2x96xf32> to vector<2x32xf32>
    %150 = arith.addf %148, %149 : vector<2x32xf32>
    %151 = arith.negf %150 : vector<2x32xf32>
    %152 = math.exp %151 : vector<2x32xf32>
    %cst_35 = arith.constant 1.000000e+00 : f32
    %153 = vector.broadcast %cst_35 : f32 to vector<2x32xf32>
    %154 = arith.addf %153, %152 : vector<2x32xf32>
    %155 = arith.divf %153, %154 : vector<2x32xf32>
    %156 = vector.extract_strided_slice %136 {offsets = [0, 64], sizes = [2, 32], strides = [1, 1]} : vector<2x96xf32> to vector<2x32xf32>
    %157 = vector.extract_strided_slice %139 {offsets = [0, 64], sizes = [2, 32], strides = [1, 1]} : vector<2x96xf32> to vector<2x32xf32>
    %158 = arith.mulf %147, %157 : vector<2x32xf32>
    %159 = arith.addf %156, %158 : vector<2x32xf32>
    %160 = math.tanh %159 : vector<2x32xf32>
    %cst_36 = arith.constant 1.000000e+00 : f32
    %161 = vector.broadcast %cst_36 : f32 to vector<2x32xf32>
    %162 = arith.subf %161, %155 : vector<2x32xf32>
    %163 = arith.mulf %162, %160 : vector<2x32xf32>
    %164 = arith.mulf %155, %103 : vector<2x32xf32>
    %165 = arith.addf %163, %164 : vector<2x32xf32>
    %166 = vector.extract_strided_slice %4 {offsets = [0, 5, 0], sizes = [2, 1, 96], strides = [1, 1, 1]} : vector<2x8x96xf32> to vector<2x1x96xf32>
    %167 = vector.shape_cast %166 : vector<2x1x96xf32> to vector<2x96xf32>
    %cst_37 = arith.constant dense<0.000000e+00> : vector<2x96xf32>
    %168 = tpu.matmul %134, %7, %cst_37 {dimension_numbers = #tpu.dot_dimension_numbers<[1], [0], [0], [1], [0, 0, 1, 1], [], []>} : vector<2x32xf32>, vector<32x96xf32>, vector<2x96xf32> -> vector<2x96xf32>
    %169 = vector.broadcast %8 : vector<1x96xf32> to vector<2x96xf32>
    %170 = arith.addf %168, %169 : vector<2x96xf32>
    %171 = vector.extract_strided_slice %167 {offsets = [0, 0], sizes = [2, 32], strides = [1, 1]} : vector<2x96xf32> to vector<2x32xf32>
    %172 = vector.extract_strided_slice %170 {offsets = [0, 0], sizes = [2, 32], strides = [1, 1]} : vector<2x96xf32> to vector<2x32xf32>
    %173 = arith.addf %171, %172 : vector<2x32xf32>
    %174 = arith.negf %173 : vector<2x32xf32>
    %175 = math.exp %174 : vector<2x32xf32>
    %cst_38 = arith.constant 1.000000e+00 : f32
    %176 = vector.broadcast %cst_38 : f32 to vector<2x32xf32>
    %177 = arith.addf %176, %175 : vector<2x32xf32>
    %178 = arith.divf %176, %177 : vector<2x32xf32>
    %179 = vector.extract_strided_slice %167 {offsets = [0, 32], sizes = [2, 32], strides = [1, 1]} : vector<2x96xf32> to vector<2x32xf32>
    %180 = vector.extract_strided_slice %170 {offsets = [0, 32], sizes = [2, 32], strides = [1, 1]} : vector<2x96xf32> to vector<2x32xf32>
    %181 = arith.addf %179, %180 : vector<2x32xf32>
    %182 = arith.negf %181 : vector<2x32xf32>
    %183 = math.exp %182 : vector<2x32xf32>
    %cst_39 = arith.constant 1.000000e+00 : f32
    %184 = vector.broadcast %cst_39 : f32 to vector<2x32xf32>
    %185 = arith.addf %184, %183 : vector<2x32xf32>
    %186 = arith.divf %184, %185 : vector<2x32xf32>
    %187 = vector.extract_strided_slice %167 {offsets = [0, 64], sizes = [2, 32], strides = [1, 1]} : vector<2x96xf32> to vector<2x32xf32>
    %188 = vector.extract_strided_slice %170 {offsets = [0, 64], sizes = [2, 32], strides = [1, 1]} : vector<2x96xf32> to vector<2x32xf32>
    %189 = arith.mulf %178, %188 : vector<2x32xf32>
    %190 = arith.addf %187, %189 : vector<2x32xf32>
    %191 = math.tanh %190 : vector<2x32xf32>
    %cst_40 = arith.constant 1.000000e+00 : f32
    %192 = vector.broadcast %cst_40 : f32 to vector<2x32xf32>
    %193 = arith.subf %192, %186 : vector<2x32xf32>
    %194 = arith.mulf %193, %191 : vector<2x32xf32>
    %195 = arith.mulf %186, %134 : vector<2x32xf32>
    %196 = arith.addf %194, %195 : vector<2x32xf32>
    %197 = vector.extract_strided_slice %3 {offsets = [0, 3, 0], sizes = [2, 1, 96], strides = [1, 1, 1]} : vector<2x8x96xf32> to vector<2x1x96xf32>
    %198 = vector.shape_cast %197 : vector<2x1x96xf32> to vector<2x96xf32>
    %cst_41 = arith.constant dense<0.000000e+00> : vector<2x96xf32>
    %199 = tpu.matmul %165, %5, %cst_41 {dimension_numbers = #tpu.dot_dimension_numbers<[1], [0], [0], [1], [0, 0, 1, 1], [], []>} : vector<2x32xf32>, vector<32x96xf32>, vector<2x96xf32> -> vector<2x96xf32>
    %200 = vector.broadcast %6 : vector<1x96xf32> to vector<2x96xf32>
    %201 = arith.addf %199, %200 : vector<2x96xf32>
    %202 = vector.extract_strided_slice %198 {offsets = [0, 0], sizes = [2, 32], strides = [1, 1]} : vector<2x96xf32> to vector<2x32xf32>
    %203 = vector.extract_strided_slice %201 {offsets = [0, 0], sizes = [2, 32], strides = [1, 1]} : vector<2x96xf32> to vector<2x32xf32>
    %204 = arith.addf %202, %203 : vector<2x32xf32>
    %205 = arith.negf %204 : vector<2x32xf32>
    %206 = math.exp %205 : vector<2x32xf32>
    %cst_42 = arith.constant 1.000000e+00 : f32
    %207 = vector.broadcast %cst_42 : f32 to vector<2x32xf32>
    %208 = arith.addf %207, %206 : vector<2x32xf32>
    %209 = arith.divf %207, %208 : vector<2x32xf32>
    %210 = vector.extract_strided_slice %198 {offsets = [0, 32], sizes = [2, 32], strides = [1, 1]} : vector<2x96xf32> to vector<2x32xf32>
    %211 = vector.extract_strided_slice %201 {offsets = [0, 32], sizes = [2, 32], strides = [1, 1]} : vector<2x96xf32> to vector<2x32xf32>
    %212 = arith.addf %210, %211 : vector<2x32xf32>
    %213 = arith.negf %212 : vector<2x32xf32>
    %214 = math.exp %213 : vector<2x32xf32>
    %cst_43 = arith.constant 1.000000e+00 : f32
    %215 = vector.broadcast %cst_43 : f32 to vector<2x32xf32>
    %216 = arith.addf %215, %214 : vector<2x32xf32>
    %217 = arith.divf %215, %216 : vector<2x32xf32>
    %218 = vector.extract_strided_slice %198 {offsets = [0, 64], sizes = [2, 32], strides = [1, 1]} : vector<2x96xf32> to vector<2x32xf32>
    %219 = vector.extract_strided_slice %201 {offsets = [0, 64], sizes = [2, 32], strides = [1, 1]} : vector<2x96xf32> to vector<2x32xf32>
    %220 = arith.mulf %209, %219 : vector<2x32xf32>
    %221 = arith.addf %218, %220 : vector<2x32xf32>
    %222 = math.tanh %221 : vector<2x32xf32>
    %cst_44 = arith.constant 1.000000e+00 : f32
    %223 = vector.broadcast %cst_44 : f32 to vector<2x32xf32>
    %224 = arith.subf %223, %217 : vector<2x32xf32>
    %225 = arith.mulf %224, %222 : vector<2x32xf32>
    %226 = arith.mulf %217, %165 : vector<2x32xf32>
    %227 = arith.addf %225, %226 : vector<2x32xf32>
    %228 = vector.extract_strided_slice %4 {offsets = [0, 4, 0], sizes = [2, 1, 96], strides = [1, 1, 1]} : vector<2x8x96xf32> to vector<2x1x96xf32>
    %229 = vector.shape_cast %228 : vector<2x1x96xf32> to vector<2x96xf32>
    %cst_45 = arith.constant dense<0.000000e+00> : vector<2x96xf32>
    %230 = tpu.matmul %196, %7, %cst_45 {dimension_numbers = #tpu.dot_dimension_numbers<[1], [0], [0], [1], [0, 0, 1, 1], [], []>} : vector<2x32xf32>, vector<32x96xf32>, vector<2x96xf32> -> vector<2x96xf32>
    %231 = vector.broadcast %8 : vector<1x96xf32> to vector<2x96xf32>
    %232 = arith.addf %230, %231 : vector<2x96xf32>
    %233 = vector.extract_strided_slice %229 {offsets = [0, 0], sizes = [2, 32], strides = [1, 1]} : vector<2x96xf32> to vector<2x32xf32>
    %234 = vector.extract_strided_slice %232 {offsets = [0, 0], sizes = [2, 32], strides = [1, 1]} : vector<2x96xf32> to vector<2x32xf32>
    %235 = arith.addf %233, %234 : vector<2x32xf32>
    %236 = arith.negf %235 : vector<2x32xf32>
    %237 = math.exp %236 : vector<2x32xf32>
    %cst_46 = arith.constant 1.000000e+00 : f32
    %238 = vector.broadcast %cst_46 : f32 to vector<2x32xf32>
    %239 = arith.addf %238, %237 : vector<2x32xf32>
    %240 = arith.divf %238, %239 : vector<2x32xf32>
    %241 = vector.extract_strided_slice %229 {offsets = [0, 32], sizes = [2, 32], strides = [1, 1]} : vector<2x96xf32> to vector<2x32xf32>
    %242 = vector.extract_strided_slice %232 {offsets = [0, 32], sizes = [2, 32], strides = [1, 1]} : vector<2x96xf32> to vector<2x32xf32>
    %243 = arith.addf %241, %242 : vector<2x32xf32>
    %244 = arith.negf %243 : vector<2x32xf32>
    %245 = math.exp %244 : vector<2x32xf32>
    %cst_47 = arith.constant 1.000000e+00 : f32
    %246 = vector.broadcast %cst_47 : f32 to vector<2x32xf32>
    %247 = arith.addf %246, %245 : vector<2x32xf32>
    %248 = arith.divf %246, %247 : vector<2x32xf32>
    %249 = vector.extract_strided_slice %229 {offsets = [0, 64], sizes = [2, 32], strides = [1, 1]} : vector<2x96xf32> to vector<2x32xf32>
    %250 = vector.extract_strided_slice %232 {offsets = [0, 64], sizes = [2, 32], strides = [1, 1]} : vector<2x96xf32> to vector<2x32xf32>
    %251 = arith.mulf %240, %250 : vector<2x32xf32>
    %252 = arith.addf %249, %251 : vector<2x32xf32>
    %253 = math.tanh %252 : vector<2x32xf32>
    %cst_48 = arith.constant 1.000000e+00 : f32
    %254 = vector.broadcast %cst_48 : f32 to vector<2x32xf32>
    %255 = arith.subf %254, %248 : vector<2x32xf32>
    %256 = arith.mulf %255, %253 : vector<2x32xf32>
    %257 = arith.mulf %248, %196 : vector<2x32xf32>
    %258 = arith.addf %256, %257 : vector<2x32xf32>
    %259 = vector.extract_strided_slice %3 {offsets = [0, 4, 0], sizes = [2, 1, 96], strides = [1, 1, 1]} : vector<2x8x96xf32> to vector<2x1x96xf32>
    %260 = vector.shape_cast %259 : vector<2x1x96xf32> to vector<2x96xf32>
    %cst_49 = arith.constant dense<0.000000e+00> : vector<2x96xf32>
    %261 = tpu.matmul %227, %5, %cst_49 {dimension_numbers = #tpu.dot_dimension_numbers<[1], [0], [0], [1], [0, 0, 1, 1], [], []>} : vector<2x32xf32>, vector<32x96xf32>, vector<2x96xf32> -> vector<2x96xf32>
    %262 = vector.broadcast %6 : vector<1x96xf32> to vector<2x96xf32>
    %263 = arith.addf %261, %262 : vector<2x96xf32>
    %264 = vector.extract_strided_slice %260 {offsets = [0, 0], sizes = [2, 32], strides = [1, 1]} : vector<2x96xf32> to vector<2x32xf32>
    %265 = vector.extract_strided_slice %263 {offsets = [0, 0], sizes = [2, 32], strides = [1, 1]} : vector<2x96xf32> to vector<2x32xf32>
    %266 = arith.addf %264, %265 : vector<2x32xf32>
    %267 = arith.negf %266 : vector<2x32xf32>
    %268 = math.exp %267 : vector<2x32xf32>
    %cst_50 = arith.constant 1.000000e+00 : f32
    %269 = vector.broadcast %cst_50 : f32 to vector<2x32xf32>
    %270 = arith.addf %269, %268 : vector<2x32xf32>
    %271 = arith.divf %269, %270 : vector<2x32xf32>
    %272 = vector.extract_strided_slice %260 {offsets = [0, 32], sizes = [2, 32], strides = [1, 1]} : vector<2x96xf32> to vector<2x32xf32>
    %273 = vector.extract_strided_slice %263 {offsets = [0, 32], sizes = [2, 32], strides = [1, 1]} : vector<2x96xf32> to vector<2x32xf32>
    %274 = arith.addf %272, %273 : vector<2x32xf32>
    %275 = arith.negf %274 : vector<2x32xf32>
    %276 = math.exp %275 : vector<2x32xf32>
    %cst_51 = arith.constant 1.000000e+00 : f32
    %277 = vector.broadcast %cst_51 : f32 to vector<2x32xf32>
    %278 = arith.addf %277, %276 : vector<2x32xf32>
    %279 = arith.divf %277, %278 : vector<2x32xf32>
    %280 = vector.extract_strided_slice %260 {offsets = [0, 64], sizes = [2, 32], strides = [1, 1]} : vector<2x96xf32> to vector<2x32xf32>
    %281 = vector.extract_strided_slice %263 {offsets = [0, 64], sizes = [2, 32], strides = [1, 1]} : vector<2x96xf32> to vector<2x32xf32>
    %282 = arith.mulf %271, %281 : vector<2x32xf32>
    %283 = arith.addf %280, %282 : vector<2x32xf32>
    %284 = math.tanh %283 : vector<2x32xf32>
    %cst_52 = arith.constant 1.000000e+00 : f32
    %285 = vector.broadcast %cst_52 : f32 to vector<2x32xf32>
    %286 = arith.subf %285, %279 : vector<2x32xf32>
    %287 = arith.mulf %286, %284 : vector<2x32xf32>
    %288 = arith.mulf %279, %227 : vector<2x32xf32>
    %289 = arith.addf %287, %288 : vector<2x32xf32>
    %290 = vector.extract_strided_slice %4 {offsets = [0, 3, 0], sizes = [2, 1, 96], strides = [1, 1, 1]} : vector<2x8x96xf32> to vector<2x1x96xf32>
    %291 = vector.shape_cast %290 : vector<2x1x96xf32> to vector<2x96xf32>
    %cst_53 = arith.constant dense<0.000000e+00> : vector<2x96xf32>
    %292 = tpu.matmul %258, %7, %cst_53 {dimension_numbers = #tpu.dot_dimension_numbers<[1], [0], [0], [1], [0, 0, 1, 1], [], []>} : vector<2x32xf32>, vector<32x96xf32>, vector<2x96xf32> -> vector<2x96xf32>
    %293 = vector.broadcast %8 : vector<1x96xf32> to vector<2x96xf32>
    %294 = arith.addf %292, %293 : vector<2x96xf32>
    %295 = vector.extract_strided_slice %291 {offsets = [0, 0], sizes = [2, 32], strides = [1, 1]} : vector<2x96xf32> to vector<2x32xf32>
    %296 = vector.extract_strided_slice %294 {offsets = [0, 0], sizes = [2, 32], strides = [1, 1]} : vector<2x96xf32> to vector<2x32xf32>
    %297 = arith.addf %295, %296 : vector<2x32xf32>
    %298 = arith.negf %297 : vector<2x32xf32>
    %299 = math.exp %298 : vector<2x32xf32>
    %cst_54 = arith.constant 1.000000e+00 : f32
    %300 = vector.broadcast %cst_54 : f32 to vector<2x32xf32>
    %301 = arith.addf %300, %299 : vector<2x32xf32>
    %302 = arith.divf %300, %301 : vector<2x32xf32>
    %303 = vector.extract_strided_slice %291 {offsets = [0, 32], sizes = [2, 32], strides = [1, 1]} : vector<2x96xf32> to vector<2x32xf32>
    %304 = vector.extract_strided_slice %294 {offsets = [0, 32], sizes = [2, 32], strides = [1, 1]} : vector<2x96xf32> to vector<2x32xf32>
    %305 = arith.addf %303, %304 : vector<2x32xf32>
    %306 = arith.negf %305 : vector<2x32xf32>
    %307 = math.exp %306 : vector<2x32xf32>
    %cst_55 = arith.constant 1.000000e+00 : f32
    %308 = vector.broadcast %cst_55 : f32 to vector<2x32xf32>
    %309 = arith.addf %308, %307 : vector<2x32xf32>
    %310 = arith.divf %308, %309 : vector<2x32xf32>
    %311 = vector.extract_strided_slice %291 {offsets = [0, 64], sizes = [2, 32], strides = [1, 1]} : vector<2x96xf32> to vector<2x32xf32>
    %312 = vector.extract_strided_slice %294 {offsets = [0, 64], sizes = [2, 32], strides = [1, 1]} : vector<2x96xf32> to vector<2x32xf32>
    %313 = arith.mulf %302, %312 : vector<2x32xf32>
    %314 = arith.addf %311, %313 : vector<2x32xf32>
    %315 = math.tanh %314 : vector<2x32xf32>
    %cst_56 = arith.constant 1.000000e+00 : f32
    %316 = vector.broadcast %cst_56 : f32 to vector<2x32xf32>
    %317 = arith.subf %316, %310 : vector<2x32xf32>
    %318 = arith.mulf %317, %315 : vector<2x32xf32>
    %319 = arith.mulf %310, %258 : vector<2x32xf32>
    %320 = arith.addf %318, %319 : vector<2x32xf32>
    %321 = vector.extract_strided_slice %3 {offsets = [0, 5, 0], sizes = [2, 1, 96], strides = [1, 1, 1]} : vector<2x8x96xf32> to vector<2x1x96xf32>
    %322 = vector.shape_cast %321 : vector<2x1x96xf32> to vector<2x96xf32>
    %cst_57 = arith.constant dense<0.000000e+00> : vector<2x96xf32>
    %323 = tpu.matmul %289, %5, %cst_57 {dimension_numbers = #tpu.dot_dimension_numbers<[1], [0], [0], [1], [0, 0, 1, 1], [], []>} : vector<2x32xf32>, vector<32x96xf32>, vector<2x96xf32> -> vector<2x96xf32>
    %324 = vector.broadcast %6 : vector<1x96xf32> to vector<2x96xf32>
    %325 = arith.addf %323, %324 : vector<2x96xf32>
    %326 = vector.extract_strided_slice %322 {offsets = [0, 0], sizes = [2, 32], strides = [1, 1]} : vector<2x96xf32> to vector<2x32xf32>
    %327 = vector.extract_strided_slice %325 {offsets = [0, 0], sizes = [2, 32], strides = [1, 1]} : vector<2x96xf32> to vector<2x32xf32>
    %328 = arith.addf %326, %327 : vector<2x32xf32>
    %329 = arith.negf %328 : vector<2x32xf32>
    %330 = math.exp %329 : vector<2x32xf32>
    %cst_58 = arith.constant 1.000000e+00 : f32
    %331 = vector.broadcast %cst_58 : f32 to vector<2x32xf32>
    %332 = arith.addf %331, %330 : vector<2x32xf32>
    %333 = arith.divf %331, %332 : vector<2x32xf32>
    %334 = vector.extract_strided_slice %322 {offsets = [0, 32], sizes = [2, 32], strides = [1, 1]} : vector<2x96xf32> to vector<2x32xf32>
    %335 = vector.extract_strided_slice %325 {offsets = [0, 32], sizes = [2, 32], strides = [1, 1]} : vector<2x96xf32> to vector<2x32xf32>
    %336 = arith.addf %334, %335 : vector<2x32xf32>
    %337 = arith.negf %336 : vector<2x32xf32>
    %338 = math.exp %337 : vector<2x32xf32>
    %cst_59 = arith.constant 1.000000e+00 : f32
    %339 = vector.broadcast %cst_59 : f32 to vector<2x32xf32>
    %340 = arith.addf %339, %338 : vector<2x32xf32>
    %341 = arith.divf %339, %340 : vector<2x32xf32>
    %342 = vector.extract_strided_slice %322 {offsets = [0, 64], sizes = [2, 32], strides = [1, 1]} : vector<2x96xf32> to vector<2x32xf32>
    %343 = vector.extract_strided_slice %325 {offsets = [0, 64], sizes = [2, 32], strides = [1, 1]} : vector<2x96xf32> to vector<2x32xf32>
    %344 = arith.mulf %333, %343 : vector<2x32xf32>
    %345 = arith.addf %342, %344 : vector<2x32xf32>
    %346 = math.tanh %345 : vector<2x32xf32>
    %cst_60 = arith.constant 1.000000e+00 : f32
    %347 = vector.broadcast %cst_60 : f32 to vector<2x32xf32>
    %348 = arith.subf %347, %341 : vector<2x32xf32>
    %349 = arith.mulf %348, %346 : vector<2x32xf32>
    %350 = arith.mulf %341, %289 : vector<2x32xf32>
    %351 = arith.addf %349, %350 : vector<2x32xf32>
    %352 = vector.extract_strided_slice %4 {offsets = [0, 2, 0], sizes = [2, 1, 96], strides = [1, 1, 1]} : vector<2x8x96xf32> to vector<2x1x96xf32>
    %353 = vector.shape_cast %352 : vector<2x1x96xf32> to vector<2x96xf32>
    %cst_61 = arith.constant dense<0.000000e+00> : vector<2x96xf32>
    %354 = tpu.matmul %320, %7, %cst_61 {dimension_numbers = #tpu.dot_dimension_numbers<[1], [0], [0], [1], [0, 0, 1, 1], [], []>} : vector<2x32xf32>, vector<32x96xf32>, vector<2x96xf32> -> vector<2x96xf32>
    %355 = vector.broadcast %8 : vector<1x96xf32> to vector<2x96xf32>
    %356 = arith.addf %354, %355 : vector<2x96xf32>
    %357 = vector.extract_strided_slice %353 {offsets = [0, 0], sizes = [2, 32], strides = [1, 1]} : vector<2x96xf32> to vector<2x32xf32>
    %358 = vector.extract_strided_slice %356 {offsets = [0, 0], sizes = [2, 32], strides = [1, 1]} : vector<2x96xf32> to vector<2x32xf32>
    %359 = arith.addf %357, %358 : vector<2x32xf32>
    %360 = arith.negf %359 : vector<2x32xf32>
    %361 = math.exp %360 : vector<2x32xf32>
    %cst_62 = arith.constant 1.000000e+00 : f32
    %362 = vector.broadcast %cst_62 : f32 to vector<2x32xf32>
    %363 = arith.addf %362, %361 : vector<2x32xf32>
    %364 = arith.divf %362, %363 : vector<2x32xf32>
    %365 = vector.extract_strided_slice %353 {offsets = [0, 32], sizes = [2, 32], strides = [1, 1]} : vector<2x96xf32> to vector<2x32xf32>
    %366 = vector.extract_strided_slice %356 {offsets = [0, 32], sizes = [2, 32], strides = [1, 1]} : vector<2x96xf32> to vector<2x32xf32>
    %367 = arith.addf %365, %366 : vector<2x32xf32>
    %368 = arith.negf %367 : vector<2x32xf32>
    %369 = math.exp %368 : vector<2x32xf32>
    %cst_63 = arith.constant 1.000000e+00 : f32
    %370 = vector.broadcast %cst_63 : f32 to vector<2x32xf32>
    %371 = arith.addf %370, %369 : vector<2x32xf32>
    %372 = arith.divf %370, %371 : vector<2x32xf32>
    %373 = vector.extract_strided_slice %353 {offsets = [0, 64], sizes = [2, 32], strides = [1, 1]} : vector<2x96xf32> to vector<2x32xf32>
    %374 = vector.extract_strided_slice %356 {offsets = [0, 64], sizes = [2, 32], strides = [1, 1]} : vector<2x96xf32> to vector<2x32xf32>
    %375 = arith.mulf %364, %374 : vector<2x32xf32>
    %376 = arith.addf %373, %375 : vector<2x32xf32>
    %377 = math.tanh %376 : vector<2x32xf32>
    %cst_64 = arith.constant 1.000000e+00 : f32
    %378 = vector.broadcast %cst_64 : f32 to vector<2x32xf32>
    %379 = arith.subf %378, %372 : vector<2x32xf32>
    %380 = arith.mulf %379, %377 : vector<2x32xf32>
    %381 = arith.mulf %372, %320 : vector<2x32xf32>
    %382 = arith.addf %380, %381 : vector<2x32xf32>
    %383 = vector.extract_strided_slice %3 {offsets = [0, 6, 0], sizes = [2, 1, 96], strides = [1, 1, 1]} : vector<2x8x96xf32> to vector<2x1x96xf32>
    %384 = vector.shape_cast %383 : vector<2x1x96xf32> to vector<2x96xf32>
    %cst_65 = arith.constant dense<0.000000e+00> : vector<2x96xf32>
    %385 = tpu.matmul %351, %5, %cst_65 {dimension_numbers = #tpu.dot_dimension_numbers<[1], [0], [0], [1], [0, 0, 1, 1], [], []>} : vector<2x32xf32>, vector<32x96xf32>, vector<2x96xf32> -> vector<2x96xf32>
    %386 = vector.broadcast %6 : vector<1x96xf32> to vector<2x96xf32>
    %387 = arith.addf %385, %386 : vector<2x96xf32>
    %388 = vector.extract_strided_slice %384 {offsets = [0, 0], sizes = [2, 32], strides = [1, 1]} : vector<2x96xf32> to vector<2x32xf32>
    %389 = vector.extract_strided_slice %387 {offsets = [0, 0], sizes = [2, 32], strides = [1, 1]} : vector<2x96xf32> to vector<2x32xf32>
    %390 = arith.addf %388, %389 : vector<2x32xf32>
    %391 = arith.negf %390 : vector<2x32xf32>
    %392 = math.exp %391 : vector<2x32xf32>
    %cst_66 = arith.constant 1.000000e+00 : f32
    %393 = vector.broadcast %cst_66 : f32 to vector<2x32xf32>
    %394 = arith.addf %393, %392 : vector<2x32xf32>
    %395 = arith.divf %393, %394 : vector<2x32xf32>
    %396 = vector.extract_strided_slice %384 {offsets = [0, 32], sizes = [2, 32], strides = [1, 1]} : vector<2x96xf32> to vector<2x32xf32>
    %397 = vector.extract_strided_slice %387 {offsets = [0, 32], sizes = [2, 32], strides = [1, 1]} : vector<2x96xf32> to vector<2x32xf32>
    %398 = arith.addf %396, %397 : vector<2x32xf32>
    %399 = arith.negf %398 : vector<2x32xf32>
    %400 = math.exp %399 : vector<2x32xf32>
    %cst_67 = arith.constant 1.000000e+00 : f32
    %401 = vector.broadcast %cst_67 : f32 to vector<2x32xf32>
    %402 = arith.addf %401, %400 : vector<2x32xf32>
    %403 = arith.divf %401, %402 : vector<2x32xf32>
    %404 = vector.extract_strided_slice %384 {offsets = [0, 64], sizes = [2, 32], strides = [1, 1]} : vector<2x96xf32> to vector<2x32xf32>
    %405 = vector.extract_strided_slice %387 {offsets = [0, 64], sizes = [2, 32], strides = [1, 1]} : vector<2x96xf32> to vector<2x32xf32>
    %406 = arith.mulf %395, %405 : vector<2x32xf32>
    %407 = arith.addf %404, %406 : vector<2x32xf32>
    %408 = math.tanh %407 : vector<2x32xf32>
    %cst_68 = arith.constant 1.000000e+00 : f32
    %409 = vector.broadcast %cst_68 : f32 to vector<2x32xf32>
    %410 = arith.subf %409, %403 : vector<2x32xf32>
    %411 = arith.mulf %410, %408 : vector<2x32xf32>
    %412 = arith.mulf %403, %351 : vector<2x32xf32>
    %413 = arith.addf %411, %412 : vector<2x32xf32>
    %414 = vector.extract_strided_slice %4 {offsets = [0, 1, 0], sizes = [2, 1, 96], strides = [1, 1, 1]} : vector<2x8x96xf32> to vector<2x1x96xf32>
    %415 = vector.shape_cast %414 : vector<2x1x96xf32> to vector<2x96xf32>
    %cst_69 = arith.constant dense<0.000000e+00> : vector<2x96xf32>
    %416 = tpu.matmul %382, %7, %cst_69 {dimension_numbers = #tpu.dot_dimension_numbers<[1], [0], [0], [1], [0, 0, 1, 1], [], []>} : vector<2x32xf32>, vector<32x96xf32>, vector<2x96xf32> -> vector<2x96xf32>
    %417 = vector.broadcast %8 : vector<1x96xf32> to vector<2x96xf32>
    %418 = arith.addf %416, %417 : vector<2x96xf32>
    %419 = vector.extract_strided_slice %415 {offsets = [0, 0], sizes = [2, 32], strides = [1, 1]} : vector<2x96xf32> to vector<2x32xf32>
    %420 = vector.extract_strided_slice %418 {offsets = [0, 0], sizes = [2, 32], strides = [1, 1]} : vector<2x96xf32> to vector<2x32xf32>
    %421 = arith.addf %419, %420 : vector<2x32xf32>
    %422 = arith.negf %421 : vector<2x32xf32>
    %423 = math.exp %422 : vector<2x32xf32>
    %cst_70 = arith.constant 1.000000e+00 : f32
    %424 = vector.broadcast %cst_70 : f32 to vector<2x32xf32>
    %425 = arith.addf %424, %423 : vector<2x32xf32>
    %426 = arith.divf %424, %425 : vector<2x32xf32>
    %427 = vector.extract_strided_slice %415 {offsets = [0, 32], sizes = [2, 32], strides = [1, 1]} : vector<2x96xf32> to vector<2x32xf32>
    %428 = vector.extract_strided_slice %418 {offsets = [0, 32], sizes = [2, 32], strides = [1, 1]} : vector<2x96xf32> to vector<2x32xf32>
    %429 = arith.addf %427, %428 : vector<2x32xf32>
    %430 = arith.negf %429 : vector<2x32xf32>
    %431 = math.exp %430 : vector<2x32xf32>
    %cst_71 = arith.constant 1.000000e+00 : f32
    %432 = vector.broadcast %cst_71 : f32 to vector<2x32xf32>
    %433 = arith.addf %432, %431 : vector<2x32xf32>
    %434 = arith.divf %432, %433 : vector<2x32xf32>
    %435 = vector.extract_strided_slice %415 {offsets = [0, 64], sizes = [2, 32], strides = [1, 1]} : vector<2x96xf32> to vector<2x32xf32>
    %436 = vector.extract_strided_slice %418 {offsets = [0, 64], sizes = [2, 32], strides = [1, 1]} : vector<2x96xf32> to vector<2x32xf32>
    %437 = arith.mulf %426, %436 : vector<2x32xf32>
    %438 = arith.addf %435, %437 : vector<2x32xf32>
    %439 = math.tanh %438 : vector<2x32xf32>
    %cst_72 = arith.constant 1.000000e+00 : f32
    %440 = vector.broadcast %cst_72 : f32 to vector<2x32xf32>
    %441 = arith.subf %440, %434 : vector<2x32xf32>
    %442 = arith.mulf %441, %439 : vector<2x32xf32>
    %443 = arith.mulf %434, %382 : vector<2x32xf32>
    %444 = arith.addf %442, %443 : vector<2x32xf32>
    %445 = vector.extract_strided_slice %3 {offsets = [0, 7, 0], sizes = [2, 1, 96], strides = [1, 1, 1]} : vector<2x8x96xf32> to vector<2x1x96xf32>
    %446 = vector.shape_cast %445 : vector<2x1x96xf32> to vector<2x96xf32>
    %cst_73 = arith.constant dense<0.000000e+00> : vector<2x96xf32>
    %447 = tpu.matmul %413, %5, %cst_73 {dimension_numbers = #tpu.dot_dimension_numbers<[1], [0], [0], [1], [0, 0, 1, 1], [], []>} : vector<2x32xf32>, vector<32x96xf32>, vector<2x96xf32> -> vector<2x96xf32>
    %448 = vector.broadcast %6 : vector<1x96xf32> to vector<2x96xf32>
    %449 = arith.addf %447, %448 : vector<2x96xf32>
    %450 = vector.extract_strided_slice %446 {offsets = [0, 0], sizes = [2, 32], strides = [1, 1]} : vector<2x96xf32> to vector<2x32xf32>
    %451 = vector.extract_strided_slice %449 {offsets = [0, 0], sizes = [2, 32], strides = [1, 1]} : vector<2x96xf32> to vector<2x32xf32>
    %452 = arith.addf %450, %451 : vector<2x32xf32>
    %453 = arith.negf %452 : vector<2x32xf32>
    %454 = math.exp %453 : vector<2x32xf32>
    %cst_74 = arith.constant 1.000000e+00 : f32
    %455 = vector.broadcast %cst_74 : f32 to vector<2x32xf32>
    %456 = arith.addf %455, %454 : vector<2x32xf32>
    %457 = arith.divf %455, %456 : vector<2x32xf32>
    %458 = vector.extract_strided_slice %446 {offsets = [0, 32], sizes = [2, 32], strides = [1, 1]} : vector<2x96xf32> to vector<2x32xf32>
    %459 = vector.extract_strided_slice %449 {offsets = [0, 32], sizes = [2, 32], strides = [1, 1]} : vector<2x96xf32> to vector<2x32xf32>
    %460 = arith.addf %458, %459 : vector<2x32xf32>
    %461 = arith.negf %460 : vector<2x32xf32>
    %462 = math.exp %461 : vector<2x32xf32>
    %cst_75 = arith.constant 1.000000e+00 : f32
    %463 = vector.broadcast %cst_75 : f32 to vector<2x32xf32>
    %464 = arith.addf %463, %462 : vector<2x32xf32>
    %465 = arith.divf %463, %464 : vector<2x32xf32>
    %466 = vector.extract_strided_slice %446 {offsets = [0, 64], sizes = [2, 32], strides = [1, 1]} : vector<2x96xf32> to vector<2x32xf32>
    %467 = vector.extract_strided_slice %449 {offsets = [0, 64], sizes = [2, 32], strides = [1, 1]} : vector<2x96xf32> to vector<2x32xf32>
    %468 = arith.mulf %457, %467 : vector<2x32xf32>
    %469 = arith.addf %466, %468 : vector<2x32xf32>
    %470 = math.tanh %469 : vector<2x32xf32>
    %cst_76 = arith.constant 1.000000e+00 : f32
    %471 = vector.broadcast %cst_76 : f32 to vector<2x32xf32>
    %472 = arith.subf %471, %465 : vector<2x32xf32>
    %473 = arith.mulf %472, %470 : vector<2x32xf32>
    %474 = arith.mulf %465, %413 : vector<2x32xf32>
    %475 = arith.addf %473, %474 : vector<2x32xf32>
    %476 = vector.extract_strided_slice %4 {offsets = [0, 0, 0], sizes = [2, 1, 96], strides = [1, 1, 1]} : vector<2x8x96xf32> to vector<2x1x96xf32>
    %477 = vector.shape_cast %476 : vector<2x1x96xf32> to vector<2x96xf32>
    %cst_77 = arith.constant dense<0.000000e+00> : vector<2x96xf32>
    %478 = tpu.matmul %444, %7, %cst_77 {dimension_numbers = #tpu.dot_dimension_numbers<[1], [0], [0], [1], [0, 0, 1, 1], [], []>} : vector<2x32xf32>, vector<32x96xf32>, vector<2x96xf32> -> vector<2x96xf32>
    %479 = vector.broadcast %8 : vector<1x96xf32> to vector<2x96xf32>
    %480 = arith.addf %478, %479 : vector<2x96xf32>
    %481 = vector.extract_strided_slice %477 {offsets = [0, 0], sizes = [2, 32], strides = [1, 1]} : vector<2x96xf32> to vector<2x32xf32>
    %482 = vector.extract_strided_slice %480 {offsets = [0, 0], sizes = [2, 32], strides = [1, 1]} : vector<2x96xf32> to vector<2x32xf32>
    %483 = arith.addf %481, %482 : vector<2x32xf32>
    %484 = arith.negf %483 : vector<2x32xf32>
    %485 = math.exp %484 : vector<2x32xf32>
    %cst_78 = arith.constant 1.000000e+00 : f32
    %486 = vector.broadcast %cst_78 : f32 to vector<2x32xf32>
    %487 = arith.addf %486, %485 : vector<2x32xf32>
    %488 = arith.divf %486, %487 : vector<2x32xf32>
    %489 = vector.extract_strided_slice %477 {offsets = [0, 32], sizes = [2, 32], strides = [1, 1]} : vector<2x96xf32> to vector<2x32xf32>
    %490 = vector.extract_strided_slice %480 {offsets = [0, 32], sizes = [2, 32], strides = [1, 1]} : vector<2x96xf32> to vector<2x32xf32>
    %491 = arith.addf %489, %490 : vector<2x32xf32>
    %492 = arith.negf %491 : vector<2x32xf32>
    %493 = math.exp %492 : vector<2x32xf32>
    %cst_79 = arith.constant 1.000000e+00 : f32
    %494 = vector.broadcast %cst_79 : f32 to vector<2x32xf32>
    %495 = arith.addf %494, %493 : vector<2x32xf32>
    %496 = arith.divf %494, %495 : vector<2x32xf32>
    %497 = vector.extract_strided_slice %477 {offsets = [0, 64], sizes = [2, 32], strides = [1, 1]} : vector<2x96xf32> to vector<2x32xf32>
    %498 = vector.extract_strided_slice %480 {offsets = [0, 64], sizes = [2, 32], strides = [1, 1]} : vector<2x96xf32> to vector<2x32xf32>
    %499 = arith.mulf %488, %498 : vector<2x32xf32>
    %500 = arith.addf %497, %499 : vector<2x32xf32>
    %501 = math.tanh %500 : vector<2x32xf32>
    %cst_80 = arith.constant 1.000000e+00 : f32
    %502 = vector.broadcast %cst_80 : f32 to vector<2x32xf32>
    %503 = arith.subf %502, %496 : vector<2x32xf32>
    %504 = arith.mulf %503, %501 : vector<2x32xf32>
    %505 = arith.mulf %496, %444 : vector<2x32xf32>
    %506 = arith.addf %504, %505 : vector<2x32xf32>
    %c0_81 = arith.constant 0 : index
    %c0_82 = arith.constant 0 : index
    %507 = vector.load %arg9[%c0_81, %c0_82] : memref<2x32xf32, #tpu.memory_space<vmem>>, vector<2x32xf32>
    tpu.vector_store %arg9[%c0_81, %c0_82], %475 {strides = array<i32>} : memref<2x32xf32, #tpu.memory_space<vmem>>, vector<2x32xf32>,
    %c0_83 = arith.constant 0 : index
    %c0_84 = arith.constant 0 : index
    %508 = vector.load %arg10[%c0_83, %c0_84] : memref<2x32xf32, #tpu.memory_space<vmem>>, vector<2x32xf32>
    tpu.vector_store %arg10[%c0_83, %c0_84], %506 {strides = array<i32>} : memref<2x32xf32, #tpu.memory_space<vmem>>, vector<2x32xf32>,
    %509 = vector.shape_cast %41 : vector<2x32xf32> to vector<2x1x32xf32>
    %510 = vector.shape_cast %103 : vector<2x32xf32> to vector<2x1x32xf32>
    %511 = vector.shape_cast %165 : vector<2x32xf32> to vector<2x1x32xf32>
    %512 = vector.shape_cast %227 : vector<2x32xf32> to vector<2x1x32xf32>
    %513 = vector.shape_cast %289 : vector<2x32xf32> to vector<2x1x32xf32>
    %514 = vector.shape_cast %351 : vector<2x32xf32> to vector<2x1x32xf32>
    %515 = vector.shape_cast %413 : vector<2x32xf32> to vector<2x1x32xf32>
    %516 = vector.shape_cast %475 : vector<2x32xf32> to vector<2x1x32xf32>
    %517 = tpu.concatenate %509, %510, %511, %512, %513, %514, %515, %516 in 1 : vector<2x1x32xf32>, vector<2x1x32xf32>, vector<2x1x32xf32>, vector<2x1x32xf32>, vector<2x1x32xf32>, vector<2x1x32xf32>, vector<2x1x32xf32>, vector<2x1x32xf32> -> vector<2x8x32xf32>
    %c0_85 = arith.constant 0 : index
    %c0_86 = arith.constant 0 : index
    %c0_87 = arith.constant 0 : index
    %518 = vector.load %arg7[%c0_85, %c0_86, %c0_87] : memref<2x8x32xf32, #tpu.memory_space<vmem>>, vector<2x8x32xf32>
    tpu.vector_store %arg7[%c0_85, %c0_86, %c0_87], %517 {strides = array<i32>} : memref<2x8x32xf32, #tpu.memory_space<vmem>>, vector<2x8x32xf32>,
    %519 = vector.shape_cast %506 : vector<2x32xf32> to vector<2x1x32xf32>
    %520 = vector.shape_cast %444 : vector<2x32xf32> to vector<2x1x32xf32>
    %521 = vector.shape_cast %382 : vector<2x32xf32> to vector<2x1x32xf32>
    %522 = vector.shape_cast %320 : vector<2x32xf32> to vector<2x1x32xf32>
    %523 = vector.shape_cast %258 : vector<2x32xf32> to vector<2x1x32xf32>
    %524 = vector.shape_cast %196 : vector<2x32xf32> to vector<2x1x32xf32>
    %525 = vector.shape_cast %134 : vector<2x32xf32> to vector<2x1x32xf32>
    %526 = vector.shape_cast %72 : vector<2x32xf32> to vector<2x1x32xf32>
    %527 = tpu.concatenate %519, %520, %521, %522, %523, %524, %525, %526 in 1 : vector<2x1x32xf32>, vector<2x1x32xf32>, vector<2x1x32xf32>, vector<2x1x32xf32>, vector<2x1x32xf32>, vector<2x1x32xf32>, vector<2x1x32xf32>, vector<2x1x32xf32> -> vector<2x8x32xf32>
    %c0_88 = arith.constant 0 : index
    %c0_89 = arith.constant 0 : index
    %c0_90 = arith.constant 0 : index
    %528 = vector.load %arg8[%c0_88, %c0_89, %c0_90] : memref<2x8x32xf32, #tpu.memory_space<vmem>>, vector<2x8x32xf32>
    tpu.vector_store %arg8[%c0_88, %c0_89, %c0_90], %527 {strides = array<i32>} : memref<2x8x32xf32, #tpu.memory_space<vmem>>, vector<2x8x32xf32>,
    return
  }
  func.func @transform_0(%arg0: i32) -> (i32, i32, i32) {
    %c0_i32 = arith.constant 0 : i32
    %c0_i32_0 = arith.constant 0 : i32
    %c0_i32_1 = arith.constant 0 : i32
    return %c0_i32, %arg0, %c0_i32_0 : i32, i32, i32
  }
  func.func @transform_1(%arg0: i32) -> (i32, i32, i32) {
    %c1_i32 = arith.constant 1 : i32
    %0 = arith.subi %c1_i32, %arg0 : i32
    %c0_i32 = arith.constant 0 : i32
    %c0_i32_0 = arith.constant 0 : i32
    %c0_i32_1 = arith.constant 0 : i32
    return %c0_i32, %0, %c0_i32_0 : i32, i32, i32
  }
  func.func @transform_2(%arg0: i32) -> (i32, i32) {
    %c0_i32 = arith.constant 0 : i32
    %c0_i32_0 = arith.constant 0 : i32
    %c0_i32_1 = arith.constant 0 : i32
    return %c0_i32, %c0_i32_0 : i32, i32
  }
  func.func @transform_3(%arg0: i32) -> (i32, i32) {
    %c0_i32 = arith.constant 0 : i32
    %c0_i32_0 = arith.constant 0 : i32
    %c0_i32_1 = arith.constant 0 : i32
    return %c0_i32, %c0_i32_0 : i32, i32
  }
  func.func @transform_4(%arg0: i32) -> (i32, i32) {
    %c0_i32 = arith.constant 0 : i32
    %c0_i32_0 = arith.constant 0 : i32
    %c0_i32_1 = arith.constant 0 : i32
    return %c0_i32, %c0_i32_0 : i32, i32
  }
  func.func @transform_5(%arg0: i32) -> (i32, i32) {
    %c0_i32 = arith.constant 0 : i32
    %c0_i32_0 = arith.constant 0 : i32
    %c0_i32_1 = arith.constant 0 : i32
    return %c0_i32, %c0_i32_0 : i32, i32
  }
  func.func @transform_6(%arg0: i32) -> (i32, i32, i32) {
    %c0_i32 = arith.constant 0 : i32
    %c0_i32_0 = arith.constant 0 : i32
    %c0_i32_1 = arith.constant 0 : i32
    return %c0_i32, %arg0, %c0_i32_0 : i32, i32, i32
  }
  func.func @transform_7(%arg0: i32) -> (i32, i32, i32) {
    %c1_i32 = arith.constant 1 : i32
    %0 = arith.subi %c1_i32, %arg0 : i32
    %c0_i32 = arith.constant 0 : i32
    %c0_i32_0 = arith.constant 0 : i32
    %c0_i32_1 = arith.constant 0 : i32
    return %c0_i32, %0, %c0_i32_0 : i32, i32, i32
  }
}

module attributes {stable_mosaic.version = 11 : i64} {
  func.func @_dual_proj_kernel(%arg0: i32, %arg1: memref<32x64xf32, #tpu.memory_space<vmem>>, %arg2: memref<64x192xf32, #tpu.memory_space<vmem>>, %arg3: memref<1x192xf32, #tpu.memory_space<vmem>>, %arg4: memref<32x96xf32, #tpu.memory_space<vmem>>, %arg5: memref<32x96xf32, #tpu.memory_space<vmem>>) attributes {dimension_semantics = [#tpu.dimension_semantics<parallel>], iteration_bounds = array<i64: 1>, scalar_prefetch = 0 : i64, scratch_operands = 0 : i64, tpu.core_type = #tpu.core_type<tc>, window_params = [{transform_indices = @transform_0, window_bounds = array<i64: 32, 64>}, {pipeline_mode = #tpu.pipeline_mode<synchronous>, transform_indices = @transform_1, window_bounds = array<i64: 64, 192>}, {pipeline_mode = #tpu.pipeline_mode<synchronous>, transform_indices = @transform_2, window_bounds = array<i64: 1, 192>}, {transform_indices = @transform_3, window_bounds = array<i64: 32, 96>}, {transform_indices = @transform_4, window_bounds = array<i64: 32, 96>}]} {
    %c0 = arith.constant 0 : index
    %c0_0 = arith.constant 0 : index
    %0 = vector.load %arg1[%c0, %c0_0] : memref<32x64xf32, #tpu.memory_space<vmem>>, vector<32x64xf32>
    %c0_1 = arith.constant 0 : index
    %c0_2 = arith.constant 0 : index
    %1 = vector.load %arg2[%c0_1, %c0_2] : memref<64x192xf32, #tpu.memory_space<vmem>>, vector<64x192xf32>
    %cst = arith.constant dense<0.000000e+00> : vector<32x192xf32>
    %2 = tpu.matmul %0, %1, %cst {dimension_numbers = #tpu.dot_dimension_numbers<[1], [0], [0], [1], [0, 0, 1, 1], [], []>} : vector<32x64xf32>, vector<64x192xf32>, vector<32x192xf32> -> vector<32x192xf32>
    %c0_3 = arith.constant 0 : index
    %c0_4 = arith.constant 0 : index
    %3 = vector.load %arg3[%c0_3, %c0_4] : memref<1x192xf32, #tpu.memory_space<vmem>>, vector<1x192xf32>
    %4 = vector.broadcast %3 : vector<1x192xf32> to vector<32x192xf32>
    %5 = arith.addf %2, %4 : vector<32x192xf32>
    %6 = vector.extract_strided_slice %5 {offsets = [0, 0], sizes = [32, 96], strides = [1, 1]} : vector<32x192xf32> to vector<32x96xf32>
    %c0_5 = arith.constant 0 : index
    %c0_6 = arith.constant 0 : index
    %7 = vector.load %arg4[%c0_5, %c0_6] : memref<32x96xf32, #tpu.memory_space<vmem>>, vector<32x96xf32>
    tpu.vector_store %arg4[%c0_5, %c0_6], %6 {strides = array<i32>} : memref<32x96xf32, #tpu.memory_space<vmem>>, vector<32x96xf32>,
    %8 = vector.extract_strided_slice %5 {offsets = [0, 96], sizes = [32, 96], strides = [1, 1]} : vector<32x192xf32> to vector<32x96xf32>
    %c0_7 = arith.constant 0 : index
    %c0_8 = arith.constant 0 : index
    %9 = vector.load %arg5[%c0_7, %c0_8] : memref<32x96xf32, #tpu.memory_space<vmem>>, vector<32x96xf32>
    tpu.vector_store %arg5[%c0_7, %c0_8], %8 {strides = array<i32>} : memref<32x96xf32, #tpu.memory_space<vmem>>, vector<32x96xf32>,
    return
  }
  func.func @transform_0(%arg0: i32) -> (i32, i32) {
    %c0_i32 = arith.constant 0 : i32
    %c0_i32_0 = arith.constant 0 : i32
    return %arg0, %c0_i32 : i32, i32
  }
  func.func @transform_1(%arg0: i32) -> (i32, i32) {
    %c0_i32 = arith.constant 0 : i32
    %c0_i32_0 = arith.constant 0 : i32
    %c0_i32_1 = arith.constant 0 : i32
    return %c0_i32, %c0_i32_0 : i32, i32
  }
  func.func @transform_2(%arg0: i32) -> (i32, i32) {
    %c0_i32 = arith.constant 0 : i32
    %c0_i32_0 = arith.constant 0 : i32
    %c0_i32_1 = arith.constant 0 : i32
    return %c0_i32, %c0_i32_0 : i32, i32
  }
  func.func @transform_3(%arg0: i32) -> (i32, i32) {
    %c0_i32 = arith.constant 0 : i32
    %c0_i32_0 = arith.constant 0 : i32
    return %arg0, %c0_i32 : i32, i32
  }
  func.func @transform_4(%arg0: i32) -> (i32, i32) {
    %c0_i32 = arith.constant 0 : i32
    %c0_i32_0 = arith.constant 0 : i32
    return %arg0, %c0_i32 : i32, i32
  }
}

</mosaic_0001>

<llo_original>
// kernel: gru_encoder_forward.5
$region0: #{gru_encoder_forward.5}
  #allocation0 [shape = 'u32[]', space=smem, size = 0x4, offset = 0x4, fixed_abs, tag = 'smem constant byte address 0x4 - core index']
  #allocation1 [shape = 'u32[144,128]{1,0:T(1,128)}', space=vmem, size = 0x12000, scoped, tag = 'internal scratch']
  %s0 = inlined_call_operand.vmem [shape: f32[32,12], index: 0, kind: input, shape index: {}]
  %s1 = inlined_call_operand.vmem [shape: f32[12,32], index: 1, kind: input, shape index: {}]
  %s2 = inlined_call_operand.vmem [shape: f32[1,32], index: 2, kind: input, shape index: {}]
  %s3 = inlined_call_operand.vmem [shape: f32[32,32], index: 3, kind: input, shape index: {}]
  %s4 = inlined_call_operand.vmem [shape: f32[1,32], index: 4, kind: input, shape index: {}]
  %s5 = inlined_call_operand.vmem [shape: f32[32,32], index: 5, kind: output, shape index: {}]
  %s6 = sld [smem:[#allocation0]]
  $region30: #{gru_encoder_forward.5} parent=0
    _
  %s8 = ssub.s32 1, %s6
  %s9 = scalar_select 0, %s8, %s6
  // Predicated region
  $region2: #{gru_encoder_forward.5} parent=0 // pred_check
    _
  $region3: #{gru_encoder_forward.5} parent=0 // pred_check_branch
    %11 = sbr.rel (0) target = $region5
  $region4: #{gru_encoder_forward.5} parent=0 // pred_region
    _
  $region5: #{gru_encoder_forward.5} parent=0 // pred_fallthru
    _
  // Predicated region
  $region6: #{gru_encoder_forward.5} parent=0 // pred_check
    _
  $region7: #{gru_encoder_forward.5} parent=0 // pred_check_branch
    %13 = sbr.rel (0) target = $region9
  $region8: #{gru_encoder_forward.5} parent=0 // pred_region
    _
  $region9: #{gru_encoder_forward.5} parent=0 // pred_fallthru
    _
  // Predicated region
  $region10: #{gru_encoder_forward.5} parent=0 // pred_check
    _
  $region11: #{gru_encoder_forward.5} parent=0 // pred_check_branch
    %15 = sbr.rel (0) target = $region13
  $region12: #{gru_encoder_forward.5} parent=0 // pred_region
    _
  $region13: #{gru_encoder_forward.5} parent=0 // pred_fallthru
    _
  // Predicated region
  $region14: #{gru_encoder_forward.5} parent=0 // pred_check
    _
  $region15: #{gru_encoder_forward.5} parent=0 // pred_check_branch
    %17 = sbr.rel (0) target = $region17
  $region16: #{gru_encoder_forward.5} parent=0 // pred_region
    _
  $region17: #{gru_encoder_forward.5} parent=0 // pred_fallthru
    _
  // Predicated region
  $region18: #{gru_encoder_forward.5} parent=0 // pred_check
    _
  $region19: #{gru_encoder_forward.5} parent=0 // pred_check_branch
    %19 = sbr.rel (0) target = $region21
  $region20: #{gru_encoder_forward.5} parent=0 // pred_region
    _
  $region21: #{gru_encoder_forward.5} parent=0 // pred_fallthru
    _
  %v20 = vld [vmem:[%s0] sm:$0xff]
  %v21 = vld [vmem:[%s0 + $0x8] sm:$0xff]
  %v22 = vld [vmem:[%s0 + $0x10] sm:$0xff]
  %v23 = vld [vmem:[%s0 + $0x18] sm:$0xff]
  %v24 = vld [vmem:[%s1] sm:$0xff]
  %v25 = vld [vmem:[%s1 + $0x8] sm:$0xf]
  %v26 = vld [vmem:[%s2] sm:$0x1]
  %v28 = vlaneseq
  %v29 = vshrl.u32 %v28, 7
  %v30 = vsub.s32 0, %v29
  %v31 = vrot.slane %v26, %v30
  %vm33 = vcmask 97280
  %v35 = vsel %vm33, %v20, 0
  %v38 = vsel %vm33, %v21, 0
  %v41 = vsel %vm33, %v22, 0
  %v44 = vsel %vm33, %v23, 0
  %vm46 = vcmask 1043456
  %v48 = vsel %vm46, %v25, 0
  %50 = vmatprep.subr.mxu0 0.0
  %51 = vmatpush1.msra.mxu0 %v24
  %52 = vmatprep.subr.mxu0 0.0
  %53 = vmatpush1.msra.mxu0 %v48
  %54 = vmatprep.subr.mxu0 0.0
  %55 = vmatpush1.msra.mxu0 0.0
  %56 = vmatprep.subr.mxu0 0.0
  %57 = vmatpush1.msra.mxu0 0.0
  %58 = vmatprep.subr.mxu0 0.0
  %59 = vmatpush1.msra.mxu0 0.0
  %60 = vmatprep.subr.mxu0 0.0
  %61 = vmatpush1.msra.mxu0 0.0
  %62 = vmatprep.subr.mxu0 0.0
  %63 = vmatpush1.msra.mxu0 0.0
  %64 = vmatprep.subr.mxu0 0.0
  %65 = vmatpush1.msra.mxu0 0.0
  %66 = vmatprep.subr.mxu0 0.0
  %67 = vmatpush1.msra.mxu0 0.0
  %68 = vmatprep.subr.mxu0 0.0
  %69 = vmatpush1.msra.mxu0 0.0
  %70 = vmatprep.subr.mxu0 0.0
  %71 = vmatpush1.msra.mxu0 0.0
  %72 = vmatprep.subr.mxu0 0.0
  %73 = vmatpush1.msra.mxu0 0.0
  %74 = vmatprep.subr.mxu0 0.0
  %75 = vmatpush1.msra.mxu0 0.0
  %76 = vmatprep.subr.mxu0 0.0
  %77 = vmatpush1.msra.mxu0 0.0
  %78 = vmatprep.subr.mxu0 0.0
  %79 = vmatpush1.msra.mxu0 0.0
  %80 = vmatprep.subr.mxu0 0.0
  %81 = vmatpush1.msra.mxu0 0.0
  %82 = vmatprep.subr.mxu0 0.0
  %83 = vmatpush1.msra.mxu0 0.0
  %84 = vmatprep.subr.mxu0 0.0
  %85 = vmatpush1.msra.mxu0 0.0
  %86 = vmatprep.subr.mxu0 0.0
  %87 = vmatpush1.msra.mxu0 0.0
  %88 = vmatprep.subr.mxu0 0.0
  %89 = vmatpush1.msra.mxu0 0.0
  %90 = vmatprep.subr.mxu0 0.0
  %91 = vmatpush1.msra.mxu0 0.0
  %92 = vmatprep.subr.mxu0 0.0
  %93 = vmatpush1.msra.mxu0 0.0
  %94 = vmatprep.subr.mxu0 0.0
  %95 = vmatpush1.msra.mxu0 0.0
  %96 = vmatprep.subr.mxu0 0.0
  %97 = vmatpush1.msra.mxu0 0.0
  %98 = vmatprep.subr.mxu0 0.0
  %99 = vmatpush1.msra.mxu0 0.0
  %100 = vmatprep.subr.mxu0 0.0
  %101 = vmatpush1.msra.mxu0 0.0
  %102 = vmatprep.subr.mxu0 0.0
  %103 = vmatpush1.msra.mxu0 0.0
  %104 = vmatprep.subr.mxu0 0.0
  %105 = vmatpush1.msra.mxu0 0.0
  %106 = vmatprep.subr.mxu0 0.0
  %107 = vmatpush1.msra.mxu0 0.0
  %108 = vmatprep.subr.mxu0 0.0
  %109 = vmatpush1.msra.mxu0 0.0
  %110 = vmatprep.subr.mxu0 0.0
  %111 = vmatpush1.msra.mxu0 0.0
  %112 = vmatprep.subr.mxu0 0.0
  %113 = vmatpush1.msra.mxu0 0.0
  %114 = vmatprep.mubr.f32.mxu0 0.0
  %115 = vmatmul.mubr.f32.gmra.mrb[0].mxu0 %v35
  %v116 = vpop.f32.mrb[0].mxu0
  %v117 = vadd.f32 %v31, %v116
  %v118 = vpop.f32.mrb[0].mxu0
  %119 = vmatprep.mubr.f32.mxu0 0.0
  %120 = vmatmul.mubr.f32.gmra.mrb[0].mxu0 %v38
  %v121 = vpop.f32.mrb[0].mxu0
  %v122 = vadd.f32 %v31, %v121
  %v123 = vpop.f32.mrb[0].mxu0
  %124 = vmatprep.mubr.f32.mxu0 0.0
  %125 = vmatmul.mubr.f32.gmra.mrb[0].mxu0 %v41
  %v126 = vpop.f32.mrb[0].mxu0
  %v127 = vadd.f32 %v31, %v126
  %v128 = vpop.f32.mrb[0].mxu0
  %129 = vmatprep.mubr.f32.mxu0 0.0
  %130 = vmatmul.mubr.f32.gmra.mrb[0].mxu0 %v44
  %v131 = vpop.f32.mrb[0].mxu0
  %v132 = vadd.f32 %v31, %v131
  %v133 = vpop.f32.mrb[0].mxu0
  %134 = vdwg.mxu0
  %v135 = vmax.f32 %v117, 0.0
  %v136 = vmax.f32 %v122, 0.0
  %v137 = vmax.f32 %v127, 0.0
  %v138 = vmax.f32 %v132, 0.0
  %v139 = vld [vmem:[%s3] sm:$0xff]
  %v140 = vld [vmem:[%s3 + $0x8] sm:$0xff]
  %v141 = vld [vmem:[%s3 + $0x10] sm:$0xff]
  %v142 = vld [vmem:[%s3 + $0x18] sm:$0xff]
  %v143 = vld [vmem:[%s4] sm:$0x1]
  %v145 = vlaneseq
  %v146 = vshrl.u32 %v145, 7
  %v147 = vsub.s32 0, %v146
  %v148 = vrot.slane %v143, %v147
  %vm150 = vcmask 261120
  %v152 = vsel %vm150, %v135, 0
  %v155 = vsel %vm150, %v136, 0
  %v158 = vsel %vm150, %v137, 0
  %v161 = vsel %vm150, %v138, 0
  %163 = vmatprep.subr.mxu0 0.0
  %164 = vmatpush1.msra.mxu0 %v139
  %165 = vmatprep.subr.mxu0 0.0
  %166 = vmatpush1.msra.mxu0 %v140
  %167 = vmatprep.subr.mxu0 0.0
  %168 = vmatpush1.msra.mxu0 %v141
  %169 = vmatprep.subr.mxu0 0.0
  %170 = vmatpush1.msra.mxu0 %v142
  %171 = vmatprep.subr.mxu0 0.0
  %172 = vmatpush1.msra.mxu0 0.0
  %173 = vmatprep.subr.mxu0 0.0
  %174 = vmatpush1.msra.mxu0 0.0
  %175 = vmatprep.subr.mxu0 0.0
  %176 = vmatpush1.msra.mxu0 0.0
  %177 = vmatprep.subr.mxu0 0.0
  %178 = vmatpush1.msra.mxu0 0.0
  %179 = vmatprep.subr.mxu0 0.0
  %180 = vmatpush1.msra.mxu0 0.0
  %181 = vmatprep.subr.mxu0 0.0
  %182 = vmatpush1.msra.mxu0 0.0
  %183 = vmatprep.subr.mxu0 0.0
  %184 = vmatpush1.msra.mxu0 0.0
  %185 = vmatprep.subr.mxu0 0.0
  %186 = vmatpush1.msra.mxu0 0.0
  %187 = vmatprep.subr.mxu0 0.0
  %188 = vmatpush1.msra.mxu0 0.0
  %189 = vmatprep.subr.mxu0 0.0
  %190 = vmatpush1.msra.mxu0 0.0
  %191 = vmatprep.subr.mxu0 0.0
  %192 = vmatpush1.msra.mxu0 0.0
  %193 = vmatprep.subr.mxu0 0.0
  %194 = vmatpush1.msra.mxu0 0.0
  %195 = vmatprep.subr.mxu0 0.0
  %196 = vmatpush1.msra.mxu0 0.0
  %197 = vmatprep.subr.mxu0 0.0
  %198 = vmatpush1.msra.mxu0 0.0
  %199 = vmatprep.subr.mxu0 0.0
  %200 = vmatpush1.msra.mxu0 0.0
  %201 = vmatprep.subr.mxu0 0.0
  %202 = vmatpush1.msra.mxu0 0.0
  %203 = vmatprep.subr.mxu0 0.0
  %204 = vmatpush1.msra.mxu0 0.0
  %205 = vmatprep.subr.mxu0 0.0
  %206 = vmatpush1.msra.mxu0 0.0
  %207 = vmatprep.subr.mxu0 0.0
  %208 = vmatpush1.msra.mxu0 0.0
  %209 = vmatprep.subr.mxu0 0.0
  %210 = vmatpush1.msra.mxu0 0.0
  %211 = vmatprep.subr.mxu0 0.0
  %212 = vmatpush1.msra.mxu0 0.0
  %213 = vmatprep.subr.mxu0 0.0
  %214 = vmatpush1.msra.mxu0 0.0
  %215 = vmatprep.subr.mxu0 0.0
  %216 = vmatpush1.msra.mxu0 0.0
  %217 = vmatprep.subr.mxu0 0.0
  %218 = vmatpush1.msra.mxu0 0.0
  %219 = vmatprep.subr.mxu0 0.0
  %220 = vmatpush1.msra.mxu0 0.0
  %221 = vmatprep.subr.mxu0 0.0
  %222 = vmatpush1.msra.mxu0 0.0
  %223 = vmatprep.subr.mxu0 0.0
  %224 = vmatpush1.msra.mxu0 0.0
  %225 = vmatprep.subr.mxu0 0.0
  %226 = vmatpush1.msra.mxu0 0.0
  %227 = vmatprep.mubr.f32.mxu0 0.0
  %228 = vmatmul.mubr.f32.gmra.mrb[0].mxu0 %v152
  %v229 = vpop.f32.mrb[0].mxu0
  %v230 = vadd.f32 %v148, %v229
  %v231 = vpop.f32.mrb[0].mxu0
  %232 = vmatprep.mubr.f32.mxu0 0.0
  %233 = vmatmul.mubr.f32.gmra.mrb[0].mxu0 %v155
  %v234 = vpop.f32.mrb[0].mxu0
  %v235 = vadd.f32 %v148, %v234
  %v236 = vpop.f32.mrb[0].mxu0
  %237 = vmatprep.mubr.f32.mxu0 0.0
  %238 = vmatmul.mubr.f32.gmra.mrb[0].mxu0 %v158
  %v239 = vpop.f32.mrb[0].mxu0
  %v240 = vadd.f32 %v148, %v239
  %v241 = vpop.f32.mrb[0].mxu0
  %242 = vmatprep.mubr.f32.mxu0 0.0
  %243 = vmatmul.mubr.f32.gmra.mrb[0].mxu0 %v161
  %v244 = vpop.f32.mrb[0].mxu0
  %v245 = vadd.f32 %v148, %v244
  %v246 = vpop.f32.mrb[0].mxu0
  %247 = vdwg.mxu0
  %v248 = vmax.f32 %v230, 0.0
  %v249 = vmax.f32 %v235, 0.0
  %v250 = vmax.f32 %v240, 0.0
  %v251 = vmax.f32 %v245, 0.0
  %252 = vst.msk [vmem:[%s5] sm:$0xff] %vm150, %v248
  %253 = vst.msk [vmem:[%s5 + $0x8] sm:$0xff] %vm150, %v249
  %254 = vst.msk [vmem:[%s5 + $0x10] sm:$0xff] %vm150, %v250
  %255 = vst.msk [vmem:[%s5 + $0x18] sm:$0xff] %vm150, %v251
  // Predicated region
  $region22: #{gru_encoder_forward.5} parent=0 // pred_check
    _
  $region23: #{gru_encoder_forward.5} parent=0 // pred_check_branch
    %257 = sbr.rel (0) target = $region25
  $region24: #{gru_encoder_forward.5} parent=0 // pred_region
    _
  $region25: #{gru_encoder_forward.5} parent=0 // pred_fallthru
    _
  // Predicated region
  $region26: #{gru_encoder_forward.5} parent=0 // pred_check
    _
  $region27: #{gru_encoder_forward.5} parent=0 // pred_check_branch
    %259 = sbr.rel (0) target = $region29
  $region28: #{gru_encoder_forward.5} parent=0 // pred_region
    _
  $region29: #{gru_encoder_forward.5} parent=0 // pred_fallthru
    _

// kernel: gru_encoder_forward.6
$region0: #{gru_encoder_forward.6}
  #allocation0 [shape = 'u32[]', space=smem, size = 0x4, offset = 0x4, fixed_abs, tag = 'smem constant byte address 0x4 - core index']
  #allocation1 [shape = 'u32[144,128]{1,0:T(1,128)}', space=vmem, size = 0x12000, scoped, tag = 'internal scratch']
  %s0 = inlined_call_operand.vmem [shape: f32[32,32], index: 0, kind: input, shape index: {}]
  %s1 = inlined_call_operand.vmem [shape: f32[32,192], index: 1, kind: input, shape index: {}]
  %s2 = inlined_call_operand.vmem [shape: f32[1,192], index: 2, kind: input, shape index: {}]
  %s3 = inlined_call_operand.vmem [shape: f32[32,96], index: 3, kind: output, shape index: {0}]
  %s4 = inlined_call_operand.vmem [shape: f32[32,96], index: 4, kind: output, shape index: {1}]
  %5 = xla_tuple %s3, %s4
  %s6 = sld [smem:[#allocation0]]
  $region30: #{gru_encoder_forward.6} parent=0
    _
  %s8 = ssub.s32 1, %s6
  %s9 = scalar_select 0, %s8, %s6
  // Predicated region
  $region2: #{gru_encoder_forward.6} parent=0 // pred_check
    _
  $region3: #{gru_encoder_forward.6} parent=0 // pred_check_branch
    %11 = sbr.rel (0) target = $region5
  $region4: #{gru_encoder_forward.6} parent=0 // pred_region
    _
  $region5: #{gru_encoder_forward.6} parent=0 // pred_fallthru
    _
  // Predicated region
  $region6: #{gru_encoder_forward.6} parent=0 // pred_check
    _
  $region7: #{gru_encoder_forward.6} parent=0 // pred_check_branch
    %13 = sbr.rel (0) target = $region9
  $region8: #{gru_encoder_forward.6} parent=0 // pred_region
    _
  $region9: #{gru_encoder_forward.6} parent=0 // pred_fallthru
    _
  // Predicated region
  $region10: #{gru_encoder_forward.6} parent=0 // pred_check
    _
  $region11: #{gru_encoder_forward.6} parent=0 // pred_check_branch
    %15 = sbr.rel (0) target = $region13
  $region12: #{gru_encoder_forward.6} parent=0 // pred_region
    _
  $region13: #{gru_encoder_forward.6} parent=0 // pred_fallthru
    _
  %v16 = vld [vmem:[%s0] sm:$0xff]
  %v17 = vld [vmem:[%s0 + $0x8] sm:$0xff]
  %v18 = vld [vmem:[%s0 + $0x10] sm:$0xff]
  %v19 = vld [vmem:[%s0 + $0x18] sm:$0xff]
  %v20 = vld [vmem:[%s1] sm:$0xff]
  %v21 = vld [vmem:[%s1 + $0x8] sm:$0xff]
  %v22 = vld [vmem:[%s1 + $0x10] sm:$0xff]
  %v23 = vld [vmem:[%s1 + $0x18] sm:$0xff]
  %v24 = vld [vmem:[%s1 + $0x20] sm:$0xff]
  %v25 = vld [vmem:[%s1 + $0x28] sm:$0xff]
  %v26 = vld [vmem:[%s1 + $0x30] sm:$0xff]
  %v27 = vld [vmem:[%s1 + $0x38] sm:$0xff]
  %v28 = vld [vmem:[%s2] sm:$0x3]
  %v30 = vlaneseq
  %v31 = vshrl.u32 %v30, 7
  %v32 = vsub.s32 0, %v31
  %v33 = vrot.slane %v28, %v32
  %v34 = vlaneseq
  %v35 = vshrl.u32 %v34, 7
  %v36 = vsub.s32 1, %v35
  %v37 = vrot.slane %v28, %v36
  %vm40 = vcmask 261120
  %v42 = vsel %vm40, %v16, 0
  %v45 = vsel %vm40, %v17, 0
  %v48 = vsel %vm40, %v18, 0
  %v51 = vsel %vm40, %v19, 0
  %53 = vmatprep.subr.mxu0 %v21
  %54 = vmatpush1.msra.mxu0 %v20
  %55 = vmatprep.subr.mxu0 %v23
  %56 = vmatpush1.msra.mxu0 %v22
  %57 = vmatprep.subr.mxu0 %v25
  %58 = vmatpush1.msra.mxu0 %v24
  %59 = vmatprep.subr.mxu0 %v27
  %60 = vmatpush1.msra.mxu0 %v26
  %61 = vmatprep.subr.mxu0 0.0
  %62 = vmatpush1.msra.mxu0 0.0
  %63 = vmatprep.subr.mxu0 0.0
  %64 = vmatpush1.msra.mxu0 0.0
  %65 = vmatprep.subr.mxu0 0.0
  %66 = vmatpush1.msra.mxu0 0.0
  %67 = vmatprep.subr.mxu0 0.0
  %68 = vmatpush1.msra.mxu0 0.0
  %69 = vmatprep.subr.mxu0 0.0
  %70 = vmatpush1.msra.mxu0 0.0
  %71 = vmatprep.subr.mxu0 0.0
  %72 = vmatpush1.msra.mxu0 0.0
  %73 = vmatprep.subr.mxu0 0.0
  %74 = vmatpush1.msra.mxu0 0.0
  %75 = vmatprep.subr.mxu0 0.0
  %76 = vmatpush1.msra.mxu0 0.0
  %77 = vmatprep.subr.mxu0 0.0
  %78 = vmatpush1.msra.mxu0 0.0
  %79 = vmatprep.subr.mxu0 0.0
  %80 = vmatpush1.msra.mxu0 0.0
  %81 = vmatprep.subr.mxu0 0.0
  %82 = vmatpush1.msra.mxu0 0.0
  %83 = vmatprep.subr.mxu0 0.0
  %84 = vmatpush1.msra.mxu0 0.0
  %85 = vmatprep.subr.mxu0 0.0
  %86 = vmatpush1.msra.mxu0 0.0
  %87 = vmatprep.subr.mxu0 0.0
  %88 = vmatpush1.msra.mxu0 0.0
  %89 = vmatprep.subr.mxu0 0.0
  %90 = vmatpush1.msra.mxu0 0.0
  %91 = vmatprep.subr.mxu0 0.0
  %92 = vmatpush1.msra.mxu0 0.0
  %93 = vmatprep.subr.mxu0 0.0
  %94 = vmatpush1.msra.mxu0 0.0
  %95 = vmatprep.subr.mxu0 0.0
  %96 = vmatpush1.msra.mxu0 0.0
  %97 = vmatprep.subr.mxu0 0.0
  %98 = vmatpush1.msra.mxu0 0.0
  %99 = vmatprep.subr.mxu0 0.0
  %100 = vmatpush1.msra.mxu0 0.0
  %101 = vmatprep.subr.mxu0 0.0
  %102 = vmatpush1.msra.mxu0 0.0
  %103 = vmatprep.subr.mxu0 0.0
  %104 = vmatpush1.msra.mxu0 0.0
  %105 = vmatprep.subr.mxu0 0.0
  %106 = vmatpush1.msra.mxu0 0.0
  %107 = vmatprep.subr.mxu0 0.0
  %108 = vmatpush1.msra.mxu0 0.0
  %109 = vmatprep.subr.mxu0 0.0
  %110 = vmatpush1.msra.mxu0 0.0
  %111 = vmatprep.subr.mxu0 0.0
  %112 = vmatpush1.msra.mxu0 0.0
  %113 = vmatprep.subr.mxu0 0.0
  %114 = vmatpush1.msra.mxu0 0.0
  %115 = vmatprep.subr.mxu0 0.0
  %116 = vmatpush1.msra.mxu0 0.0
  %117 = vmatprep.mubr.f32.mxu0 0.0
  %118 = vmatmul.mubr.f32.gmra.mrb[0].mxu0 %v42
  %v119 = vpop.f32.mrb[0].mxu0
  %v120 = vadd.f32 %v33, %v119
  %v121 = vpop.f32.mrb[0].mxu0
  %v122 = vadd.f32 %v37, %v121
  %123 = vmatprep.mubr.f32.mxu0 0.0
  %124 = vmatmul.mubr.f32.gmra.mrb[0].mxu0 %v45
  %v125 = vpop.f32.mrb[0].mxu0
  %v126 = vadd.f32 %v33, %v125
  %v127 = vpop.f32.mrb[0].mxu0
  %v128 = vadd.f32 %v37, %v127
  %129 = vmatprep.mubr.f32.mxu0 0.0
  %130 = vmatmul.mubr.f32.gmra.mrb[0].mxu0 %v48
  %v131 = vpop.f32.mrb[0].mxu0
  %v132 = vadd.f32 %v33, %v131
  %v133 = vpop.f32.mrb[0].mxu0
  %v134 = vadd.f32 %v37, %v133
  %135 = vmatprep.mubr.f32.mxu0 0.0
  %136 = vmatmul.mubr.f32.gmra.mrb[0].mxu0 %v51
  %v137 = vpop.f32.mrb[0].mxu0
  %v138 = vadd.f32 %v33, %v137
  %v139 = vpop.f32.mrb[0].mxu0
  %v140 = vadd.f32 %v37, %v139
  %141 = vdwg.mxu0
  %vm142 = vcmask 785408
  %143 = vst.msk [vmem:[%s3] sm:$0xff] %vm142, %v120
  %144 = vst.msk [vmem:[%s3 + $0x8] sm:$0xff] %vm142, %v126
  %145 = vst.msk [vmem:[%s3 + $0x10] sm:$0xff] %vm142, %v132
  %146 = vst.msk [vmem:[%s3 + $0x18] sm:$0xff] %vm142, %v138
  %155 = vrot.lane.b32.xlu0 %v120, 32
  %v156 = vpop.permute.xlu0 %155
  %157 = vrot.lane.b32.xlu0 %v122, 32
  %v158 = vpop.permute.xlu0 %157
  %159 = vrot.lane.b32.xlu0 %v126, 32
  %v160 = vpop.permute.xlu0 %159
  %161 = vrot.lane.b32.xlu0 %v128, 32
  %v162 = vpop.permute.xlu0 %161
  %163 = vrot.lane.b32.xlu0 %v132, 32
  %v164 = vpop.permute.xlu0 %163
  %165 = vrot.lane.b32.xlu0 %v134, 32
  %v166 = vpop.permute.xlu0 %165
  %167 = vrot.lane.b32.xlu0 %v138, 32
  %v168 = vpop.permute.xlu0 %167
  %169 = vrot.lane.b32.xlu0 %v140, 32
  %v170 = vpop.permute.xlu0 %169
  %v171 = vsel %vm40, %v156, %v158
  %v172 = vsel %vm40, %v160, %v162
  %v173 = vsel %vm40, %v164, %v166
  %v174 = vsel %vm40, %v168, %v170
  %179 = vst.msk [vmem:[%s4] sm:$0xff] %vm142, %v171
  %180 = vst.msk [vmem:[%s4 + $0x8] sm:$0xff] %vm142, %v172
  %181 = vst.msk [vmem:[%s4 + $0x10] sm:$0xff] %vm142, %v173
  %182 = vst.msk [vmem:[%s4 + $0x18] sm:$0xff] %vm142, %v174
  // Predicated region
  $region14: #{gru_encoder_forward.6} parent=0 // pred_check
    _
  $region15: #{gru_encoder_forward.6} parent=0 // pred_check_branch
    %184 = sbr.rel (0) target = $region17
  $region16: #{gru_encoder_forward.6} parent=0 // pred_region
    _
  $region17: #{gru_encoder_forward.6} parent=0 // pred_fallthru
    _
  // Predicated region
  $region18: #{gru_encoder_forward.6} parent=0 // pred_check
    _
  $region19: #{gru_encoder_forward.6} parent=0 // pred_check_branch
    %186 = sbr.rel (0) target = $region21
  $region20: #{gru_encoder_forward.6} parent=0 // pred_region
    _
  $region21: #{gru_encoder_forward.6} parent=0 // pred_fallthru
    _
  // Predicated region
  $region22: #{gru_encoder_forward.6} parent=0 // pred_check
    _
  $region23: #{gru_encoder_forward.6} parent=0 // pred_check_branch
    %188 = sbr.rel (0) target = $region25
  $region24: #{gru_encoder_forward.6} parent=0 // pred_region
    _
  $region25: #{gru_encoder_forward.6} parent=0 // pred_fallthru
    _
  // Predicated region
  $region26: #{gru_encoder_forward.6} parent=0 // pred_check
    _
  $region27: #{gru_encoder_forward.6} parent=0 // pred_check_branch
    %190 = sbr.rel (0) target = $region29
  $region28: #{gru_encoder_forward.6} parent=0 // pred_region
    _
  $region29: #{gru_encoder_forward.6} parent=0 // pred_fallthru
    _

// kernel: gru_encoder_forward.8
$region0: #{gru_encoder_forward.8}
  #allocation0 [shape = 'u32[]', space=smem, size = 0x4, offset = 0x4, fixed_abs, tag = 'smem constant byte address 0x4 - core index']
  #allocation1 [shape = 'u32[144,128]{1,0:T(1,128)}', space=vmem, size = 0x12000, scoped, tag = 'internal scratch']
  %s0 = inlined_call_operand.vmem [shape: f32[32,64], index: 0, kind: input, shape index: {}]
  %s1 = inlined_call_operand.vmem [shape: f32[64,192], index: 1, kind: input, shape index: {}]
  %s2 = inlined_call_operand.vmem [shape: f32[1,192], index: 2, kind: input, shape index: {}]
  %s3 = inlined_call_operand.vmem [shape: f32[32,96], index: 3, kind: output, shape index: {0}]
  %s4 = inlined_call_operand.vmem [shape: f32[32,96], index: 4, kind: output, shape index: {1}]
  %5 = xla_tuple %s3, %s4
  %s6 = sld [smem:[#allocation0]]
  $region30: #{gru_encoder_forward.8} parent=0
    _
  %s8 = ssub.s32 1, %s6
  %s9 = scalar_select 0, %s8, %s6
  // Predicated region
  $region2: #{gru_encoder_forward.8} parent=0 // pred_check
    _
  $region3: #{gru_encoder_forward.8} parent=0 // pred_check_branch
    %11 = sbr.rel (0) target = $region5
  $region4: #{gru_encoder_forward.8} parent=0 // pred_region
    _
  $region5: #{gru_encoder_forward.8} parent=0 // pred_fallthru
    _
  // Predicated region
  $region6: #{gru_encoder_forward.8} parent=0 // pred_check
    _
  $region7: #{gru_encoder_forward.8} parent=0 // pred_check_branch
    %13 = sbr.rel (0) target = $region9
  $region8: #{gru_encoder_forward.8} parent=0 // pred_region
    _
  $region9: #{gru_encoder_forward.8} parent=0 // pred_fallthru
    _
  // Predicated region
  $region10: #{gru_encoder_forward.8} parent=0 // pred_check
    _
  $region11: #{gru_encoder_forward.8} parent=0 // pred_check_branch
    %15 = sbr.rel (0) target = $region13
  $region12: #{gru_encoder_forward.8} parent=0 // pred_region
    _
  $region13: #{gru_encoder_forward.8} parent=0 // pred_fallthru
    _
  %v16 = vld [vmem:[%s0] sm:$0xff]
  %v17 = vld [vmem:[%s0 + $0x8] sm:$0xff]
  %v18 = vld [vmem:[%s0 + $0x10] sm:$0xff]
  %v19 = vld [vmem:[%s0 + $0x18] sm:$0xff]
  %v20 = vld [vmem:[%s1] sm:$0xff]
  %v21 = vld [vmem:[%s1 + $0x8] sm:$0xff]
  %v22 = vld [vmem:[%s1 + $0x10] sm:$0xff]
  %v23 = vld [vmem:[%s1 + $0x18] sm:$0xff]
  %v24 = vld [vmem:[%s1 + $0x20] sm:$0xff]
  %v25 = vld [vmem:[%s1 + $0x28] sm:$0xff]
  %v26 = vld [vmem:[%s1 + $0x30] sm:$0xff]
  %v27 = vld [vmem:[%s1 + $0x38] sm:$0xff]
  %v28 = vld [vmem:[%s1 + $0x40] sm:$0xff]
  %v29 = vld [vmem:[%s1 + $0x48] sm:$0xff]
  %v30 = vld [vmem:[%s1 + $0x50] sm:$0xff]
  %v31 = vld [vmem:[%s1 + $0x58] sm:$0xff]
  %v32 = vld [vmem:[%s1 + $0x60] sm:$0xff]
  %v33 = vld [vmem:[%s1 + $0x68] sm:$0xff]
  %v34 = vld [vmem:[%s1 + $0x70] sm:$0xff]
  %v35 = vld [vmem:[%s1 + $0x78] sm:$0xff]
  %v36 = vld [vmem:[%s2] sm:$0x3]
  %v38 = vlaneseq
  %v39 = vshrl.u32 %v38, 7
  %v40 = vsub.s32 0, %v39
  %v41 = vrot.slane %v36, %v40
  %v42 = vlaneseq
  %v43 = vshrl.u32 %v42, 7
  %v44 = vsub.s32 1, %v43
  %v45 = vrot.slane %v36, %v44
  %vm48 = vcmask 523264
  %v50 = vsel %vm48, %v16, 0
  %v53 = vsel %vm48, %v17, 0
  %v56 = vsel %vm48, %v18, 0
  %v59 = vsel %vm48, %v19, 0
  %61 = vmatprep.subr.mxu0 %v21
  %62 = vmatpush1.msra.mxu0 %v20
  %63 = vmatprep.subr.mxu0 %v23
  %64 = vmatpush1.msra.mxu0 %v22
  %65 = vmatprep.subr.mxu0 %v25
  %66 = vmatpush1.msra.mxu0 %v24
  %67 = vmatprep.subr.mxu0 %v27
  %68 = vmatpush1.msra.mxu0 %v26
  %69 = vmatprep.subr.mxu0 %v29
  %70 = vmatpush1.msra.mxu0 %v28
  %71 = vmatprep.subr.mxu0 %v31
  %72 = vmatpush1.msra.mxu0 %v30
  %73 = vmatprep.subr.mxu0 %v33
  %74 = vmatpush1.msra.mxu0 %v32
  %75 = vmatprep.subr.mxu0 %v35
  %76 = vmatpush1.msra.mxu0 %v34
  %77 = vmatprep.subr.mxu0 0.0
  %78 = vmatpush1.msra.mxu0 0.0
  %79 = vmatprep.subr.mxu0 0.0
  %80 = vmatpush1.msra.mxu0 0.0
  %81 = vmatprep.subr.mxu0 0.0
  %82 = vmatpush1.msra.mxu0 0.0
  %83 = vmatprep.subr.mxu0 0.0
  %84 = vmatpush1.msra.mxu0 0.0
  %85 = vmatprep.subr.mxu0 0.0
  %86 = vmatpush1.msra.mxu0 0.0
  %87 = vmatprep.subr.mxu0 0.0
  %88 = vmatpush1.msra.mxu0 0.0
  %89 = vmatprep.subr.mxu0 0.0
  %90 = vmatpush1.msra.mxu0 0.0
  %91 = vmatprep.subr.mxu0 0.0
  %92 = vmatpush1.msra.mxu0 0.0
  %93 = vmatprep.subr.mxu0 0.0
  %94 = vmatpush1.msra.mxu0 0.0
  %95 = vmatprep.subr.mxu0 0.0
  %96 = vmatpush1.msra.mxu0 0.0
  %97 = vmatprep.subr.mxu0 0.0
  %98 = vmatpush1.msra.mxu0 0.0
  %99 = vmatprep.subr.mxu0 0.0
  %100 = vmatpush1.msra.mxu0 0.0
  %101 = vmatprep.subr.mxu0 0.0
  %102 = vmatpush1.msra.mxu0 0.0
  %103 = vmatprep.subr.mxu0 0.0
  %104 = vmatpush1.msra.mxu0 0.0
  %105 = vmatprep.subr.mxu0 0.0
  %106 = vmatpush1.msra.mxu0 0.0
  %107 = vmatprep.subr.mxu0 0.0
  %108 = vmatpush1.msra.mxu0 0.0
  %109 = vmatprep.subr.mxu0 0.0
  %110 = vmatpush1.msra.mxu0 0.0
  %111 = vmatprep.subr.mxu0 0.0
  %112 = vmatpush1.msra.mxu0 0.0
  %113 = vmatprep.subr.mxu0 0.0
  %114 = vmatpush1.msra.mxu0 0.0
  %115 = vmatprep.subr.mxu0 0.0
  %116 = vmatpush1.msra.mxu0 0.0
  %117 = vmatprep.subr.mxu0 0.0
  %118 = vmatpush1.msra.mxu0 0.0
  %119 = vmatprep.subr.mxu0 0.0
  %120 = vmatpush1.msra.mxu0 0.0
  %121 = vmatprep.subr.mxu0 0.0
  %122 = vmatpush1.msra.mxu0 0.0
  %123 = vmatprep.subr.mxu0 0.0
  %124 = vmatpush1.msra.mxu0 0.0
  %125 = vmatprep.mubr.f32.mxu0 0.0
  %126 = vmatmul.mubr.f32.gmra.mrb[0].mxu0 %v50
  %v127 = vpop.f32.mrb[0].mxu0
  %v128 = vadd.f32 %v41, %v127
  %v129 = vpop.f32.mrb[0].mxu0
  %v130 = vadd.f32 %v45, %v129
  %131 = vmatprep.mubr.f32.mxu0 0.0
  %132 = vmatmul.mubr.f32.gmra.mrb[0].mxu0 %v53
  %v133 = vpop.f32.mrb[0].mxu0
  %v134 = vadd.f32 %v41, %v133
  %v135 = vpop.f32.mrb[0].mxu0
  %v136 = vadd.f32 %v45, %v135
  %137 = vmatprep.mubr.f32.mxu0 0.0
  %138 = vmatmul.mubr.f32.gmra.mrb[0].mxu0 %v56
  %v139 = vpop.f32.mrb[0].mxu0
  %v140 = vadd.f32 %v41, %v139
  %v141 = vpop.f32.mrb[0].mxu0
  %v142 = vadd.f32 %v45, %v141
  %143 = vmatprep.mubr.f32.mxu0 0.0
  %144 = vmatmul.mubr.f32.gmra.mrb[0].mxu0 %v59
  %v145 = vpop.f32.mrb[0].mxu0
  %v146 = vadd.f32 %v41, %v145
  %v147 = vpop.f32.mrb[0].mxu0
  %v148 = vadd.f32 %v45, %v147
  %149 = vdwg.mxu0
  %vm150 = vcmask 785408
  %151 = vst.msk [vmem:[%s3] sm:$0xff] %vm150, %v128
  %152 = vst.msk [vmem:[%s3 + $0x8] sm:$0xff] %vm150, %v134
  %153 = vst.msk [vmem:[%s3 + $0x10] sm:$0xff] %vm150, %v140
  %154 = vst.msk [vmem:[%s3 + $0x18] sm:$0xff] %vm150, %v146
  %163 = vrot.lane.b32.xlu0 %v128, 32
  %v164 = vpop.permute.xlu0 %163
  %165 = vrot.lane.b32.xlu0 %v130, 32
  %v166 = vpop.permute.xlu0 %165
  %167 = vrot.lane.b32.xlu0 %v134, 32
  %v168 = vpop.permute.xlu0 %167
  %169 = vrot.lane.b32.xlu0 %v136, 32
  %v170 = vpop.permute.xlu0 %169
  %171 = vrot.lane.b32.xlu0 %v140, 32
  %v172 = vpop.permute.xlu0 %171
  %173 = vrot.lane.b32.xlu0 %v142, 32
  %v174 = vpop.permute.xlu0 %173
  %175 = vrot.lane.b32.xlu0 %v146, 32
  %v176 = vpop.permute.xlu0 %175
  %177 = vrot.lane.b32.xlu0 %v148, 32
  %v178 = vpop.permute.xlu0 %177
  %vm179 = vcmask 261120
  %v180 = vsel %vm179, %v164, %v166
  %v181 = vsel %vm179, %v168, %v170
  %v182 = vsel %vm179, %v172, %v174
  %v183 = vsel %vm179, %v176, %v178
  %188 = vst.msk [vmem:[%s4] sm:$0xff] %vm150, %v180
  %189 = vst.msk [vmem:[%s4 + $0x8] sm:$0xff] %vm150, %v181
  %190 = vst.msk [vmem:[%s4 + $0x10] sm:$0xff] %vm150, %v182
  %191 = vst.msk [vmem:[%s4 + $0x18] sm:$0xff] %vm150, %v183
  // Predicated region
  $region14: #{gru_encoder_forward.8} parent=0 // pred_check
    _
  $region15: #{gru_encoder_forward.8} parent=0 // pred_check_branch
    %193 = sbr.rel (0) target = $region17
  $region16: #{gru_encoder_forward.8} parent=0 // pred_region
    _
  $region17: #{gru_encoder_forward.8} parent=0 // pred_fallthru
    _
  // Predicated region
  $region18: #{gru_encoder_forward.8} parent=0 // pred_check
    _
  $region19: #{gru_encoder_forward.8} parent=0 // pred_check_branch
    %195 = sbr.rel (0) target = $region21
  $region20: #{gru_encoder_forward.8} parent=0 // pred_region
    _
  $region21: #{gru_encoder_forward.8} parent=0 // pred_fallthru
    _
  // Predicated region
  $region22: #{gru_encoder_forward.8} parent=0 // pred_check
    _
  $region23: #{gru_encoder_forward.8} parent=0 // pred_check_branch
    %197 = sbr.rel (0) target = $region25
  $region24: #{gru_encoder_forward.8} parent=0 // pred_region
    _
  $region25: #{gru_encoder_forward.8} parent=0 // pred_fallthru
    _
  // Predicated region
  $region26: #{gru_encoder_forward.8} parent=0 // pred_check
    _
  $region27: #{gru_encoder_forward.8} parent=0 // pred_check_branch
    %199 = sbr.rel (0) target = $region29
  $region28: #{gru_encoder_forward.8} parent=0 // pred_region
    _
  $region29: #{gru_encoder_forward.8} parent=0 // pred_fallthru
    _

// kernel: gru_encoder_forward.7
$region0: #{gru_encoder_forward.7}
  #allocation0 [shape = 'u32[]', space=smem, size = 0x4, offset = 0x4, fixed_abs, tag = 'smem constant byte address 0x4 - core index']
  #allocation1 [shape = 'u32[144,128]{1,0:T(1,128)}', space=vmem, size = 0x12000, scoped, tag = 'internal scratch']
  #allocation2 [shape = 'f32[2,32]{1,0:T(2,128)}', space=vmem, size = 0x400, scoped, tag = 'scratch operand']
  #allocation3 [shape = 'f32[2,32]{1,0:T(2,128)}', space=vmem, size = 0x400, scoped, tag = 'scratch operand']
  %s0 = inlined_call_operand.vmem [shape: f32[2,16,96], index: 0, kind: input, shape index: {}]
  %s1 = inlined_call_operand.vmem [shape: f32[2,16,96], index: 1, kind: input, shape index: {}]
  %s2 = inlined_call_operand.vmem [shape: f32[32,96], index: 2, kind: input, shape index: {}]
  %s3 = inlined_call_operand.vmem [shape: f32[1,96], index: 3, kind: input, shape index: {}]
  %s4 = inlined_call_operand.vmem [shape: f32[32,96], index: 4, kind: input, shape index: {}]
  %s5 = inlined_call_operand.vmem [shape: f32[1,96], index: 5, kind: input, shape index: {}]
  %s6 = inlined_call_operand.vmem [shape: f32[2,16,32], index: 6, kind: output, shape index: {0}]
  %s7 = inlined_call_operand.vmem [shape: f32[2,16,32], index: 7, kind: output, shape index: {1}]
  %8 = xla_tuple %s6, %s7
  %s9 = sld [smem:[#allocation0]]
  $region213: #{gru_encoder_forward.7} parent=0
    _
  %s11 = ssub.s32 1, %s9
  %s12 = scalar_select 0, %s11, %s9
  $region1: #{gru_encoder_forward.7} parent=0
    #allocation4 [shape = 'u8[16384]{0}', space=vmem, size = 0x4000, scoped, tag = 'input window, operand 0']
    #allocation5 [shape = 'u8[16384]{0}', space=vmem, size = 0x4000, scoped, tag = 'input window, operand 1']
    #allocation6 [shape = 'u8[16384]{0}', space=vmem, size = 0x4000, scoped, tag = 'output window, operand 0']
    #allocation7 [shape = 'u8[16384]{0}', space=vmem, size = 0x4000, scoped, tag = 'output window, operand 1']
    loop: start=0, step=1, limit=4
    $region2: #{gru_encoder_forward.7} parent=1 // loop_pre_header
      _
    $region3: #{gru_encoder_forward.7} parent=1 // loop_header
      %s14 = sphi 0, %s18
      %p15 = scmp.ge.s32.totalorder %s14, 4
      %s24 = sphi 0, %s26
      %s27 = sphi 0, %s24
      %s28 = sphi 0, %s27
      %s44 = sphi 0, %s28
      %s52 = sphi 0, %s54
      %s55 = sphi 0, %s52
      %s56 = sphi 0, %s55
      %s72 = sphi 0, %s56
      %s76 = sphi 0, %s76
      %s78 = sphi 0, %s76
      %s79 = sphi 0, %s78
      %s93 = sphi 0, %s79
      %s97 = sphi 0, %s97
      %s99 = sphi 0, %s97
      %s100 = sphi 0, %s99
      %s114 = sphi 0, %s100
      %s118 = sphi 0, %s118
      %s120 = sphi 0, %s118
      %s121 = sphi 0, %s120
      %s135 = sphi 0, %s121
      %s139 = sphi 0, %s139
      %s141 = sphi 0, %s139
      %s142 = sphi 0, %s141
      %s156 = sphi 0, %s142
      %s162 = sphi 0, %s164
      %s165 = sphi 0, %s162
      %s166 = sphi 0, %s165
      %s182 = sphi 0, %s166
      %s190 = sphi 0, %s192
      %s193 = sphi 0, %s190
      %s194 = sphi 0, %s193
      %s210 = sphi 0, %s194
    $region4: #{gru_encoder_forward.7} parent=1 // loop_header_branch
      %17 = sbr.rel (%p15) target = $region8
    $region5: #{gru_encoder_forward.7} parent=1 // loop_body
      %s19 = ssub.s32 %s14, 1
      %s20 = ssub.s32 %s14, 2
      %s21 = sadd.s32 %s14, 1
      %s22 = ssub.s32 %s14, %s21
      %p23 = scmp.eq.s32.totalorder %s22, 0
      %s25 = sadd.s32 %s24, 1
      %s26 = scalar_select %p23, %s24, %s25
      %p29 = pneg %p23
      %p30 = scmp.eq.s32.totalorder %s14, 1
      %p31 = por %p29, %p30
      %p32 = scmp.ne.s32.totalorder %s24, %s27
      %p33 = scmp.eq.s32.totalorder %s14, 0
      %p34 = por %p32, %p33
      %p35 = scmp.ne.s32.totalorder %s24, %s27
      %p36 = scmp.eq.s32.totalorder %s19, 1
      %p37 = por %p35, %p36
      %p38 = scmp.ne.s32.totalorder %s27, %s28
      %p39 = scmp.eq.s32.totalorder %s19, 0
      %p40 = por %p38, %p39
      %p41 = scmp.ne.s32.totalorder %s27, %s28
      %p42 = scmp.eq.s32.totalorder %s20, 1
      %p43 = por %p41, %p42
      %p45 = scmp.ne.s32.totalorder %s28, %s44
      %p46 = scmp.eq.s32.totalorder %s20, 0
      %p47 = por %p45, %p46
      %s48 = ssub.s32 1, %s14
      %s49 = ssub.s32 1, %s21
      %s50 = ssub.s32 %s48, %s49
      %p51 = scmp.eq.s32.totalorder %s50, 0
      %s53 = sadd.s32 %s52, 1
      %s54 = scalar_select %p51, %s52, %s53
      %p57 = pneg %p51
      %p58 = scmp.eq.s32.totalorder %s14, 1
      %p59 = por %p57, %p58
      %p60 = scmp.ne.s32.totalorder %s52, %s55
      %p61 = scmp.eq.s32.totalorder %s14, 0
      %p62 = por %p60, %p61
      %p63 = scmp.ne.s32.totalorder %s52, %s55
      %p64 = scmp.eq.s32.totalorder %s19, 1
      %p65 = por %p63, %p64
      %p66 = scmp.ne.s32.totalorder %s55, %s56
      %p67 = scmp.eq.s32.totalorder %s19, 0
      %p68 = por %p66, %p67
      %p69 = scmp.ne.s32.totalorder %s55, %s56
      %p70 = scmp.eq.s32.totalorder %s20, 1
      %p71 = por %p69, %p70
      %p73 = scmp.ne.s32.totalorder %s56, %s72
      %p74 = scmp.eq.s32.totalorder %s20, 0
      %p75 = por %p73, %p74
      %s77 = sadd.s32 %s76, 1
      %p80 = scmp.eq.s32.totalorder %s14, 1
      %p81 = scmp.ne.s32.totalorder %s76, %s78
      %p82 = scmp.eq.s32.totalorder %s14, 0
      %p83 = por %p81, %p82
      %p84 = scmp.ne.s32.totalorder %s76, %s78
      %p85 = scmp.eq.s32.totalorder %s19, 1
      %p86 = por %p84, %p85
      %p87 = scmp.ne.s32.totalorder %s78, %s79
      %p88 = scmp.eq.s32.totalorder %s19, 0
      %p89 = por %p87, %p88
      %p90 = scmp.ne.s32.totalorder %s78, %s79
      %p91 = scmp.eq.s32.totalorder %s20, 1
      %p92 = por %p90, %p91
      %p94 = scmp.ne.s32.totalorder %s79, %s93
      %p95 = scmp.eq.s32.totalorder %s20, 0
      %p96 = por %p94, %p95
      %s98 = sadd.s32 %s97, 1
      %p101 = scmp.eq.s32.totalorder %s14, 1
      %p102 = scmp.ne.s32.totalorder %s97, %s99
      %p103 = scmp.eq.s32.totalorder %s14, 0
      %p104 = por %p102, %p103
      %p105 = scmp.ne.s32.totalorder %s97, %s99
      %p106 = scmp.eq.s32.totalorder %s19, 1
      %p107 = por %p105, %p106
      %p108 = scmp.ne.s32.totalorder %s99, %s100
      %p109 = scmp.eq.s32.totalorder %s19, 0
      %p110 = por %p108, %p109
      %p111 = scmp.ne.s32.totalorder %s99, %s100
      %p112 = scmp.eq.s32.totalorder %s20, 1
      %p113 = por %p111, %p112
      %p115 = scmp.ne.s32.totalorder %s100, %s114
      %p116 = scmp.eq.s32.totalorder %s20, 0
      %p117 = por %p115, %p116
      %s119 = sadd.s32 %s118, 1
      %p122 = scmp.eq.s32.totalorder %s14, 1
      %p123 = scmp.ne.s32.totalorder %s118, %s120
      %p124 = scmp.eq.s32.totalorder %s14, 0
      %p125 = por %p123, %p124
      %p126 = scmp.ne.s32.totalorder %s118, %s120
      %p127 = scmp.eq.s32.totalorder %s19, 1
      %p128 = por %p126, %p127
      %p129 = scmp.ne.s32.totalorder %s120, %s121
      %p130 = scmp.eq.s32.totalorder %s19, 0
      %p131 = por %p129, %p130
      %p132 = scmp.ne.s32.totalorder %s120, %s121
      %p133 = scmp.eq.s32.totalorder %s20, 1
      %p134 = por %p132, %p133
      %p136 = scmp.ne.s32.totalorder %s121, %s135
      %p137 = scmp.eq.s32.totalorder %s20, 0
      %p138 = por %p136, %p137
      %s140 = sadd.s32 %s139, 1
      %p143 = scmp.eq.s32.totalorder %s14, 1
      %p144 = scmp.ne.s32.totalorder %s139, %s141
      %p145 = scmp.eq.s32.totalorder %s14, 0
      %p146 = por %p144, %p145
      %p147 = scmp.ne.s32.totalorder %s139, %s141
      %p148 = scmp.eq.s32.totalorder %s19, 1
      %p149 = por %p147, %p148
      %p150 = scmp.ne.s32.totalorder %s141, %s142
      %p151 = scmp.eq.s32.totalorder %s19, 0
      %p152 = por %p150, %p151
      %p153 = scmp.ne.s32.totalorder %s141, %s142
      %p154 = scmp.eq.s32.totalorder %s20, 1
      %p155 = por %p153, %p154
      %p157 = scmp.ne.s32.totalorder %s142, %s156
      %p158 = scmp.eq.s32.totalorder %s20, 0
      %p159 = por %p157, %p158
      %s160 = ssub.s32 %s14, %s21
      %p161 = scmp.eq.s32.totalorder %s160, 0
      %s163 = sadd.s32 %s162, 1
      %s164 = scalar_select %p161, %s162, %s163
      %p167 = pneg %p161
      %p168 = scmp.eq.s32.totalorder %s14, 1
      %p169 = por %p167, %p168
      %p170 = scmp.ne.s32.totalorder %s162, %s165
      %p171 = scmp.eq.s32.totalorder %s14, 0
      %p172 = por %p170, %p171
      %p173 = scmp.ne.s32.totalorder %s162, %s165
      %p174 = scmp.eq.s32.totalorder %s19, 1
      %p175 = por %p173, %p174
      %p176 = scmp.ne.s32.totalorder %s165, %s166
      %p177 = scmp.eq.s32.totalorder %s19, 0
      %p178 = por %p176, %p177
      %p179 = scmp.ne.s32.totalorder %s165, %s166
      %p180 = scmp.eq.s32.totalorder %s20, 1
      %p181 = por %p179, %p180
      %p183 = scmp.ne.s32.totalorder %s166, %s182
      %p184 = scmp.eq.s32.totalorder %s20, 0
      %p185 = por %p183, %p184
      %s186 = ssub.s32 1, %s14
      %s187 = ssub.s32 1, %s21
      %s188 = ssub.s32 %s186, %s187
      %p189 = scmp.eq.s32.totalorder %s188, 0
      %s191 = sadd.s32 %s190, 1
      %s192 = scalar_select %p189, %s190, %s191
      %p195 = pneg %p189
      %p196 = scmp.eq.s32.totalorder %s14, 1
      %p197 = por %p195, %p196
      %p198 = scmp.ne.s32.totalorder %s190, %s193
      %p199 = scmp.eq.s32.totalorder %s14, 0
      %p200 = por %p198, %p199
      %p201 = scmp.ne.s32.totalorder %s190, %s193
      %p202 = scmp.eq.s32.totalorder %s19, 1
      %p203 = por %p201, %p202
      %p204 = scmp.ne.s32.totalorder %s193, %s194
      %p205 = scmp.eq.s32.totalorder %s19, 0
      %p206 = por %p204, %p205
      %p207 = scmp.ne.s32.totalorder %s193, %s194
      %p208 = scmp.eq.s32.totalorder %s20, 1
      %p209 = por %p207, %p208
      %p211 = scmp.ne.s32.totalorder %s194, %s210
      %p212 = scmp.eq.s32.totalorder %s20, 0
      %p213 = por %p211, %p212
      %p214 = scmp.le.s32.totalorder 1, %s14
      %p215 = scmp.lt.s32.totalorder %s14, 3
      %p216 = pnand %p214, %p215
      %p217 = pneg %p216
      // Predicated region
      $region9: #{gru_encoder_forward.7} parent=5 // pred_check
        _
      $region10: #{gru_encoder_forward.7} parent=5 // pred_check_branch
        %219 = sbr.rel (%p216) target = $region12
      $region11: #{gru_encoder_forward.7} parent=5 // pred_region
        %s220 = ssub.s32 %s14, 1
        // Predicated region
        $region13: #{gru_encoder_forward.7} parent=11 // pred_check
          %p221 = pneg %p89
        $region14: #{gru_encoder_forward.7} parent=11 // pred_check_branch
          %223 = sbr.rel (%p221) target = $region16
        $region15: #{gru_encoder_forward.7} parent=11 // pred_region
          _
        $region16: #{gru_encoder_forward.7} parent=11 // pred_fallthru
          _
        // Predicated region
        $region17: #{gru_encoder_forward.7} parent=11 // pred_check
          %p224 = pneg %p110
        $region18: #{gru_encoder_forward.7} parent=11 // pred_check_branch
          %226 = sbr.rel (%p224) target = $region20
        $region19: #{gru_encoder_forward.7} parent=11 // pred_region
          _
        $region20: #{gru_encoder_forward.7} parent=11 // pred_fallthru
          _
        // Predicated region
        $region21: #{gru_encoder_forward.7} parent=11 // pred_check
          %p227 = pneg %p131
        $region22: #{gru_encoder_forward.7} parent=11 // pred_check_branch
          %229 = sbr.rel (%p227) target = $region24
        $region23: #{gru_encoder_forward.7} parent=11 // pred_region
          _
        $region24: #{gru_encoder_forward.7} parent=11 // pred_fallthru
          _
        // Predicated region
        $region25: #{gru_encoder_forward.7} parent=11 // pred_check
          %p230 = pneg %p152
        $region26: #{gru_encoder_forward.7} parent=11 // pred_check_branch
          %232 = sbr.rel (%p230) target = $region28
        $region27: #{gru_encoder_forward.7} parent=11 // pred_region
          _
        $region28: #{gru_encoder_forward.7} parent=11 // pred_fallthru
          _
      $region12: #{gru_encoder_forward.7} parent=5 // pred_fallthru
        _
      %p233 = scmp.lt.s32.totalorder %s14, 2
      // Predicated region
      $region29: #{gru_encoder_forward.7} parent=5 // pred_check
        %p234 = pneg %p233
      $region30: #{gru_encoder_forward.7} parent=5 // pred_check_branch
        %236 = sbr.rel (%p234) target = $region32
      $region31: #{gru_encoder_forward.7} parent=5 // pred_region
        // Predicated region
        $region33: #{gru_encoder_forward.7} parent=31 // pred_check
          %p237 = pneg %p34
        $region34: #{gru_encoder_forward.7} parent=31 // pred_check_branch
          %239 = sbr.rel (%p237) target = $region36
        $region35: #{gru_encoder_forward.7} parent=31 // pred_region
          %s240 = sand.u32 %s24, 1
          %s241 = sand.u32 %s24, 1
          %s242 = smul.addr %s241, 16
          %s243 = scalar_lea.vmem [#allocation4], %s242
          %s244 = smul.addr %s14, 8
          %s245 = scalar_lea.vmem %s0, %s244
          // Predicated region
          $region37: #{gru_encoder_forward.7} parent=35 // pred_check
            _
          $region38: #{gru_encoder_forward.7} parent=35 // pred_check_branch
            %247 = sbr.rel (0) target = $region40
          $region39: #{gru_encoder_forward.7} parent=35 // pred_region
            // Predicated region
            $region41: #{gru_encoder_forward.7} parent=39 // pred_check
              _
            $region42: #{gru_encoder_forward.7} parent=39 // pred_check_branch
              %249 = sbr.rel (0) target = $region44
            $region43: #{gru_encoder_forward.7} parent=39 // pred_region
              // Predicated region
              $region56: #{gru_encoder_forward.7} parent=43 // pred_check
                _
              $region57: #{gru_encoder_forward.7} parent=43 // pred_check_branch
                %266 = sbr.rel (0) target = $region59
              $region58: #{gru_encoder_forward.7} parent=43 // pred_region
                loop: start=0, step=1, limit=1
                $region60: #{gru_encoder_forward.7} parent=58 // loop_pre_header
                  _
                $region61: #{gru_encoder_forward.7} parent=58 // loop_header
                  %s268 = sphi 0, %s272
                  %p269 = scmp.ge.s32.totalorder %s268, 1
                  %s273 = sphi %s245, %s245
                  %s274 = sphi %s243, %s243
                $region62: #{gru_encoder_forward.7} parent=58 // loop_header_branch
                  %271 = sbr.rel (%p269) target = $region66
                $region63: #{gru_encoder_forward.7} parent=58 // loop_body
                  %v275 = vld [vmem:[%s273] sm:$0xff]
                  %276 = vst [vmem:[%s274] sm:$0xff] %v275
                  %v277 = vld [vmem:[%s273 + $0x10] sm:$0xff]
                  %278 = vst [vmem:[%s274 + $0x8] sm:$0xff] %v277
                $region64: #{gru_encoder_forward.7} parent=58 // loop_footer
                  %s272 = sadd.s32 1, %s268
                $region65: #{gru_encoder_forward.7} parent=58 // loop_footer_branch
                  %267 = sbr.rel target = $region61
                $region66: #{gru_encoder_forward.7} parent=58 // loop_exit
                  _
              $region59: #{gru_encoder_forward.7} parent=43 // pred_fallthru
                _
              // Predicated region
              $region67: #{gru_encoder_forward.7} parent=43 // pred_check
                _
              $region68: #{gru_encoder_forward.7} parent=43 // pred_check_branch
                %280 = sbr.rel target = $region70
              $region69: #{gru_encoder_forward.7} parent=43 // pred_region
                _
              $region70: #{gru_encoder_forward.7} parent=43 // pred_fallthru
                _
            $region44: #{gru_encoder_forward.7} parent=39 // pred_fallthru
              _
            // Predicated region
            $region45: #{gru_encoder_forward.7} parent=39 // pred_check
              _
            $region46: #{gru_encoder_forward.7} parent=39 // pred_check_branch
              %251 = sbr.rel target = $region48
            $region47: #{gru_encoder_forward.7} parent=39 // pred_region
              loop: start=0, step=1, limit=1
              $region49: #{gru_encoder_forward.7} parent=47 // loop_pre_header
                _
              $region50: #{gru_encoder_forward.7} parent=47 // loop_header
                %s254 = sphi 0, %s258
                %p255 = scmp.ge.s32.totalorder %s254, 1
                %s259 = sphi %s245, %s245
                %s260 = sphi %s243, %s243
              $region51: #{gru_encoder_forward.7} parent=47 // loop_header_branch
                %257 = sbr.rel (%p255) target = $region55
              $region52: #{gru_encoder_forward.7} parent=47 // loop_body
                %v261 = vld [vmem:[%s259] sm:$0xff]
                %262 = vst [vmem:[%s260] sm:$0xff] %v261
                %v263 = vld [vmem:[%s259 + $0x10] sm:$0xff]
                %264 = vst [vmem:[%s260 + $0x8] sm:$0xff] %v263
              $region53: #{gru_encoder_forward.7} parent=47 // loop_footer
                %s258 = sadd.s32 1, %s254
              $region54: #{gru_encoder_forward.7} parent=47 // loop_footer_branch
                %253 = sbr.rel target = $region50
              $region55: #{gru_encoder_forward.7} parent=47 // loop_exit
                _
            $region48: #{gru_encoder_forward.7} parent=39 // pred_fallthru
              _
          $region40: #{gru_encoder_forward.7} parent=35 // pred_fallthru
            _
          %281 = vnop
        $region36: #{gru_encoder_forward.7} parent=31 // pred_fallthru
          _
        // Predicated region
        $region71: #{gru_encoder_forward.7} parent=31 // pred_check
          %p282 = pneg %p62
        $region72: #{gru_encoder_forward.7} parent=31 // pred_check_branch
          %284 = sbr.rel (%p282) target = $region74
        $region73: #{gru_encoder_forward.7} parent=31 // pred_region
          %s285 = sand.u32 %s52, 1
          %s286 = sand.u32 %s52, 1
          %s287 = smul.addr %s286, 16
          %s288 = scalar_lea.vmem [#allocation5], %s287
          %s289 = ssub.s32 1, %s14
          %s290 = smul.addr %s289, 8
          %s291 = scalar_lea.vmem %s1, %s290
          // Predicated region
          $region75: #{gru_encoder_forward.7} parent=73 // pred_check
            _
          $region76: #{gru_encoder_forward.7} parent=73 // pred_check_branch
            %293 = sbr.rel (0) target = $region78
          $region77: #{gru_encoder_forward.7} parent=73 // pred_region
            // Predicated region
            $region79: #{gru_encoder_forward.7} parent=77 // pred_check
              _
            $region80: #{gru_encoder_forward.7} parent=77 // pred_check_branch
              %295 = sbr.rel (0) target = $region82
            $region81: #{gru_encoder_forward.7} parent=77 // pred_region
              // Predicated region
              $region94: #{gru_encoder_forward.7} parent=81 // pred_check
                _
              $region95: #{gru_encoder_forward.7} parent=81 // pred_check_branch
                %312 = sbr.rel (0) target = $region97
              $region96: #{gru_encoder_forward.7} parent=81 // pred_region
                loop: start=0, step=1, limit=1
                $region98: #{gru_encoder_forward.7} parent=96 // loop_pre_header
                  _
                $region99: #{gru_encoder_forward.7} parent=96 // loop_header
                  %s314 = sphi 0, %s318
                  %p315 = scmp.ge.s32.totalorder %s314, 1
                  %s319 = sphi %s291, %s291
                  %s320 = sphi %s288, %s288
                $region100: #{gru_encoder_forward.7} parent=96 // loop_header_branch
                  %317 = sbr.rel (%p315) target = $region104
                $region101: #{gru_encoder_forward.7} parent=96 // loop_body
                  %v321 = vld [vmem:[%s319] sm:$0xff]
                  %322 = vst [vmem:[%s320] sm:$0xff] %v321
                  %v323 = vld [vmem:[%s319 + $0x10] sm:$0xff]
                  %324 = vst [vmem:[%s320 + $0x8] sm:$0xff] %v323
                $region102: #{gru_encoder_forward.7} parent=96 // loop_footer
                  %s318 = sadd.s32 1, %s314
                $region103: #{gru_encoder_forward.7} parent=96 // loop_footer_branch
                  %313 = sbr.rel target = $region99
                $region104: #{gru_encoder_forward.7} parent=96 // loop_exit
                  _
              $region97: #{gru_encoder_forward.7} parent=81 // pred_fallthru
                _
              // Predicated region
              $region105: #{gru_encoder_forward.7} parent=81 // pred_check
                _
              $region106: #{gru_encoder_forward.7} parent=81 // pred_check_branch
                %326 = sbr.rel target = $region108
              $region107: #{gru_encoder_forward.7} parent=81 // pred_region
                _
              $region108: #{gru_encoder_forward.7} parent=81 // pred_fallthru
                _
            $region82: #{gru_encoder_forward.7} parent=77 // pred_fallthru
              _
            // Predicated region
            $region83: #{gru_encoder_forward.7} parent=77 // pred_check
              _
            $region84: #{gru_encoder_forward.7} parent=77 // pred_check_branch
              %297 = sbr.rel target = $region86
            $region85: #{gru_encoder_forward.7} parent=77 // pred_region
              loop: start=0, step=1, limit=1
              $region87: #{gru_encoder_forward.7} parent=85 // loop_pre_header
                _
              $region88: #{gru_encoder_forward.7} parent=85 // loop_header
                %s300 = sphi 0, %s304
                %p301 = scmp.ge.s32.totalorder %s300, 1
                %s305 = sphi %s291, %s291
                %s306 = sphi %s288, %s288
              $region89: #{gru_encoder_forward.7} parent=85 // loop_header_branch
                %303 = sbr.rel (%p301) target = $region93
              $region90: #{gru_encoder_forward.7} parent=85 // loop_body
                %v307 = vld [vmem:[%s305] sm:$0xff]
                %308 = vst [vmem:[%s306] sm:$0xff] %v307
                %v309 = vld [vmem:[%s305 + $0x10] sm:$0xff]
                %310 = vst [vmem:[%s306 + $0x8] sm:$0xff] %v309
              $region91: #{gru_encoder_forward.7} parent=85 // loop_footer
                %s304 = sadd.s32 1, %s300
              $region92: #{gru_encoder_forward.7} parent=85 // loop_footer_branch
                %299 = sbr.rel target = $region88
              $region93: #{gru_encoder_forward.7} parent=85 // loop_exit
                _
            $region86: #{gru_encoder_forward.7} parent=77 // pred_fallthru
              _
          $region78: #{gru_encoder_forward.7} parent=73 // pred_fallthru
            _
          %327 = vnop
        $region74: #{gru_encoder_forward.7} parent=31 // pred_fallthru
          _
      $region32: #{gru_encoder_forward.7} parent=5 // pred_fallthru
        _
      %p328 = scmp.le.s32.totalorder 1, %s14
      %p329 = scmp.lt.s32.totalorder %s14, 3
      %p330 = pnand %p328, %p329
      %p331 = pneg %p330
      // Predicated region
      $region109: #{gru_encoder_forward.7} parent=5 // pred_check
        _
      $region110: #{gru_encoder_forward.7} parent=5 // pred_check_branch
        %333 = sbr.rel (%p330) target = $region112
      $region111: #{gru_encoder_forward.7} parent=5 // pred_region
        %s334 = ssub.s32 %s14, 1
        %s335 = sand.u32 %s27, 1
        %s336 = sand.u32 %s27, 1
        %s337 = smul.addr %s336, 16
        %s338 = scalar_lea.vmem [#allocation4], %s337
        // Predicated region
        $region113: #{gru_encoder_forward.7} parent=111 // pred_check
          %p339 = pneg %p40
        $region114: #{gru_encoder_forward.7} parent=111 // pred_check_branch
          %341 = sbr.rel (%p339) target = $region116
        $region115: #{gru_encoder_forward.7} parent=111 // pred_region
          _
        $region116: #{gru_encoder_forward.7} parent=111 // pred_fallthru
          _
        %s342 = sand.u32 %s55, 1
        %s343 = sand.u32 %s55, 1
        %s344 = smul.addr %s343, 16
        %s345 = scalar_lea.vmem [#allocation5], %s344
        // Predicated region
        $region117: #{gru_encoder_forward.7} parent=111 // pred_check
          %p346 = pneg %p68
        $region118: #{gru_encoder_forward.7} parent=111 // pred_check_branch
          %348 = sbr.rel (%p346) target = $region120
        $region119: #{gru_encoder_forward.7} parent=111 // pred_region
          _
        $region120: #{gru_encoder_forward.7} parent=111 // pred_fallthru
          _
        %s349 = sand.u32 %s27, 1
        %s350 = sand.u32 %s27, 1
        %s351 = smul.addr %s350, 16
        %s352 = scalar_lea.vmem [#allocation4], %s351
        %p353 = pneg %p40
        %p354 = pneg %p37
        %s355 = sand.u32 %s55, 1
        %s356 = sand.u32 %s55, 1
        %s357 = smul.addr %s356, 16
        %s358 = scalar_lea.vmem [#allocation5], %s357
        %p359 = pneg %p68
        %p360 = pneg %p65
        %p361 = pneg %p89
        %p362 = pneg %p86
        %p363 = pneg %p110
        %p364 = pneg %p107
        %p365 = pneg %p131
        %p366 = pneg %p128
        %p367 = pneg %p152
        %p368 = pneg %p149
        %p369 = pneg %p178
        %p370 = pneg %p175
        %s371 = sand.u32 %s165, 1
        %s372 = sand.u32 %s165, 1
        %s373 = smul.addr %s372, 16
        %s374 = scalar_lea.vmem [#allocation6], %s373
        %p375 = pneg %p206
        %p376 = pneg %p203
        %s377 = sand.u32 %s193, 1
        %s378 = sand.u32 %s193, 1
        %s379 = smul.addr %s378, 16
        %s380 = scalar_lea.vmem [#allocation7], %s379
        %s381 = ssub.s32 1, %s19
        %s382 = ssub.s32 1, %s19
        %p383 = scmp.eq.s32.totalorder %s19, 0
        // Predicated region
        $region121: #{gru_encoder_forward.7} parent=111 // pred_check
          %p384 = pneg %p383
        $region122: #{gru_encoder_forward.7} parent=111 // pred_check_branch
          %386 = sbr.rel (%p384) target = $region124
        $region123: #{gru_encoder_forward.7} parent=111 // pred_region
          %vm387 = vcmask 254976
          %388 = vst.msk [vmem:[#allocation2] sm:$0x3] %vm387, 0.0
          %389 = vst.msk [vmem:[#allocation3] sm:$0x3] %vm387, 0.0
        $region124: #{gru_encoder_forward.7} parent=111 // pred_fallthru
          _
        %v390 = vld [vmem:[%s338] sm:$0xff]
        %v391 = vld [vmem:[%s338 + $0x8] sm:$0xff]
        %v392 = vld [vmem:[%s345] sm:$0xff]
        %v393 = vld [vmem:[%s345 + $0x8] sm:$0xff]
        %v394 = vld [vmem:[%s2] sm:$0xff]
        %v395 = vld [vmem:[%s2 + $0x8] sm:$0xff]
        %v396 = vld [vmem:[%s2 + $0x10] sm:$0xff]
        %v397 = vld [vmem:[%s2 + $0x18] sm:$0xff]
        %v398 = vld [vmem:[%s3] sm:$0x1]
        %v399 = vld [vmem:[%s4] sm:$0xff]
        %v400 = vld [vmem:[%s4 + $0x8] sm:$0xff]
        %v401 = vld [vmem:[%s4 + $0x10] sm:$0xff]
        %v402 = vld [vmem:[%s4 + $0x18] sm:$0xff]
        %v403 = vld [vmem:[%s5] sm:$0x1]
        %v404 = vld [vmem:[#allocation2] sm:$0x3]
        %v405 = vld [vmem:[#allocation3] sm:$0x3]
        %v407 = vlaneseq
        %v408 = vshrl.u32 %v407, 7
        %v409 = vsub.s32 0, %v408
        %v410 = vrot.slane %v398, %v409
        %vm412 = vcmask 261120
        %v414 = vsel %vm412, %v404, 0
        %416 = vmatprep.subr.mxu0 0.0
        %417 = vmatpush1.msra.mxu0 %v394
        %418 = vmatprep.subr.mxu0 0.0
        %419 = vmatpush1.msra.mxu0 %v395
        %420 = vmatprep.subr.mxu0 0.0
        %421 = vmatpush1.msra.mxu0 %v396
        %422 = vmatprep.subr.mxu0 0.0
        %423 = vmatpush1.msra.mxu0 %v397
        %424 = vmatprep.subr.mxu0 0.0
        %425 = vmatpush1.msra.mxu0 0.0
        %426 = vmatprep.subr.mxu0 0.0
        %427 = vmatpush1.msra.mxu0 0.0
        %428 = vmatprep.subr.mxu0 0.0
        %429 = vmatpush1.msra.mxu0 0.0
        %430 = vmatprep.subr.mxu0 0.0
        %431 = vmatpush1.msra.mxu0 0.0
        %432 = vmatprep.subr.mxu0 0.0
        %433 = vmatpush1.msra.mxu0 0.0
        %434 = vmatprep.subr.mxu0 0.0
        %435 = vmatpush1.msra.mxu0 0.0
        %436 = vmatprep.subr.mxu0 0.0
        %437 = vmatpush1.msra.mxu0 0.0
        %438 = vmatprep.subr.mxu0 0.0
        %439 = vmatpush1.msra.mxu0 0.0
        %440 = vmatprep.subr.mxu0 0.0
        %441 = vmatpush1.msra.mxu0 0.0
        %442 = vmatprep.subr.mxu0 0.0
        %443 = vmatpush1.msra.mxu0 0.0
        %444 = vmatprep.subr.mxu0 0.0
        %445 = vmatpush1.msra.mxu0 0.0
        %446 = vmatprep.subr.mxu0 0.0
        %447 = vmatpush1.msra.mxu0 0.0
        %448 = vmatprep.subr.mxu0 0.0
        %449 = vmatpush1.msra.mxu0 0.0
        %450 = vmatprep.subr.mxu0 0.0
        %451 = vmatpush1.msra.mxu0 0.0
        %452 = vmatprep.subr.mxu0 0.0
        %453 = vmatpush1.msra.mxu0 0.0
        %454 = vmatprep.subr.mxu0 0.0
        %455 = vmatpush1.msra.mxu0 0.0
        %456 = vmatprep.subr.mxu0 0.0
        %457 = vmatpush1.msra.mxu0 0.0
        %458 = vmatprep.subr.mxu0 0.0
        %459 = vmatpush1.msra.mxu0 0.0
        %460 = vmatprep.subr.mxu0 0.0
        %461 = vmatpush1.msra.mxu0 0.0
        %462 = vmatprep.subr.mxu0 0.0
        %463 = vmatpush1.msra.mxu0 0.0
        %464 = vmatprep.subr.mxu0 0.0
        %465 = vmatpush1.msra.mxu0 0.0
        %466 = vmatprep.subr.mxu0 0.0
        %467 = vmatpush1.msra.mxu0 0.0
        %468 = vmatprep.subr.mxu0 0.0
        %469 = vmatpush1.msra.mxu0 0.0
        %470 = vmatprep.subr.mxu0 0.0
        %471 = vmatpush1.msra.mxu0 0.0
        %472 = vmatprep.subr.mxu0 0.0
        %473 = vmatpush1.msra.mxu0 0.0
        %474 = vmatprep.subr.mxu0 0.0
        %475 = vmatpush1.msra.mxu0 0.0
        %476 = vmatprep.subr.mxu0 0.0
        %477 = vmatpush1.msra.mxu0 0.0
        %478 = vmatprep.subr.mxu0 0.0
        %479 = vmatpush1.msra.mxu0 0.0
        %480 = vmatprep.mubr.f32.mxu0 0.0
        %481 = vmatmul.mubr.f32.gmra.mrb[0].mxu0 %v414
        %v482 = vpop.f32.mrb[0].mxu0
        %v483 = vadd.f32 %v410, %v482
        %v484 = vpop.f32.mrb[0].mxu0
        %485 = vdwg.mxu0
        %v487 = vrot.slane %v483, 1
        %v490 = vadd.f32 %v390, %v483
        %v491 = vadd.f32 %v391, %v487
        %v492 = vxor.u32 %v490, 2147483648
        %v493 = vxor.u32 %v491, 2147483648
        %v494 = vmul.f32 %v492, 1.442695
        %v495 = vpow.pop %v494
        %v496 = vmul.f32 %v493, 1.442695
        %v497 = vpow.pop %v496
        %v498 = vadd.f32 %v495, 1.0
        %v499 = vadd.f32 %v497, 1.0
        %v500 = vrcp.pop %v498
        %v501 = vmul.f32 1.0, %v500
        %v502 = vrcp.pop %v499
        %v503 = vmul.f32 1.0, %v502
        %504 = vrot.lane.b32.xlu0 %v483, 64
        %v505 = vpop.permute.xlu0 %504
        %506 = vrot.lane.b32.xlu0 %v487, 64
        %v507 = vpop.permute.xlu0 %506
        %v510 = vmul.f32 %v501, %v505
        %v511 = vmul.f32 %v503, %v507
        %514 = vrot.lane.b32.xlu0 %v510, 64
        %v515 = vpop.permute.xlu0 %514
        %516 = vrot.lane.b32.xlu0 %v511, 64
        %v517 = vpop.permute.xlu0 %516
        %v520 = vadd.f32 %v390, %v515
        %v521 = vadd.f32 %v391, %v517
        %v522 = vtanh.pop %v520
        %v523 = vtanh.pop %v521
        %v524 = vsub.f32 1.0, %v501
        %v525 = vsub.f32 1.0, %v503
        %528 = vrot.lane.b32.xlu0 %v522, 96
        %v529 = vpop.permute.xlu0 %528
        %530 = vrot.lane.b32.xlu0 %v523, 96
        %v531 = vpop.permute.xlu0 %530
        %v534 = vmul.f32 %v524, %v529
        %v535 = vmul.f32 %v525, %v531
        %v536 = vrot.slane %v404, 1
        %537 = vrot.lane.b32.xlu0 %v404, 32
        %v538 = vpop.permute.xlu0 %537
        %539 = vrot.lane.b32.xlu0 %v536, 32
        %v540 = vpop.permute.xlu0 %539
        %v543 = vmul.f32 %v501, %v538
        %v544 = vmul.f32 %v503, %v540
        %v545 = vadd.f32 %v534, %v543
        %v546 = vadd.f32 %v535, %v544
        %v548 = vlaneseq
        %v549 = vshrl.u32 %v548, 7
        %v550 = vsub.s32 0, %v549
        %v551 = vrot.slane %v403, %v550
        %v554 = vsel %vm412, %v405, 0
        %556 = vmatprep.subr.mxu0 0.0
        %557 = vmatpush1.msra.mxu0 %v399
        %558 = vmatprep.subr.mxu0 0.0
        %559 = vmatpush1.msra.mxu0 %v400
        %560 = vmatprep.subr.mxu0 0.0
        %561 = vmatpush1.msra.mxu0 %v401
        %562 = vmatprep.subr.mxu0 0.0
        %563 = vmatpush1.msra.mxu0 %v402
        %564 = vmatprep.subr.mxu0 0.0
        %565 = vmatpush1.msra.mxu0 0.0
        %566 = vmatprep.subr.mxu0 0.0
        %567 = vmatpush1.msra.mxu0 0.0
        %568 = vmatprep.subr.mxu0 0.0
        %569 = vmatpush1.msra.mxu0 0.0
        %570 = vmatprep.subr.mxu0 0.0
        %571 = vmatpush1.msra.mxu0 0.0
        %572 = vmatprep.subr.mxu0 0.0
        %573 = vmatpush1.msra.mxu0 0.0
        %574 = vmatprep.subr.mxu0 0.0
        %575 = vmatpush1.msra.mxu0 0.0
        %576 = vmatprep.subr.mxu0 0.0
        %577 = vmatpush1.msra.mxu0 0.0
        %578 = vmatprep.subr.mxu0 0.0
        %579 = vmatpush1.msra.mxu0 0.0
        %580 = vmatprep.subr.mxu0 0.0
        %581 = vmatpush1.msra.mxu0 0.0
        %582 = vmatprep.subr.mxu0 0.0
        %583 = vmatpush1.msra.mxu0 0.0
        %584 = vmatprep.subr.mxu0 0.0
        %585 = vmatpush1.msra.mxu0 0.0
        %586 = vmatprep.subr.mxu0 0.0
        %587 = vmatpush1.msra.mxu0 0.0
        %588 = vmatprep.subr.mxu0 0.0
        %589 = vmatpush1.msra.mxu0 0.0
        %590 = vmatprep.subr.mxu0 0.0
        %591 = vmatpush1.msra.mxu0 0.0
        %592 = vmatprep.subr.mxu0 0.0
        %593 = vmatpush1.msra.mxu0 0.0
        %594 = vmatprep.subr.mxu0 0.0
        %595 = vmatpush1.msra.mxu0 0.0
        %596 = vmatprep.subr.mxu0 0.0
        %597 = vmatpush1.msra.mxu0 0.0
        %598 = vmatprep.subr.mxu0 0.0
        %599 = vmatpush1.msra.mxu0 0.0
        %600 = vmatprep.subr.mxu0 0.0
        %601 = vmatpush1.msra.mxu0 0.0
        %602 = vmatprep.subr.mxu0 0.0
        %603 = vmatpush1.msra.mxu0 0.0
        %604 = vmatprep.subr.mxu0 0.0
        %605 = vmatpush1.msra.mxu0 0.0
        %606 = vmatprep.subr.mxu0 0.0
        %607 = vmatpush1.msra.mxu0 0.0
        %608 = vmatprep.subr.mxu0 0.0
        %609 = vmatpush1.msra.mxu0 0.0
        %610 = vmatprep.subr.mxu0 0.0
        %611 = vmatpush1.msra.mxu0 0.0
        %612 = vmatprep.subr.mxu0 0.0
        %613 = vmatpush1.msra.mxu0 0.0
        %614 = vmatprep.subr.mxu0 0.0
        %615 = vmatpush1.msra.mxu0 0.0
        %616 = vmatprep.subr.mxu0 0.0
        %617 = vmatpush1.msra.mxu0 0.0
        %618 = vmatprep.subr.mxu0 0.0
        %619 = vmatpush1.msra.mxu0 0.0
        %620 = vmatprep.mubr.f32.mxu0 0.0
        %621 = vmatmul.mubr.f32.gmra.mrb[0].mxu0 %v554
        %v622 = vpop.f32.mrb[0].mxu0
        %v623 = vadd.f32 %v551, %v622
        %v624 = vpop.f32.mrb[0].mxu0
        %625 = vdwg.mxu0
        %v627 = vrot.slane %v623, 1
        %v628 = vrot.slane %v623, 2
        %v631 = vadd.f32 %v392, %v627
        %v632 = vadd.f32 %v393, %v628
        %v633 = vxor.u32 %v631, 2147483648
        %v634 = vxor.u32 %v632, 2147483648
        %v635 = vmul.f32 %v633, 1.442695
        %v636 = vpow.pop %v635
        %v637 = vmul.f32 %v634, 1.442695
        %v638 = vpow.pop %v637
        %v639 = vadd.f32 %v636, 1.0
        %v640 = vadd.f32 %v638, 1.0
        %v641 = vrcp.pop %v639
        %v642 = vmul.f32 1.0, %v641
        %v643 = vrcp.pop %v640
        %v644 = vmul.f32 1.0, %v643
        %645 = vrot.lane.b32.xlu0 %v627, 64
        %v646 = vpop.permute.xlu0 %645
        %647 = vrot.lane.b32.xlu0 %v628, 64
        %v648 = vpop.permute.xlu0 %647
        %v651 = vmul.f32 %v642, %v646
        %v652 = vmul.f32 %v644, %v648
        %655 = vrot.lane.b32.xlu0 %v651, 64
        %v656 = vpop.permute.xlu0 %655
        %657 = vrot.lane.b32.xlu0 %v652, 64
        %v658 = vpop.permute.xlu0 %657
        %v661 = vadd.f32 %v392, %v656
        %v662 = vadd.f32 %v393, %v658
        %v663 = vtanh.pop %v661
        %v664 = vtanh.pop %v662
        %v665 = vsub.f32 1.0, %v642
        %v666 = vsub.f32 1.0, %v644
        %669 = vrot.lane.b32.xlu0 %v663, 96
        %v670 = vpop.permute.xlu0 %669
        %671 = vrot.lane.b32.xlu0 %v664, 96
        %v672 = vpop.permute.xlu0 %671
        %v675 = vmul.f32 %v665, %v670
        %v676 = vmul.f32 %v666, %v672
        %v677 = vrot.slane %v405, 1
        %v678 = vrot.slane %v405, 2
        %679 = vrot.lane.b32.xlu0 %v677, 32
        %v680 = vpop.permute.xlu0 %679
        %681 = vrot.lane.b32.xlu0 %v678, 32
        %v682 = vpop.permute.xlu0 %681
        %v685 = vmul.f32 %v642, %v680
        %v686 = vmul.f32 %v644, %v682
        %v687 = vadd.f32 %v675, %v685
        %v688 = vadd.f32 %v676, %v686
        %v691 = vrot.slane %v546, 7
        %vm692 = vcmask 1041409
        %v693 = vsel %vm692, %v691, %v545
        %694 = vrot.lane.b32.xlu0 %v693, 96
        %v695 = vpop.permute.xlu0 %694
        %v696 = vsel %vm412, %v695, 0
        %698 = vmatprep.subr.mxu0 0.0
        %699 = vmatpush1.msra.mxu0 %v394
        %700 = vmatprep.subr.mxu0 0.0
        %701 = vmatpush1.msra.mxu0 %v395
        %702 = vmatprep.subr.mxu0 0.0
        %703 = vmatpush1.msra.mxu0 %v396
        %704 = vmatprep.subr.mxu0 0.0
        %705 = vmatpush1.msra.mxu0 %v397
        %706 = vmatprep.subr.mxu0 0.0
        %707 = vmatpush1.msra.mxu0 0.0
        %708 = vmatprep.subr.mxu0 0.0
        %709 = vmatpush1.msra.mxu0 0.0
        %710 = vmatprep.subr.mxu0 0.0
        %711 = vmatpush1.msra.mxu0 0.0
        %712 = vmatprep.subr.mxu0 0.0
        %713 = vmatpush1.msra.mxu0 0.0
        %714 = vmatprep.subr.mxu0 0.0
        %715 = vmatpush1.msra.mxu0 0.0
        %716 = vmatprep.subr.mxu0 0.0
        %717 = vmatpush1.msra.mxu0 0.0
        %718 = vmatprep.subr.mxu0 0.0
        %719 = vmatpush1.msra.mxu0 0.0
        %720 = vmatprep.subr.mxu0 0.0
        %721 = vmatpush1.msra.mxu0 0.0
        %722 = vmatprep.subr.mxu0 0.0
        %723 = vmatpush1.msra.mxu0 0.0
        %724 = vmatprep.subr.mxu0 0.0
        %725 = vmatpush1.msra.mxu0 0.0
        %726 = vmatprep.subr.mxu0 0.0
        %727 = vmatpush1.msra.mxu0 0.0
        %728 = vmatprep.subr.mxu0 0.0
        %729 = vmatpush1.msra.mxu0 0.0
        %730 = vmatprep.subr.mxu0 0.0
        %731 = vmatpush1.msra.mxu0 0.0
        %732 = vmatprep.subr.mxu0 0.0
        %733 = vmatpush1.msra.mxu0 0.0
        %734 = vmatprep.subr.mxu0 0.0
        %735 = vmatpush1.msra.mxu0 0.0
        %736 = vmatprep.subr.mxu0 0.0
        %737 = vmatpush1.msra.mxu0 0.0
        %738 = vmatprep.subr.mxu0 0.0
        %739 = vmatpush1.msra.mxu0 0.0
        %740 = vmatprep.subr.mxu0 0.0
        %741 = vmatpush1.msra.mxu0 0.0
        %742 = vmatprep.subr.mxu0 0.0
        %743 = vmatpush1.msra.mxu0 0.0
        %744 = vmatprep.subr.mxu0 0.0
        %745 = vmatpush1.msra.mxu0 0.0
        %746 = vmatprep.subr.mxu0 0.0
        %747 = vmatpush1.msra.mxu0 0.0
        %748 = vmatprep.subr.mxu0 0.0
        %749 = vmatpush1.msra.mxu0 0.0
        %750 = vmatprep.subr.mxu0 0.0
        %751 = vmatpush1.msra.mxu0 0.0
        %752 = vmatprep.subr.mxu0 0.0
        %753 = vmatpush1.msra.mxu0 0.0
        %754 = vmatprep.subr.mxu0 0.0
        %755 = vmatpush1.msra.mxu0 0.0
        %756 = vmatprep.subr.mxu0 0.0
        %757 = vmatpush1.msra.mxu0 0.0
        %758 = vmatprep.subr.mxu0 0.0
        %759 = vmatpush1.msra.mxu0 0.0
        %760 = vmatprep.subr.mxu0 0.0
        %761 = vmatpush1.msra.mxu0 0.0
        %762 = vmatprep.mubr.f32.mxu0 0.0
        %763 = vmatmul.mubr.f32.gmra.mrb[0].mxu0 %v696
        %v764 = vpop.f32.mrb[0].mxu0
        %v765 = vadd.f32 %v410, %v764
        %v766 = vpop.f32.mrb[0].mxu0
        %767 = vdwg.mxu0
        %v769 = vrot.slane %v765, 7
        %v772 = vadd.f32 %v390, %v769
        %v773 = vadd.f32 %v391, %v765
        %v774 = vxor.u32 %v772, 2147483648
        %v775 = vxor.u32 %v773, 2147483648
        %v776 = vmul.f32 %v774, 1.442695
        %v777 = vpow.pop %v776
        %v778 = vmul.f32 %v775, 1.442695
        %v779 = vpow.pop %v778
        %v780 = vadd.f32 %v777, 1.0
        %v781 = vadd.f32 %v779, 1.0
        %v782 = vrcp.pop %v780
        %v783 = vmul.f32 1.0, %v782
        %v784 = vrcp.pop %v781
        %v785 = vmul.f32 1.0, %v784
        %786 = vrot.lane.b32.xlu0 %v769, 64
        %v787 = vpop.permute.xlu0 %786
        %788 = vrot.lane.b32.xlu0 %v765, 64
        %v789 = vpop.permute.xlu0 %788
        %v792 = vmul.f32 %v783, %v787
        %v793 = vmul.f32 %v785, %v789
        %796 = vrot.lane.b32.xlu0 %v792, 64
        %v797 = vpop.permute.xlu0 %796
        %798 = vrot.lane.b32.xlu0 %v793, 64
        %v799 = vpop.permute.xlu0 %798
        %v802 = vadd.f32 %v390, %v797
        %v803 = vadd.f32 %v391, %v799
        %v804 = vtanh.pop %v802
        %v805 = vtanh.pop %v803
        %v806 = vsub.f32 1.0, %v783
        %v807 = vsub.f32 1.0, %v785
        %810 = vrot.lane.b32.xlu0 %v804, 96
        %v811 = vpop.permute.xlu0 %810
        %812 = vrot.lane.b32.xlu0 %v805, 96
        %v813 = vpop.permute.xlu0 %812
        %v816 = vmul.f32 %v806, %v811
        %v817 = vmul.f32 %v807, %v813
        %v818 = vrot.slane %v545, 7
        %v821 = vmul.f32 %v783, %v818
        %v822 = vmul.f32 %v785, %v691
        %v823 = vadd.f32 %v816, %v821
        %v824 = vadd.f32 %v817, %v822
        %v827 = vrot.slane %v687, 7
        %v828 = vrot.slane %v688, 6
        %v829 = vsel %vm692, %v828, %v827
        %830 = vrot.lane.b32.xlu0 %v829, 96
        %v831 = vpop.permute.xlu0 %830
        %v832 = vsel %vm412, %v831, 0
        %834 = vmatprep.subr.mxu0 0.0
        %835 = vmatpush1.msra.mxu0 %v399
        %836 = vmatprep.subr.mxu0 0.0
        %837 = vmatpush1.msra.mxu0 %v400
        %838 = vmatprep.subr.mxu0 0.0
        %839 = vmatpush1.msra.mxu0 %v401
        %840 = vmatprep.subr.mxu0 0.0
        %841 = vmatpush1.msra.mxu0 %v402
        %842 = vmatprep.subr.mxu0 0.0
        %843 = vmatpush1.msra.mxu0 0.0
        %844 = vmatprep.subr.mxu0 0.0
        %845 = vmatpush1.msra.mxu0 0.0
        %846 = vmatprep.subr.mxu0 0.0
        %847 = vmatpush1.msra.mxu0 0.0
        %848 = vmatprep.subr.mxu0 0.0
        %849 = vmatpush1.msra.mxu0 0.0
        %850 = vmatprep.subr.mxu0 0.0
        %851 = vmatpush1.msra.mxu0 0.0
        %852 = vmatprep.subr.mxu0 0.0
        %853 = vmatpush1.msra.mxu0 0.0
        %854 = vmatprep.subr.mxu0 0.0
        %855 = vmatpush1.msra.mxu0 0.0
        %856 = vmatprep.subr.mxu0 0.0
        %857 = vmatpush1.msra.mxu0 0.0
        %858 = vmatprep.subr.mxu0 0.0
        %859 = vmatpush1.msra.mxu0 0.0
        %860 = vmatprep.subr.mxu0 0.0
        %861 = vmatpush1.msra.mxu0 0.0
        %862 = vmatprep.subr.mxu0 0.0
        %863 = vmatpush1.msra.mxu0 0.0
        %864 = vmatprep.subr.mxu0 0.0
        %865 = vmatpush1.msra.mxu0 0.0
        %866 = vmatprep.subr.mxu0 0.0
        %867 = vmatpush1.msra.mxu0 0.0
        %868 = vmatprep.subr.mxu0 0.0
        %869 = vmatpush1.msra.mxu0 0.0
        %870 = vmatprep.subr.mxu0 0.0
        %871 = vmatpush1.msra.mxu0 0.0
        %872 = vmatprep.subr.mxu0 0.0
        %873 = vmatpush1.msra.mxu0 0.0
        %874 = vmatprep.subr.mxu0 0.0
        %875 = vmatpush1.msra.mxu0 0.0
        %876 = vmatprep.subr.mxu0 0.0
        %877 = vmatpush1.msra.mxu0 0.0
        %878 = vmatprep.subr.mxu0 0.0
        %879 = vmatpush1.msra.mxu0 0.0
        %880 = vmatprep.subr.mxu0 0.0
        %881 = vmatpush1.msra.mxu0 0.0
        %882 = vmatprep.subr.mxu0 0.0
        %883 = vmatpush1.msra.mxu0 0.0
        %884 = vmatprep.subr.mxu0 0.0
        %885 = vmatpush1.msra.mxu0 0.0
        %886 = vmatprep.subr.mxu0 0.0
        %887 = vmatpush1.msra.mxu0 0.0
        %888 = vmatprep.subr.mxu0 0.0
        %889 = vmatpush1.msra.mxu0 0.0
        %890 = vmatprep.subr.mxu0 0.0
        %891 = vmatpush1.msra.mxu0 0.0
        %892 = vmatprep.subr.mxu0 0.0
        %893 = vmatpush1.msra.mxu0 0.0
        %894 = vmatprep.subr.mxu0 0.0
        %895 = vmatpush1.msra.mxu0 0.0
        %896 = vmatprep.subr.mxu0 0.0
        %897 = vmatpush1.msra.mxu0 0.0
        %898 = vmatprep.mubr.f32.mxu0 0.0
        %899 = vmatmul.mubr.f32.gmra.mrb[0].mxu0 %v832
        %v900 = vpop.f32.mrb[0].mxu0
        %v901 = vadd.f32 %v551, %v900
        %v902 = vpop.f32.mrb[0].mxu0
        %903 = vdwg.mxu0
        %v905 = vrot.slane %v901, 2
        %v906 = vrot.slane %v901, 3
        %v909 = vadd.f32 %v392, %v905
        %v910 = vadd.f32 %v393, %v906
        %v911 = vxor.u32 %v909, 2147483648
        %v912 = vxor.u32 %v910, 2147483648
        %v913 = vmul.f32 %v911, 1.442695
        %v914 = vpow.pop %v913
        %v915 = vmul.f32 %v912, 1.442695
        %v916 = vpow.pop %v915
        %v917 = vadd.f32 %v914, 1.0
        %v918 = vadd.f32 %v916, 1.0
        %v919 = vrcp.pop %v917
        %v920 = vmul.f32 1.0, %v919
        %v921 = vrcp.pop %v918
        %v922 = vmul.f32 1.0, %v921
        %923 = vrot.lane.b32.xlu0 %v905, 64
        %v924 = vpop.permute.xlu0 %923
        %925 = vrot.lane.b32.xlu0 %v906, 64
        %v926 = vpop.permute.xlu0 %925
        %v929 = vmul.f32 %v920, %v924
        %v930 = vmul.f32 %v922, %v926
        %933 = vrot.lane.b32.xlu0 %v929, 64
        %v934 = vpop.permute.xlu0 %933
        %935 = vrot.lane.b32.xlu0 %v930, 64
        %v936 = vpop.permute.xlu0 %935
        %v939 = vadd.f32 %v392, %v934
        %v940 = vadd.f32 %v393, %v936
        %v941 = vtanh.pop %v939
        %v942 = vtanh.pop %v940
        %v943 = vsub.f32 1.0, %v920
        %v944 = vsub.f32 1.0, %v922
        %947 = vrot.lane.b32.xlu0 %v941, 96
        %v948 = vpop.permute.xlu0 %947
        %949 = vrot.lane.b32.xlu0 %v942, 96
        %v950 = vpop.permute.xlu0 %949
        %v953 = vmul.f32 %v943, %v948
        %v954 = vmul.f32 %v944, %v950
        %v955 = vrot.slane %v687, 1
        %v956 = vrot.slane %v688, 1
        %v959 = vmul.f32 %v920, %v955
        %v960 = vmul.f32 %v922, %v956
        %v961 = vadd.f32 %v953, %v959
        %v962 = vadd.f32 %v954, %v960
        %v965 = vrot.slane %v823, 1
        %v966 = vsel %vm692, %v824, %v965
        %967 = vrot.lane.b32.xlu0 %v966, 96
        %v968 = vpop.permute.xlu0 %967
        %v969 = vsel %vm412, %v968, 0
        %971 = vmatprep.subr.mxu0 0.0
        %972 = vmatpush1.msra.mxu0 %v394
        %973 = vmatprep.subr.mxu0 0.0
        %974 = vmatpush1.msra.mxu0 %v395
        %975 = vmatprep.subr.mxu0 0.0
        %976 = vmatpush1.msra.mxu0 %v396
        %977 = vmatprep.subr.mxu0 0.0
        %978 = vmatpush1.msra.mxu0 %v397
        %979 = vmatprep.subr.mxu0 0.0
        %980 = vmatpush1.msra.mxu0 0.0
        %981 = vmatprep.subr.mxu0 0.0
        %982 = vmatpush1.msra.mxu0 0.0
        %983 = vmatprep.subr.mxu0 0.0
        %984 = vmatpush1.msra.mxu0 0.0
        %985 = vmatprep.subr.mxu0 0.0
        %986 = vmatpush1.msra.mxu0 0.0
        %987 = vmatprep.subr.mxu0 0.0
        %988 = vmatpush1.msra.mxu0 0.0
        %989 = vmatprep.subr.mxu0 0.0
        %990 = vmatpush1.msra.mxu0 0.0
        %991 = vmatprep.subr.mxu0 0.0
        %992 = vmatpush1.msra.mxu0 0.0
        %993 = vmatprep.subr.mxu0 0.0
        %994 = vmatpush1.msra.mxu0 0.0
        %995 = vmatprep.subr.mxu0 0.0
        %996 = vmatpush1.msra.mxu0 0.0
        %997 = vmatprep.subr.mxu0 0.0
        %998 = vmatpush1.msra.mxu0 0.0
        %999 = vmatprep.subr.mxu0 0.0
        %1000 = vmatpush1.msra.mxu0 0.0
        %1001 = vmatprep.subr.mxu0 0.0
        %1002 = vmatpush1.msra.mxu0 0.0
        %1003 = vmatprep.subr.mxu0 0.0
        %1004 = vmatpush1.msra.mxu0 0.0
        %1005 = vmatprep.subr.mxu0 0.0
        %1006 = vmatpush1.msra.mxu0 0.0
        %1007 = vmatprep.subr.mxu0 0.0
        %1008 = vmatpush1.msra.mxu0 0.0
        %1009 = vmatprep.subr.mxu0 0.0
        %1010 = vmatpush1.msra.mxu0 0.0
        %1011 = vmatprep.subr.mxu0 0.0
        %1012 = vmatpush1.msra.mxu0 0.0
        %1013 = vmatprep.subr.mxu0 0.0
        %1014 = vmatpush1.msra.mxu0 0.0
        %1015 = vmatprep.subr.mxu0 0.0
        %1016 = vmatpush1.msra.mxu0 0.0
        %1017 = vmatprep.subr.mxu0 0.0
        %1018 = vmatpush1.msra.mxu0 0.0
        %1019 = vmatprep.subr.mxu0 0.0
        %1020 = vmatpush1.msra.mxu0 0.0
        %1021 = vmatprep.subr.mxu0 0.0
        %1022 = vmatpush1.msra.mxu0 0.0
        %1023 = vmatprep.subr.mxu0 0.0
        %1024 = vmatpush1.msra.mxu0 0.0
        %1025 = vmatprep.subr.mxu0 0.0
        %1026 = vmatpush1.msra.mxu0 0.0
        %1027 = vmatprep.subr.mxu0 0.0
        %1028 = vmatpush1.msra.mxu0 0.0
        %1029 = vmatprep.subr.mxu0 0.0
        %1030 = vmatpush1.msra.mxu0 0.0
        %1031 = vmatprep.subr.mxu0 0.0
        %1032 = vmatpush1.msra.mxu0 0.0
        %1033 = vmatprep.subr.mxu0 0.0
        %1034 = vmatpush1.msra.mxu0 0.0
        %1035 = vmatprep.mubr.f32.mxu0 0.0
        %1036 = vmatmul.mubr.f32.gmra.mrb[0].mxu0 %v969
        %v1037 = vpop.f32.mrb[0].mxu0
        %v1038 = vadd.f32 %v410, %v1037
        %v1039 = vpop.f32.mrb[0].mxu0
        %1040 = vdwg.mxu0
        %v1042 = vrot.slane %v1038, 6
        %v1043 = vrot.slane %v1038, 7
        %v1046 = vadd.f32 %v390, %v1042
        %v1047 = vadd.f32 %v391, %v1043
        %v1048 = vxor.u32 %v1046, 2147483648
        %v1049 = vxor.u32 %v1047, 2147483648
        %v1050 = vmul.f32 %v1048, 1.442695
        %v1051 = vpow.pop %v1050
        %v1052 = vmul.f32 %v1049, 1.442695
        %v1053 = vpow.pop %v1052
        %v1054 = vadd.f32 %v1051, 1.0
        %v1055 = vadd.f32 %v1053, 1.0
        %v1056 = vrcp.pop %v1054
        %v1057 = vmul.f32 1.0, %v1056
        %v1058 = vrcp.pop %v1055
        %v1059 = vmul.f32 1.0, %v1058
        %1060 = vrot.lane.b32.xlu0 %v1042, 64
        %v1061 = vpop.permute.xlu0 %1060
        %1062 = vrot.lane.b32.xlu0 %v1043, 64
        %v1063 = vpop.permute.xlu0 %1062
        %v1066 = vmul.f32 %v1057, %v1061
        %v1067 = vmul.f32 %v1059, %v1063
        %1070 = vrot.lane.b32.xlu0 %v1066, 64
        %v1071 = vpop.permute.xlu0 %1070
        %1072 = vrot.lane.b32.xlu0 %v1067, 64
        %v1073 = vpop.permute.xlu0 %1072
        %v1076 = vadd.f32 %v390, %v1071
        %v1077 = vadd.f32 %v391, %v1073
        %v1078 = vtanh.pop %v1076
        %v1079 = vtanh.pop %v1077
        %v1080 = vsub.f32 1.0, %v1057
        %v1081 = vsub.f32 1.0, %v1059
        %1084 = vrot.lane.b32.xlu0 %v1078, 96
        %v1085 = vpop.permute.xlu0 %1084
        %1086 = vrot.lane.b32.xlu0 %v1079, 96
        %v1087 = vpop.permute.xlu0 %1086
        %v1090 = vmul.f32 %v1080, %v1085
        %v1091 = vmul.f32 %v1081, %v1087
        %v1092 = vrot.slane %v823, 7
        %v1093 = vrot.slane %v824, 7
        %v1096 = vmul.f32 %v1057, %v1092
        %v1097 = vmul.f32 %v1059, %v1093
        %v1098 = vadd.f32 %v1090, %v1096
        %v1099 = vadd.f32 %v1091, %v1097
        %v1102 = vrot.slane %v961, 6
        %v1103 = vrot.slane %v962, 5
        %v1104 = vsel %vm692, %v1103, %v1102
        %1105 = vrot.lane.b32.xlu0 %v1104, 96
        %v1106 = vpop.permute.xlu0 %1105
        %v1107 = vsel %vm412, %v1106, 0
        %1109 = vmatprep.subr.mxu0 0.0
        %1110 = vmatpush1.msra.mxu0 %v399
        %1111 = vmatprep.subr.mxu0 0.0
        %1112 = vmatpush1.msra.mxu0 %v400
        %1113 = vmatprep.subr.mxu0 0.0
        %1114 = vmatpush1.msra.mxu0 %v401
        %1115 = vmatprep.subr.mxu0 0.0
        %1116 = vmatpush1.msra.mxu0 %v402
        %1117 = vmatprep.subr.mxu0 0.0
        %1118 = vmatpush1.msra.mxu0 0.0
        %1119 = vmatprep.subr.mxu0 0.0
        %1120 = vmatpush1.msra.mxu0 0.0
        %1121 = vmatprep.subr.mxu0 0.0
        %1122 = vmatpush1.msra.mxu0 0.0
        %1123 = vmatprep.subr.mxu0 0.0
        %1124 = vmatpush1.msra.mxu0 0.0
        %1125 = vmatprep.subr.mxu0 0.0
        %1126 = vmatpush1.msra.mxu0 0.0
        %1127 = vmatprep.subr.mxu0 0.0
        %1128 = vmatpush1.msra.mxu0 0.0
        %1129 = vmatprep.subr.mxu0 0.0
        %1130 = vmatpush1.msra.mxu0 0.0
        %1131 = vmatprep.subr.mxu0 0.0
        %1132 = vmatpush1.msra.mxu0 0.0
        %1133 = vmatprep.subr.mxu0 0.0
        %1134 = vmatpush1.msra.mxu0 0.0
        %1135 = vmatprep.subr.mxu0 0.0
        %1136 = vmatpush1.msra.mxu0 0.0
        %1137 = vmatprep.subr.mxu0 0.0
        %1138 = vmatpush1.msra.mxu0 0.0
        %1139 = vmatprep.subr.mxu0 0.0
        %1140 = vmatpush1.msra.mxu0 0.0
        %1141 = vmatprep.subr.mxu0 0.0
        %1142 = vmatpush1.msra.mxu0 0.0
        %1143 = vmatprep.subr.mxu0 0.0
        %1144 = vmatpush1.msra.mxu0 0.0
        %1145 = vmatprep.subr.mxu0 0.0
        %1146 = vmatpush1.msra.mxu0 0.0
        %1147 = vmatprep.subr.mxu0 0.0
        %1148 = vmatpush1.msra.mxu0 0.0
        %1149 = vmatprep.subr.mxu0 0.0
        %1150 = vmatpush1.msra.mxu0 0.0
        %1151 = vmatprep.subr.mxu0 0.0
        %1152 = vmatpush1.msra.mxu0 0.0
        %1153 = vmatprep.subr.mxu0 0.0
        %1154 = vmatpush1.msra.mxu0 0.0
        %1155 = vmatprep.subr.mxu0 0.0
        %1156 = vmatpush1.msra.mxu0 0.0
        %1157 = vmatprep.subr.mxu0 0.0
        %1158 = vmatpush1.msra.mxu0 0.0
        %1159 = vmatprep.subr.mxu0 0.0
        %1160 = vmatpush1.msra.mxu0 0.0
        %1161 = vmatprep.subr.mxu0 0.0
        %1162 = vmatpush1.msra.mxu0 0.0
        %1163 = vmatprep.subr.mxu0 0.0
        %1164 = vmatpush1.msra.mxu0 0.0
        %1165 = vmatprep.subr.mxu0 0.0
        %1166 = vmatpush1.msra.mxu0 0.0
        %1167 = vmatprep.subr.mxu0 0.0
        %1168 = vmatpush1.msra.mxu0 0.0
        %1169 = vmatprep.subr.mxu0 0.0
        %1170 = vmatpush1.msra.mxu0 0.0
        %1171 = vmatprep.subr.mxu0 0.0
        %1172 = vmatpush1.msra.mxu0 0.0
        %1173 = vmatprep.mubr.f32.mxu0 0.0
        %1174 = vmatmul.mubr.f32.gmra.mrb[0].mxu0 %v1107
        %v1175 = vpop.f32.mrb[0].mxu0
        %v1176 = vadd.f32 %v551, %v1175
        %v1177 = vpop.f32.mrb[0].mxu0
        %1178 = vdwg.mxu0
        %v1180 = vrot.slane %v1176, 3
        %v1181 = vrot.slane %v1176, 4
        %v1184 = vadd.f32 %v392, %v1180
        %v1185 = vadd.f32 %v393, %v1181
        %v1186 = vxor.u32 %v1184, 2147483648
        %v1187 = vxor.u32 %v1185, 2147483648
        %v1188 = vmul.f32 %v1186, 1.442695
        %v1189 = vpow.pop %v1188
        %v1190 = vmul.f32 %v1187, 1.442695
        %v1191 = vpow.pop %v1190
        %v1192 = vadd.f32 %v1189, 1.0
        %v1193 = vadd.f32 %v1191, 1.0
        %v1194 = vrcp.pop %v1192
        %v1195 = vmul.f32 1.0, %v1194
        %v1196 = vrcp.pop %v1193
        %v1197 = vmul.f32 1.0, %v1196
        %1198 = vrot.lane.b32.xlu0 %v1180, 64
        %v1199 = vpop.permute.xlu0 %1198
        %1200 = vrot.lane.b32.xlu0 %v1181, 64
        %v1201 = vpop.permute.xlu0 %1200
        %v1204 = vmul.f32 %v1195, %v1199
        %v1205 = vmul.f32 %v1197, %v1201
        %1208 = vrot.lane.b32.xlu0 %v1204, 64
        %v1209 = vpop.permute.xlu0 %1208
        %1210 = vrot.lane.b32.xlu0 %v1205, 64
        %v1211 = vpop.permute.xlu0 %1210
        %v1214 = vadd.f32 %v392, %v1209
        %v1215 = vadd.f32 %v393, %v1211
        %v1216 = vtanh.pop %v1214
        %v1217 = vtanh.pop %v1215
        %v1218 = vsub.f32 1.0, %v1195
        %v1219 = vsub.f32 1.0, %v1197
        %1222 = vrot.lane.b32.xlu0 %v1216, 96
        %v1223 = vpop.permute.xlu0 %1222
        %1224 = vrot.lane.b32.xlu0 %v1217, 96
        %v1225 = vpop.permute.xlu0 %1224
        %v1228 = vmul.f32 %v1218, %v1223
        %v1229 = vmul.f32 %v1219, %v1225
        %v1230 = vrot.slane %v961, 1
        %v1231 = vrot.slane %v962, 1
        %v1234 = vmul.f32 %v1195, %v1230
        %v1235 = vmul.f32 %v1197, %v1231
        %v1236 = vadd.f32 %v1228, %v1234
        %v1237 = vadd.f32 %v1229, %v1235
        %v1240 = vrot.slane %v1098, 2
        %v1241 = vrot.slane %v1099, 1
        %v1242 = vsel %vm692, %v1241, %v1240
        %1243 = vrot.lane.b32.xlu0 %v1242, 96
        %v1244 = vpop.permute.xlu0 %1243
        %v1245 = vsel %vm412, %v1244, 0
        %1247 = vmatprep.subr.mxu0 0.0
        %1248 = vmatpush1.msra.mxu0 %v394
        %1249 = vmatprep.subr.mxu0 0.0
        %1250 = vmatpush1.msra.mxu0 %v395
        %1251 = vmatprep.subr.mxu0 0.0
        %1252 = vmatpush1.msra.mxu0 %v396
        %1253 = vmatprep.subr.mxu0 0.0
        %1254 = vmatpush1.msra.mxu0 %v397
        %1255 = vmatprep.subr.mxu0 0.0
        %1256 = vmatpush1.msra.mxu0 0.0
        %1257 = vmatprep.subr.mxu0 0.0
        %1258 = vmatpush1.msra.mxu0 0.0
        %1259 = vmatprep.subr.mxu0 0.0
        %1260 = vmatpush1.msra.mxu0 0.0
        %1261 = vmatprep.subr.mxu0 0.0
        %1262 = vmatpush1.msra.mxu0 0.0
        %1263 = vmatprep.subr.mxu0 0.0
        %1264 = vmatpush1.msra.mxu0 0.0
        %1265 = vmatprep.subr.mxu0 0.0
        %1266 = vmatpush1.msra.mxu0 0.0
        %1267 = vmatprep.subr.mxu0 0.0
        %1268 = vmatpush1.msra.mxu0 0.0
        %1269 = vmatprep.subr.mxu0 0.0
        %1270 = vmatpush1.msra.mxu0 0.0
        %1271 = vmatprep.subr.mxu0 0.0
        %1272 = vmatpush1.msra.mxu0 0.0
        %1273 = vmatprep.subr.mxu0 0.0
        %1274 = vmatpush1.msra.mxu0 0.0
        %1275 = vmatprep.subr.mxu0 0.0
        %1276 = vmatpush1.msra.mxu0 0.0
        %1277 = vmatprep.subr.mxu0 0.0
        %1278 = vmatpush1.msra.mxu0 0.0
        %1279 = vmatprep.subr.mxu0 0.0
        %1280 = vmatpush1.msra.mxu0 0.0
        %1281 = vmatprep.subr.mxu0 0.0
        %1282 = vmatpush1.msra.mxu0 0.0
        %1283 = vmatprep.subr.mxu0 0.0
        %1284 = vmatpush1.msra.mxu0 0.0
        %1285 = vmatprep.subr.mxu0 0.0
        %1286 = vmatpush1.msra.mxu0 0.0
        %1287 = vmatprep.subr.mxu0 0.0
        %1288 = vmatpush1.msra.mxu0 0.0
        %1289 = vmatprep.subr.mxu0 0.0
        %1290 = vmatpush1.msra.mxu0 0.0
        %1291 = vmatprep.subr.mxu0 0.0
        %1292 = vmatpush1.msra.mxu0 0.0
        %1293 = vmatprep.subr.mxu0 0.0
        %1294 = vmatpush1.msra.mxu0 0.0
        %1295 = vmatprep.subr.mxu0 0.0
        %1296 = vmatpush1.msra.mxu0 0.0
        %1297 = vmatprep.subr.mxu0 0.0
        %1298 = vmatpush1.msra.mxu0 0.0
        %1299 = vmatprep.subr.mxu0 0.0
        %1300 = vmatpush1.msra.mxu0 0.0
        %1301 = vmatprep.subr.mxu0 0.0
        %1302 = vmatpush1.msra.mxu0 0.0
        %1303 = vmatprep.subr.mxu0 0.0
        %1304 = vmatpush1.msra.mxu0 0.0
        %1305 = vmatprep.subr.mxu0 0.0
        %1306 = vmatpush1.msra.mxu0 0.0
        %1307 = vmatprep.subr.mxu0 0.0
        %1308 = vmatpush1.msra.mxu0 0.0
        %1309 = vmatprep.subr.mxu0 0.0
        %1310 = vmatpush1.msra.mxu0 0.0
        %1311 = vmatprep.mubr.f32.mxu0 0.0
        %1312 = vmatmul.mubr.f32.gmra.mrb[0].mxu0 %v1245
        %v1313 = vpop.f32.mrb[0].mxu0
        %v1314 = vadd.f32 %v410, %v1313
        %v1315 = vpop.f32.mrb[0].mxu0
        %1316 = vdwg.mxu0
        %v1318 = vrot.slane %v1314, 5
        %v1319 = vrot.slane %v1314, 6
        %v1322 = vadd.f32 %v390, %v1318
        %v1323 = vadd.f32 %v391, %v1319
        %v1324 = vxor.u32 %v1322, 2147483648
        %v1325 = vxor.u32 %v1323, 2147483648
        %v1326 = vmul.f32 %v1324, 1.442695
        %v1327 = vpow.pop %v1326
        %v1328 = vmul.f32 %v1325, 1.442695
        %v1329 = vpow.pop %v1328
        %v1330 = vadd.f32 %v1327, 1.0
        %v1331 = vadd.f32 %v1329, 1.0
        %v1332 = vrcp.pop %v1330
        %v1333 = vmul.f32 1.0, %v1332
        %v1334 = vrcp.pop %v1331
        %v1335 = vmul.f32 1.0, %v1334
        %1336 = vrot.lane.b32.xlu0 %v1318, 64
        %v1337 = vpop.permute.xlu0 %1336
        %1338 = vrot.lane.b32.xlu0 %v1319, 64
        %v1339 = vpop.permute.xlu0 %1338
        %v1342 = vmul.f32 %v1333, %v1337
        %v1343 = vmul.f32 %v1335, %v1339
        %1346 = vrot.lane.b32.xlu0 %v1342, 64
        %v1347 = vpop.permute.xlu0 %1346
        %1348 = vrot.lane.b32.xlu0 %v1343, 64
        %v1349 = vpop.permute.xlu0 %1348
        %v1352 = vadd.f32 %v390, %v1347
        %v1353 = vadd.f32 %v391, %v1349
        %v1354 = vtanh.pop %v1352
        %v1355 = vtanh.pop %v1353
        %v1356 = vsub.f32 1.0, %v1333
        %v1357 = vsub.f32 1.0, %v1335
        %1360 = vrot.lane.b32.xlu0 %v1354, 96
        %v1361 = vpop.permute.xlu0 %1360
        %1362 = vrot.lane.b32.xlu0 %v1355, 96
        %v1363 = vpop.permute.xlu0 %1362
        %v1366 = vmul.f32 %v1356, %v1361
        %v1367 = vmul.f32 %v1357, %v1363
        %v1368 = vrot.slane %v1098, 7
        %v1369 = vrot.slane %v1099, 7
        %v1372 = vmul.f32 %v1333, %v1368
        %v1373 = vmul.f32 %v1335, %v1369
        %v1374 = vadd.f32 %v1366, %v1372
        %v1375 = vadd.f32 %v1367, %v1373
        %v1378 = vrot.slane %v1236, 5
        %v1379 = vrot.slane %v1237, 4
        %v1380 = vsel %vm692, %v1379, %v1378
        %1381 = vrot.lane.b32.xlu0 %v1380, 96
        %v1382 = vpop.permute.xlu0 %1381
        %v1383 = vsel %vm412, %v1382, 0
        %1385 = vmatprep.subr.mxu0 0.0
        %1386 = vmatpush1.msra.mxu0 %v399
        %1387 = vmatprep.subr.mxu0 0.0
        %1388 = vmatpush1.msra.mxu0 %v400
        %1389 = vmatprep.subr.mxu0 0.0
        %1390 = vmatpush1.msra.mxu0 %v401
        %1391 = vmatprep.subr.mxu0 0.0
        %1392 = vmatpush1.msra.mxu0 %v402
        %1393 = vmatprep.subr.mxu0 0.0
        %1394 = vmatpush1.msra.mxu0 0.0
        %1395 = vmatprep.subr.mxu0 0.0
        %1396 = vmatpush1.msra.mxu0 0.0
        %1397 = vmatprep.subr.mxu0 0.0
        %1398 = vmatpush1.msra.mxu0 0.0
        %1399 = vmatprep.subr.mxu0 0.0
        %1400 = vmatpush1.msra.mxu0 0.0
        %1401 = vmatprep.subr.mxu0 0.0
        %1402 = vmatpush1.msra.mxu0 0.0
        %1403 = vmatprep.subr.mxu0 0.0
        %1404 = vmatpush1.msra.mxu0 0.0
        %1405 = vmatprep.subr.mxu0 0.0
        %1406 = vmatpush1.msra.mxu0 0.0
        %1407 = vmatprep.subr.mxu0 0.0
        %1408 = vmatpush1.msra.mxu0 0.0
        %1409 = vmatprep.subr.mxu0 0.0
        %1410 = vmatpush1.msra.mxu0 0.0
        %1411 = vmatprep.subr.mxu0 0.0
        %1412 = vmatpush1.msra.mxu0 0.0
        %1413 = vmatprep.subr.mxu0 0.0
        %1414 = vmatpush1.msra.mxu0 0.0
        %1415 = vmatprep.subr.mxu0 0.0
        %1416 = vmatpush1.msra.mxu0 0.0
        %1417 = vmatprep.subr.mxu0 0.0
        %1418 = vmatpush1.msra.mxu0 0.0
        %1419 = vmatprep.subr.mxu0 0.0
        %1420 = vmatpush1.msra.mxu0 0.0
        %1421 = vmatprep.subr.mxu0 0.0
        %1422 = vmatpush1.msra.mxu0 0.0
        %1423 = vmatprep.subr.mxu0 0.0
        %1424 = vmatpush1.msra.mxu0 0.0
        %1425 = vmatprep.subr.mxu0 0.0
        %1426 = vmatpush1.msra.mxu0 0.0
        %1427 = vmatprep.subr.mxu0 0.0
        %1428 = vmatpush1.msra.mxu0 0.0
        %1429 = vmatprep.subr.mxu0 0.0
        %1430 = vmatpush1.msra.mxu0 0.0
        %1431 = vmatprep.subr.mxu0 0.0
        %1432 = vmatpush1.msra.mxu0 0.0
        %1433 = vmatprep.subr.mxu0 0.0
        %1434 = vmatpush1.msra.mxu0 0.0
        %1435 = vmatprep.subr.mxu0 0.0
        %1436 = vmatpush1.msra.mxu0 0.0
        %1437 = vmatprep.subr.mxu0 0.0
        %1438 = vmatpush1.msra.mxu0 0.0
        %1439 = vmatprep.subr.mxu0 0.0
        %1440 = vmatpush1.msra.mxu0 0.0
        %1441 = vmatprep.subr.mxu0 0.0
        %1442 = vmatpush1.msra.mxu0 0.0
        %1443 = vmatprep.subr.mxu0 0.0
        %1444 = vmatpush1.msra.mxu0 0.0
        %1445 = vmatprep.subr.mxu0 0.0
        %1446 = vmatpush1.msra.mxu0 0.0
        %1447 = vmatprep.subr.mxu0 0.0
        %1448 = vmatpush1.msra.mxu0 0.0
        %1449 = vmatprep.mubr.f32.mxu0 0.0
        %1450 = vmatmul.mubr.f32.gmra.mrb[0].mxu0 %v1383
        %v1451 = vpop.f32.mrb[0].mxu0
        %v1452 = vadd.f32 %v551, %v1451
        %v1453 = vpop.f32.mrb[0].mxu0
        %1454 = vdwg.mxu0
        %v1456 = vrot.slane %v1452, 4
        %v1457 = vrot.slane %v1452, 5
        %v1460 = vadd.f32 %v392, %v1456
        %v1461 = vadd.f32 %v393, %v1457
        %v1462 = vxor.u32 %v1460, 2147483648
        %v1463 = vxor.u32 %v1461, 2147483648
        %v1464 = vmul.f32 %v1462, 1.442695
        %v1465 = vpow.pop %v1464
        %v1466 = vmul.f32 %v1463, 1.442695
        %v1467 = vpow.pop %v1466
        %v1468 = vadd.f32 %v1465, 1.0
        %v1469 = vadd.f32 %v1467, 1.0
        %v1470 = vrcp.pop %v1468
        %v1471 = vmul.f32 1.0, %v1470
        %v1472 = vrcp.pop %v1469
        %v1473 = vmul.f32 1.0, %v1472
        %1474 = vrot.lane.b32.xlu0 %v1456, 64
        %v1475 = vpop.permute.xlu0 %1474
        %1476 = vrot.lane.b32.xlu0 %v1457, 64
        %v1477 = vpop.permute.xlu0 %1476
        %v1480 = vmul.f32 %v1471, %v1475
        %v1481 = vmul.f32 %v1473, %v1477
        %1484 = vrot.lane.b32.xlu0 %v1480, 64
        %v1485 = vpop.permute.xlu0 %1484
        %1486 = vrot.lane.b32.xlu0 %v1481, 64
        %v1487 = vpop.permute.xlu0 %1486
        %v1490 = vadd.f32 %v392, %v1485
        %v1491 = vadd.f32 %v393, %v1487
        %v1492 = vtanh.pop %v1490
        %v1493 = vtanh.pop %v1491
        %v1494 = vsub.f32 1.0, %v1471
        %v1495 = vsub.f32 1.0, %v1473
        %1498 = vrot.lane.b32.xlu0 %v1492, 96
        %v1499 = vpop.permute.xlu0 %1498
        %1500 = vrot.lane.b32.xlu0 %v1493, 96
        %v1501 = vpop.permute.xlu0 %1500
        %v1504 = vmul.f32 %v1494, %v1499
        %v1505 = vmul.f32 %v1495, %v1501
        %v1506 = vrot.slane %v1236, 1
        %v1507 = vrot.slane %v1237, 1
        %v1510 = vmul.f32 %v1471, %v1506
        %v1511 = vmul.f32 %v1473, %v1507
        %v1512 = vadd.f32 %v1504, %v1510
        %v1513 = vadd.f32 %v1505, %v1511
        %v1516 = vrot.slane %v1374, 3
        %v1517 = vrot.slane %v1375, 2
        %v1518 = vsel %vm692, %v1517, %v1516
        %1519 = vrot.lane.b32.xlu0 %v1518, 96
        %v1520 = vpop.permute.xlu0 %1519
        %v1521 = vsel %vm412, %v1520, 0
        %1523 = vmatprep.subr.mxu0 0.0
        %1524 = vmatpush1.msra.mxu0 %v394
        %1525 = vmatprep.subr.mxu0 0.0
        %1526 = vmatpush1.msra.mxu0 %v395
        %1527 = vmatprep.subr.mxu0 0.0
        %1528 = vmatpush1.msra.mxu0 %v396
        %1529 = vmatprep.subr.mxu0 0.0
        %1530 = vmatpush1.msra.mxu0 %v397
        %1531 = vmatprep.subr.mxu0 0.0
        %1532 = vmatpush1.msra.mxu0 0.0
        %1533 = vmatprep.subr.mxu0 0.0
        %1534 = vmatpush1.msra.mxu0 0.0
        %1535 = vmatprep.subr.mxu0 0.0
        %1536 = vmatpush1.msra.mxu0 0.0
        %1537 = vmatprep.subr.mxu0 0.0
        %1538 = vmatpush1.msra.mxu0 0.0
        %1539 = vmatprep.subr.mxu0 0.0
        %1540 = vmatpush1.msra.mxu0 0.0
        %1541 = vmatprep.subr.mxu0 0.0
        %1542 = vmatpush1.msra.mxu0 0.0
        %1543 = vmatprep.subr.mxu0 0.0
        %1544 = vmatpush1.msra.mxu0 0.0
        %1545 = vmatprep.subr.mxu0 0.0
        %1546 = vmatpush1.msra.mxu0 0.0
        %1547 = vmatprep.subr.mxu0 0.0
        %1548 = vmatpush1.msra.mxu0 0.0
        %1549 = vmatprep.subr.mxu0 0.0
        %1550 = vmatpush1.msra.mxu0 0.0
        %1551 = vmatprep.subr.mxu0 0.0
        %1552 = vmatpush1.msra.mxu0 0.0
        %1553 = vmatprep.subr.mxu0 0.0
        %1554 = vmatpush1.msra.mxu0 0.0
        %1555 = vmatprep.subr.mxu0 0.0
        %1556 = vmatpush1.msra.mxu0 0.0
        %1557 = vmatprep.subr.mxu0 0.0
        %1558 = vmatpush1.msra.mxu0 0.0
        %1559 = vmatprep.subr.mxu0 0.0
        %1560 = vmatpush1.msra.mxu0 0.0
        %1561 = vmatprep.subr.mxu0 0.0
        %1562 = vmatpush1.msra.mxu0 0.0
        %1563 = vmatprep.subr.mxu0 0.0
        %1564 = vmatpush1.msra.mxu0 0.0
        %1565 = vmatprep.subr.mxu0 0.0
        %1566 = vmatpush1.msra.mxu0 0.0
        %1567 = vmatprep.subr.mxu0 0.0
        %1568 = vmatpush1.msra.mxu0 0.0
        %1569 = vmatprep.subr.mxu0 0.0
        %1570 = vmatpush1.msra.mxu0 0.0
        %1571 = vmatprep.subr.mxu0 0.0
        %1572 = vmatpush1.msra.mxu0 0.0
        %1573 = vmatprep.subr.mxu0 0.0
        %1574 = vmatpush1.msra.mxu0 0.0
        %1575 = vmatprep.subr.mxu0 0.0
        %1576 = vmatpush1.msra.mxu0 0.0
        %1577 = vmatprep.subr.mxu0 0.0
        %1578 = vmatpush1.msra.mxu0 0.0
        %1579 = vmatprep.subr.mxu0 0.0
        %1580 = vmatpush1.msra.mxu0 0.0
        %1581 = vmatprep.subr.mxu0 0.0
        %1582 = vmatpush1.msra.mxu0 0.0
        %1583 = vmatprep.subr.mxu0 0.0
        %1584 = vmatpush1.msra.mxu0 0.0
        %1585 = vmatprep.subr.mxu0 0.0
        %1586 = vmatpush1.msra.mxu0 0.0
        %1587 = vmatprep.mubr.f32.mxu0 0.0
        %1588 = vmatmul.mubr.f32.gmra.mrb[0].mxu0 %v1521
        %v1589 = vpop.f32.mrb[0].mxu0
        %v1590 = vadd.f32 %v410, %v1589
        %v1591 = vpop.f32.mrb[0].mxu0
        %1592 = vdwg.mxu0
        %v1594 = vrot.slane %v1590, 4
        %v1595 = vrot.slane %v1590, 5
        %v1598 = vadd.f32 %v390, %v1594
        %v1599 = vadd.f32 %v391, %v1595
        %v1600 = vxor.u32 %v1598, 2147483648
        %v1601 = vxor.u32 %v1599, 2147483648
        %v1602 = vmul.f32 %v1600, 1.442695
        %v1603 = vpow.pop %v1602
        %v1604 = vmul.f32 %v1601, 1.442695
        %v1605 = vpow.pop %v1604
        %v1606 = vadd.f32 %v1603, 1.0
        %v1607 = vadd.f32 %v1605, 1.0
        %v1608 = vrcp.pop %v1606
        %v1609 = vmul.f32 1.0, %v1608
        %v1610 = vrcp.pop %v1607
        %v1611 = vmul.f32 1.0, %v1610
        %1612 = vrot.lane.b32.xlu0 %v1594, 64
        %v1613 = vpop.permute.xlu0 %1612
        %1614 = vrot.lane.b32.xlu0 %v1595, 64
        %v1615 = vpop.permute.xlu0 %1614
        %v1618 = vmul.f32 %v1609, %v1613
        %v1619 = vmul.f32 %v1611, %v1615
        %1622 = vrot.lane.b32.xlu0 %v1618, 64
        %v1623 = vpop.permute.xlu0 %1622
        %1624 = vrot.lane.b32.xlu0 %v1619, 64
        %v1625 = vpop.permute.xlu0 %1624
        %v1628 = vadd.f32 %v390, %v1623
        %v1629 = vadd.f32 %v391, %v1625
        %v1630 = vtanh.pop %v1628
        %v1631 = vtanh.pop %v1629
        %v1632 = vsub.f32 1.0, %v1609
        %v1633 = vsub.f32 1.0, %v1611
        %1636 = vrot.lane.b32.xlu0 %v1630, 96
        %v1637 = vpop.permute.xlu0 %1636
        %1638 = vrot.lane.b32.xlu0 %v1631, 96
        %v1639 = vpop.permute.xlu0 %1638
        %v1642 = vmul.f32 %v1632, %v1637
        %v1643 = vmul.f32 %v1633, %v1639
        %v1644 = vrot.slane %v1374, 7
        %v1645 = vrot.slane %v1375, 7
        %v1648 = vmul.f32 %v1609, %v1644
        %v1649 = vmul.f32 %v1611, %v1645
        %v1650 = vadd.f32 %v1642, %v1648
        %v1651 = vadd.f32 %v1643, %v1649
        %v1654 = vrot.slane %v1512, 4
        %v1655 = vrot.slane %v1513, 3
        %v1656 = vsel %vm692, %v1655, %v1654
        %1657 = vrot.lane.b32.xlu0 %v1656, 96
        %v1658 = vpop.permute.xlu0 %1657
        %v1659 = vsel %vm412, %v1658, 0
        %1661 = vmatprep.subr.mxu0 0.0
        %1662 = vmatpush1.msra.mxu0 %v399
        %1663 = vmatprep.subr.mxu0 0.0
        %1664 = vmatpush1.msra.mxu0 %v400
        %1665 = vmatprep.subr.mxu0 0.0
        %1666 = vmatpush1.msra.mxu0 %v401
        %1667 = vmatprep.subr.mxu0 0.0
        %1668 = vmatpush1.msra.mxu0 %v402
        %1669 = vmatprep.subr.mxu0 0.0
        %1670 = vmatpush1.msra.mxu0 0.0
        %1671 = vmatprep.subr.mxu0 0.0
        %1672 = vmatpush1.msra.mxu0 0.0
        %1673 = vmatprep.subr.mxu0 0.0
        %1674 = vmatpush1.msra.mxu0 0.0
        %1675 = vmatprep.subr.mxu0 0.0
        %1676 = vmatpush1.msra.mxu0 0.0
        %1677 = vmatprep.subr.mxu0 0.0
        %1678 = vmatpush1.msra.mxu0 0.0
        %1679 = vmatprep.subr.mxu0 0.0
        %1680 = vmatpush1.msra.mxu0 0.0
        %1681 = vmatprep.subr.mxu0 0.0
        %1682 = vmatpush1.msra.mxu0 0.0
        %1683 = vmatprep.subr.mxu0 0.0
        %1684 = vmatpush1.msra.mxu0 0.0
        %1685 = vmatprep.subr.mxu0 0.0
        %1686 = vmatpush1.msra.mxu0 0.0
        %1687 = vmatprep.subr.mxu0 0.0
        %1688 = vmatpush1.msra.mxu0 0.0
        %1689 = vmatprep.subr.mxu0 0.0
        %1690 = vmatpush1.msra.mxu0 0.0
        %1691 = vmatprep.subr.mxu0 0.0
        %1692 = vmatpush1.msra.mxu0 0.0
        %1693 = vmatprep.subr.mxu0 0.0
        %1694 = vmatpush1.msra.mxu0 0.0
        %1695 = vmatprep.subr.mxu0 0.0
        %1696 = vmatpush1.msra.mxu0 0.0
        %1697 = vmatprep.subr.mxu0 0.0
        %1698 = vmatpush1.msra.mxu0 0.0
        %1699 = vmatprep.subr.mxu0 0.0
        %1700 = vmatpush1.msra.mxu0 0.0
        %1701 = vmatprep.subr.mxu0 0.0
        %1702 = vmatpush1.msra.mxu0 0.0
        %1703 = vmatprep.subr.mxu0 0.0
        %1704 = vmatpush1.msra.mxu0 0.0
        %1705 = vmatprep.subr.mxu0 0.0
        %1706 = vmatpush1.msra.mxu0 0.0
        %1707 = vmatprep.subr.mxu0 0.0
        %1708 = vmatpush1.msra.mxu0 0.0
        %1709 = vmatprep.subr.mxu0 0.0
        %1710 = vmatpush1.msra.mxu0 0.0
        %1711 = vmatprep.subr.mxu0 0.0
        %1712 = vmatpush1.msra.mxu0 0.0
        %1713 = vmatprep.subr.mxu0 0.0
        %1714 = vmatpush1.msra.mxu0 0.0
        %1715 = vmatprep.subr.mxu0 0.0
        %1716 = vmatpush1.msra.mxu0 0.0
        %1717 = vmatprep.subr.mxu0 0.0
        %1718 = vmatpush1.msra.mxu0 0.0
        %1719 = vmatprep.subr.mxu0 0.0
        %1720 = vmatpush1.msra.mxu0 0.0
        %1721 = vmatprep.subr.mxu0 0.0
        %1722 = vmatpush1.msra.mxu0 0.0
        %1723 = vmatprep.subr.mxu0 0.0
        %1724 = vmatpush1.msra.mxu0 0.0
        %1725 = vmatprep.mubr.f32.mxu0 0.0
        %1726 = vmatmul.mubr.f32.gmra.mrb[0].mxu0 %v1659
        %v1727 = vpop.f32.mrb[0].mxu0
        %v1728 = vadd.f32 %v551, %v1727
        %v1729 = vpop.f32.mrb[0].mxu0
        %1730 = vdwg.mxu0
        %v1732 = vrot.slane %v1728, 5
        %v1733 = vrot.slane %v1728, 6
        %v1736 = vadd.f32 %v392, %v1732
        %v1737 = vadd.f32 %v393, %v1733
        %v1738 = vxor.u32 %v1736, 2147483648
        %v1739 = vxor.u32 %v1737, 2147483648
        %v1740 = vmul.f32 %v1738, 1.442695
        %v1741 = vpow.pop %v1740
        %v1742 = vmul.f32 %v1739, 1.442695
        %v1743 = vpow.pop %v1742
        %v1744 = vadd.f32 %v1741, 1.0
        %v1745 = vadd.f32 %v1743, 1.0
        %v1746 = vrcp.pop %v1744
        %v1747 = vmul.f32 1.0, %v1746
        %v1748 = vrcp.pop %v1745
        %v1749 = vmul.f32 1.0, %v1748
        %1750 = vrot.lane.b32.xlu0 %v1732, 64
        %v1751 = vpop.permute.xlu0 %1750
        %1752 = vrot.lane.b32.xlu0 %v1733, 64
        %v1753 = vpop.permute.xlu0 %1752
        %v1756 = vmul.f32 %v1747, %v1751
        %v1757 = vmul.f32 %v1749, %v1753
        %1760 = vrot.lane.b32.xlu0 %v1756, 64
        %v1761 = vpop.permute.xlu0 %1760
        %1762 = vrot.lane.b32.xlu0 %v1757, 64
        %v1763 = vpop.permute.xlu0 %1762
        %v1766 = vadd.f32 %v392, %v1761
        %v1767 = vadd.f32 %v393, %v1763
        %v1768 = vtanh.pop %v1766
        %v1769 = vtanh.pop %v1767
        %v1770 = vsub.f32 1.0, %v1747
        %v1771 = vsub.f32 1.0, %v1749
        %1774 = vrot.lane.b32.xlu0 %v1768, 96
        %v1775 = vpop.permute.xlu0 %1774
        %1776 = vrot.lane.b32.xlu0 %v1769, 96
        %v1777 = vpop.permute.xlu0 %1776
        %v1780 = vmul.f32 %v1770, %v1775
        %v1781 = vmul.f32 %v1771, %v1777
        %v1782 = vrot.slane %v1512, 1
        %v1783 = vrot.slane %v1513, 1
        %v1786 = vmul.f32 %v1747, %v1782
        %v1787 = vmul.f32 %v1749, %v1783
        %v1788 = vadd.f32 %v1780, %v1786
        %v1789 = vadd.f32 %v1781, %v1787
        %v1792 = vrot.slane %v1650, 4
        %v1793 = vrot.slane %v1651, 3
        %v1794 = vsel %vm692, %v1793, %v1792
        %1795 = vrot.lane.b32.xlu0 %v1794, 96
        %v1796 = vpop.permute.xlu0 %1795
        %v1797 = vsel %vm412, %v1796, 0
        %1799 = vmatprep.subr.mxu0 0.0
        %1800 = vmatpush1.msra.mxu0 %v394
        %1801 = vmatprep.subr.mxu0 0.0
        %1802 = vmatpush1.msra.mxu0 %v395
        %1803 = vmatprep.subr.mxu0 0.0
        %1804 = vmatpush1.msra.mxu0 %v396
        %1805 = vmatprep.subr.mxu0 0.0
        %1806 = vmatpush1.msra.mxu0 %v397
        %1807 = vmatprep.subr.mxu0 0.0
        %1808 = vmatpush1.msra.mxu0 0.0
        %1809 = vmatprep.subr.mxu0 0.0
        %1810 = vmatpush1.msra.mxu0 0.0
        %1811 = vmatprep.subr.mxu0 0.0
        %1812 = vmatpush1.msra.mxu0 0.0
        %1813 = vmatprep.subr.mxu0 0.0
        %1814 = vmatpush1.msra.mxu0 0.0
        %1815 = vmatprep.subr.mxu0 0.0
        %1816 = vmatpush1.msra.mxu0 0.0
        %1817 = vmatprep.subr.mxu0 0.0
        %1818 = vmatpush1.msra.mxu0 0.0
        %1819 = vmatprep.subr.mxu0 0.0
        %1820 = vmatpush1.msra.mxu0 0.0
        %1821 = vmatprep.subr.mxu0 0.0
        %1822 = vmatpush1.msra.mxu0 0.0
        %1823 = vmatprep.subr.mxu0 0.0
        %1824 = vmatpush1.msra.mxu0 0.0
        %1825 = vmatprep.subr.mxu0 0.0
        %1826 = vmatpush1.msra.mxu0 0.0
        %1827 = vmatprep.subr.mxu0 0.0
        %1828 = vmatpush1.msra.mxu0 0.0
        %1829 = vmatprep.subr.mxu0 0.0
        %1830 = vmatpush1.msra.mxu0 0.0
        %1831 = vmatprep.subr.mxu0 0.0
        %1832 = vmatpush1.msra.mxu0 0.0
        %1833 = vmatprep.subr.mxu0 0.0
        %1834 = vmatpush1.msra.mxu0 0.0
        %1835 = vmatprep.subr.mxu0 0.0
        %1836 = vmatpush1.msra.mxu0 0.0
        %1837 = vmatprep.subr.mxu0 0.0
        %1838 = vmatpush1.msra.mxu0 0.0
        %1839 = vmatprep.subr.mxu0 0.0
        %1840 = vmatpush1.msra.mxu0 0.0
        %1841 = vmatprep.subr.mxu0 0.0
        %1842 = vmatpush1.msra.mxu0 0.0
        %1843 = vmatprep.subr.mxu0 0.0
        %1844 = vmatpush1.msra.mxu0 0.0
        %1845 = vmatprep.subr.mxu0 0.0
        %1846 = vmatpush1.msra.mxu0 0.0
        %1847 = vmatprep.subr.mxu0 0.0
        %1848 = vmatpush1.msra.mxu0 0.0
        %1849 = vmatprep.subr.mxu0 0.0
        %1850 = vmatpush1.msra.mxu0 0.0
        %1851 = vmatprep.subr.mxu0 0.0
        %1852 = vmatpush1.msra.mxu0 0.0
        %1853 = vmatprep.subr.mxu0 0.0
        %1854 = vmatpush1.msra.mxu0 0.0
        %1855 = vmatprep.subr.mxu0 0.0
        %1856 = vmatpush1.msra.mxu0 0.0
        %1857 = vmatprep.subr.mxu0 0.0
        %1858 = vmatpush1.msra.mxu0 0.0
        %1859 = vmatprep.subr.mxu0 0.0
        %1860 = vmatpush1.msra.mxu0 0.0
        %1861 = vmatprep.subr.mxu0 0.0
        %1862 = vmatpush1.msra.mxu0 0.0
        %1863 = vmatprep.mubr.f32.mxu0 0.0
        %1864 = vmatmul.mubr.f32.gmra.mrb[0].mxu0 %v1797
        %v1865 = vpop.f32.mrb[0].mxu0
        %v1866 = vadd.f32 %v410, %v1865
        %v1867 = vpop.f32.mrb[0].mxu0
        %1868 = vdwg.mxu0
        %v1870 = vrot.slane %v1866, 3
        %v1871 = vrot.slane %v1866, 4
        %v1874 = vadd.f32 %v390, %v1870
        %v1875 = vadd.f32 %v391, %v1871
        %v1876 = vxor.u32 %v1874, 2147483648
        %v1877 = vxor.u32 %v1875, 2147483648
        %v1878 = vmul.f32 %v1876, 1.442695
        %v1879 = vpow.pop %v1878
        %v1880 = vmul.f32 %v1877, 1.442695
        %v1881 = vpow.pop %v1880
        %v1882 = vadd.f32 %v1879, 1.0
        %v1883 = vadd.f32 %v1881, 1.0
        %v1884 = vrcp.pop %v1882
        %v1885 = vmul.f32 1.0, %v1884
        %v1886 = vrcp.pop %v1883
        %v1887 = vmul.f32 1.0, %v1886
        %1888 = vrot.lane.b32.xlu0 %v1870, 64
        %v1889 = vpop.permute.xlu0 %1888
        %1890 = vrot.lane.b32.xlu0 %v1871, 64
        %v1891 = vpop.permute.xlu0 %1890
        %v1894 = vmul.f32 %v1885, %v1889
        %v1895 = vmul.f32 %v1887, %v1891
        %1898 = vrot.lane.b32.xlu0 %v1894, 64
        %v1899 = vpop.permute.xlu0 %1898
        %1900 = vrot.lane.b32.xlu0 %v1895, 64
        %v1901 = vpop.permute.xlu0 %1900
        %v1904 = vadd.f32 %v390, %v1899
        %v1905 = vadd.f32 %v391, %v1901
        %v1906 = vtanh.pop %v1904
        %v1907 = vtanh.pop %v1905
        %v1908 = vsub.f32 1.0, %v1885
        %v1909 = vsub.f32 1.0, %v1887
        %1912 = vrot.lane.b32.xlu0 %v1906, 96
        %v1913 = vpop.permute.xlu0 %1912
        %1914 = vrot.lane.b32.xlu0 %v1907, 96
        %v1915 = vpop.permute.xlu0 %1914
        %v1918 = vmul.f32 %v1908, %v1913
        %v1919 = vmul.f32 %v1909, %v1915
        %v1920 = vrot.slane %v1650, 7
        %v1921 = vrot.slane %v1651, 7
        %v1924 = vmul.f32 %v1885, %v1920
        %v1925 = vmul.f32 %v1887, %v1921
        %v1926 = vadd.f32 %v1918, %v1924
        %v1927 = vadd.f32 %v1919, %v1925
        %v1930 = vrot.slane %v1788, 3
        %v1931 = vrot.slane %v1789, 2
        %v1932 = vsel %vm692, %v1931, %v1930
        %1933 = vrot.lane.b32.xlu0 %v1932, 96
        %v1934 = vpop.permute.xlu0 %1933
        %v1935 = vsel %vm412, %v1934, 0
        %1937 = vmatprep.subr.mxu0 0.0
        %1938 = vmatpush1.msra.mxu0 %v399
        %1939 = vmatprep.subr.mxu0 0.0
        %1940 = vmatpush1.msra.mxu0 %v400
        %1941 = vmatprep.subr.mxu0 0.0
        %1942 = vmatpush1.msra.mxu0 %v401
        %1943 = vmatprep.subr.mxu0 0.0
        %1944 = vmatpush1.msra.mxu0 %v402
        %1945 = vmatprep.subr.mxu0 0.0
        %1946 = vmatpush1.msra.mxu0 0.0
        %1947 = vmatprep.subr.mxu0 0.0
        %1948 = vmatpush1.msra.mxu0 0.0
        %1949 = vmatprep.subr.mxu0 0.0
        %1950 = vmatpush1.msra.mxu0 0.0
        %1951 = vmatprep.subr.mxu0 0.0
        %1952 = vmatpush1.msra.mxu0 0.0
        %1953 = vmatprep.subr.mxu0 0.0
        %1954 = vmatpush1.msra.mxu0 0.0
        %1955 = vmatprep.subr.mxu0 0.0
        %1956 = vmatpush1.msra.mxu0 0.0
        %1957 = vmatprep.subr.mxu0 0.0
        %1958 = vmatpush1.msra.mxu0 0.0
        %1959 = vmatprep.subr.mxu0 0.0
        %1960 = vmatpush1.msra.mxu0 0.0
        %1961 = vmatprep.subr.mxu0 0.0
        %1962 = vmatpush1.msra.mxu0 0.0
        %1963 = vmatprep.subr.mxu0 0.0
        %1964 = vmatpush1.msra.mxu0 0.0
        %1965 = vmatprep.subr.mxu0 0.0
        %1966 = vmatpush1.msra.mxu0 0.0
        %1967 = vmatprep.subr.mxu0 0.0
        %1968 = vmatpush1.msra.mxu0 0.0
        %1969 = vmatprep.subr.mxu0 0.0
        %1970 = vmatpush1.msra.mxu0 0.0
        %1971 = vmatprep.subr.mxu0 0.0
        %1972 = vmatpush1.msra.mxu0 0.0
        %1973 = vmatprep.subr.mxu0 0.0
        %1974 = vmatpush1.msra.mxu0 0.0
        %1975 = vmatprep.subr.mxu0 0.0
        %1976 = vmatpush1.msra.mxu0 0.0
        %1977 = vmatprep.subr.mxu0 0.0
        %1978 = vmatpush1.msra.mxu0 0.0
        %1979 = vmatprep.subr.mxu0 0.0
        %1980 = vmatpush1.msra.mxu0 0.0
        %1981 = vmatprep.subr.mxu0 0.0
        %1982 = vmatpush1.msra.mxu0 0.0
        %1983 = vmatprep.subr.mxu0 0.0
        %1984 = vmatpush1.msra.mxu0 0.0
        %1985 = vmatprep.subr.mxu0 0.0
        %1986 = vmatpush1.msra.mxu0 0.0
        %1987 = vmatprep.subr.mxu0 0.0
        %1988 = vmatpush1.msra.mxu0 0.0
        %1989 = vmatprep.subr.mxu0 0.0
        %1990 = vmatpush1.msra.mxu0 0.0
        %1991 = vmatprep.subr.mxu0 0.0
        %1992 = vmatpush1.msra.mxu0 0.0
        %1993 = vmatprep.subr.mxu0 0.0
        %1994 = vmatpush1.msra.mxu0 0.0
        %1995 = vmatprep.subr.mxu0 0.0
        %1996 = vmatpush1.msra.mxu0 0.0
        %1997 = vmatprep.subr.mxu0 0.0
        %1998 = vmatpush1.msra.mxu0 0.0
        %1999 = vmatprep.subr.mxu0 0.0
        %2000 = vmatpush1.msra.mxu0 0.0
        %2001 = vmatprep.mubr.f32.mxu0 0.0
        %2002 = vmatmul.mubr.f32.gmra.mrb[0].mxu0 %v1935
        %v2003 = vpop.f32.mrb[0].mxu0
        %v2004 = vadd.f32 %v551, %v2003
        %v2005 = vpop.f32.mrb[0].mxu0
        %2006 = vdwg.mxu0
        %v2008 = vrot.slane %v2004, 6
        %v2009 = vrot.slane %v2004, 7
        %v2012 = vadd.f32 %v392, %v2008
        %v2013 = vadd.f32 %v393, %v2009
        %v2014 = vxor.u32 %v2012, 2147483648
        %v2015 = vxor.u32 %v2013, 2147483648
        %v2016 = vmul.f32 %v2014, 1.442695
        %v2017 = vpow.pop %v2016
        %v2018 = vmul.f32 %v2015, 1.442695
        %v2019 = vpow.pop %v2018
        %v2020 = vadd.f32 %v2017, 1.0
        %v2021 = vadd.f32 %v2019, 1.0
        %v2022 = vrcp.pop %v2020
        %v2023 = vmul.f32 1.0, %v2022
        %v2024 = vrcp.pop %v2021
        %v2025 = vmul.f32 1.0, %v2024
        %2026 = vrot.lane.b32.xlu0 %v2008, 64
        %v2027 = vpop.permute.xlu0 %2026
        %2028 = vrot.lane.b32.xlu0 %v2009, 64
        %v2029 = vpop.permute.xlu0 %2028
        %v2032 = vmul.f32 %v2023, %v2027
        %v2033 = vmul.f32 %v2025, %v2029
        %2036 = vrot.lane.b32.xlu0 %v2032, 64
        %v2037 = vpop.permute.xlu0 %2036
        %2038 = vrot.lane.b32.xlu0 %v2033, 64
        %v2039 = vpop.permute.xlu0 %2038
        %v2042 = vadd.f32 %v392, %v2037
        %v2043 = vadd.f32 %v393, %v2039
        %v2044 = vtanh.pop %v2042
        %v2045 = vtanh.pop %v2043
        %v2046 = vsub.f32 1.0, %v2023
        %v2047 = vsub.f32 1.0, %v2025
        %2050 = vrot.lane.b32.xlu0 %v2044, 96
        %v2051 = vpop.permute.xlu0 %2050
        %2052 = vrot.lane.b32.xlu0 %v2045, 96
        %v2053 = vpop.permute.xlu0 %2052
        %v2056 = vmul.f32 %v2046, %v2051
        %v2057 = vmul.f32 %v2047, %v2053
        %v2058 = vrot.slane %v1788, 1
        %v2059 = vrot.slane %v1789, 1
        %v2062 = vmul.f32 %v2023, %v2058
        %v2063 = vmul.f32 %v2025, %v2059
        %v2064 = vadd.f32 %v2056, %v2062
        %v2065 = vadd.f32 %v2057, %v2063
        %v2068 = vrot.slane %v1926, 5
        %v2069 = vrot.slane %v1927, 4
        %v2070 = vsel %vm692, %v2069, %v2068
        %2071 = vrot.lane.b32.xlu0 %v2070, 96
        %v2072 = vpop.permute.xlu0 %2071
        %v2073 = vsel %vm412, %v2072, 0
        %2075 = vmatprep.subr.mxu0 0.0
        %2076 = vmatpush1.msra.mxu0 %v394
        %2077 = vmatprep.subr.mxu0 0.0
        %2078 = vmatpush1.msra.mxu0 %v395
        %2079 = vmatprep.subr.mxu0 0.0
        %2080 = vmatpush1.msra.mxu0 %v396
        %2081 = vmatprep.subr.mxu0 0.0
        %2082 = vmatpush1.msra.mxu0 %v397
        %2083 = vmatprep.subr.mxu0 0.0
        %2084 = vmatpush1.msra.mxu0 0.0
        %2085 = vmatprep.subr.mxu0 0.0
        %2086 = vmatpush1.msra.mxu0 0.0
        %2087 = vmatprep.subr.mxu0 0.0
        %2088 = vmatpush1.msra.mxu0 0.0
        %2089 = vmatprep.subr.mxu0 0.0
        %2090 = vmatpush1.msra.mxu0 0.0
        %2091 = vmatprep.subr.mxu0 0.0
        %2092 = vmatpush1.msra.mxu0 0.0
        %2093 = vmatprep.subr.mxu0 0.0
        %2094 = vmatpush1.msra.mxu0 0.0
        %2095 = vmatprep.subr.mxu0 0.0
        %2096 = vmatpush1.msra.mxu0 0.0
        %2097 = vmatprep.subr.mxu0 0.0
        %2098 = vmatpush1.msra.mxu0 0.0
        %2099 = vmatprep.subr.mxu0 0.0
        %2100 = vmatpush1.msra.mxu0 0.0
        %2101 = vmatprep.subr.mxu0 0.0
        %2102 = vmatpush1.msra.mxu0 0.0
        %2103 = vmatprep.subr.mxu0 0.0
        %2104 = vmatpush1.msra.mxu0 0.0
        %2105 = vmatprep.subr.mxu0 0.0
        %2106 = vmatpush1.msra.mxu0 0.0
        %2107 = vmatprep.subr.mxu0 0.0
        %2108 = vmatpush1.msra.mxu0 0.0
        %2109 = vmatprep.subr.mxu0 0.0
        %2110 = vmatpush1.msra.mxu0 0.0
        %2111 = vmatprep.subr.mxu0 0.0
        %2112 = vmatpush1.msra.mxu0 0.0
        %2113 = vmatprep.subr.mxu0 0.0
        %2114 = vmatpush1.msra.mxu0 0.0
        %2115 = vmatprep.subr.mxu0 0.0
        %2116 = vmatpush1.msra.mxu0 0.0
        %2117 = vmatprep.subr.mxu0 0.0
        %2118 = vmatpush1.msra.mxu0 0.0
        %2119 = vmatprep.subr.mxu0 0.0
        %2120 = vmatpush1.msra.mxu0 0.0
        %2121 = vmatprep.subr.mxu0 0.0
        %2122 = vmatpush1.msra.mxu0 0.0
        %2123 = vmatprep.subr.mxu0 0.0
        %2124 = vmatpush1.msra.mxu0 0.0
        %2125 = vmatprep.subr.mxu0 0.0
        %2126 = vmatpush1.msra.mxu0 0.0
        %2127 = vmatprep.subr.mxu0 0.0
        %2128 = vmatpush1.msra.mxu0 0.0
        %2129 = vmatprep.subr.mxu0 0.0
        %2130 = vmatpush1.msra.mxu0 0.0
        %2131 = vmatprep.subr.mxu0 0.0
        %2132 = vmatpush1.msra.mxu0 0.0
        %2133 = vmatprep.subr.mxu0 0.0
        %2134 = vmatpush1.msra.mxu0 0.0
        %2135 = vmatprep.subr.mxu0 0.0
        %2136 = vmatpush1.msra.mxu0 0.0
        %2137 = vmatprep.subr.mxu0 0.0
        %2138 = vmatpush1.msra.mxu0 0.0
        %2139 = vmatprep.mubr.f32.mxu0 0.0
        %2140 = vmatmul.mubr.f32.gmra.mrb[0].mxu0 %v2073
        %v2141 = vpop.f32.mrb[0].mxu0
        %v2142 = vadd.f32 %v410, %v2141
        %v2143 = vpop.f32.mrb[0].mxu0
        %2144 = vdwg.mxu0
        %v2146 = vrot.slane %v2142, 2
        %v2147 = vrot.slane %v2142, 3
        %v2150 = vadd.f32 %v390, %v2146
        %v2151 = vadd.f32 %v391, %v2147
        %v2152 = vxor.u32 %v2150, 2147483648
        %v2153 = vxor.u32 %v2151, 2147483648
        %v2154 = vmul.f32 %v2152, 1.442695
        %v2155 = vpow.pop %v2154
        %v2156 = vmul.f32 %v2153, 1.442695
        %v2157 = vpow.pop %v2156
        %v2158 = vadd.f32 %v2155, 1.0
        %v2159 = vadd.f32 %v2157, 1.0
        %v2160 = vrcp.pop %v2158
        %v2161 = vmul.f32 1.0, %v2160
        %v2162 = vrcp.pop %v2159
        %v2163 = vmul.f32 1.0, %v2162
        %2164 = vrot.lane.b32.xlu0 %v2146, 64
        %v2165 = vpop.permute.xlu0 %2164
        %2166 = vrot.lane.b32.xlu0 %v2147, 64
        %v2167 = vpop.permute.xlu0 %2166
        %v2170 = vmul.f32 %v2161, %v2165
        %v2171 = vmul.f32 %v2163, %v2167
        %2174 = vrot.lane.b32.xlu0 %v2170, 64
        %v2175 = vpop.permute.xlu0 %2174
        %2176 = vrot.lane.b32.xlu0 %v2171, 64
        %v2177 = vpop.permute.xlu0 %2176
        %v2180 = vadd.f32 %v390, %v2175
        %v2181 = vadd.f32 %v391, %v2177
        %v2182 = vtanh.pop %v2180
        %v2183 = vtanh.pop %v2181
        %v2184 = vsub.f32 1.0, %v2161
        %v2185 = vsub.f32 1.0, %v2163
        %2188 = vrot.lane.b32.xlu0 %v2182, 96
        %v2189 = vpop.permute.xlu0 %2188
        %2190 = vrot.lane.b32.xlu0 %v2183, 96
        %v2191 = vpop.permute.xlu0 %2190
        %v2194 = vmul.f32 %v2184, %v2189
        %v2195 = vmul.f32 %v2185, %v2191
        %v2196 = vrot.slane %v1926, 7
        %v2197 = vrot.slane %v1927, 7
        %v2200 = vmul.f32 %v2161, %v2196
        %v2201 = vmul.f32 %v2163, %v2197
        %v2202 = vadd.f32 %v2194, %v2200
        %v2203 = vadd.f32 %v2195, %v2201
        %v2206 = vrot.slane %v2064, 2
        %v2207 = vrot.slane %v2065, 1
        %v2208 = vsel %vm692, %v2207, %v2206
        %2209 = vrot.lane.b32.xlu0 %v2208, 96
        %v2210 = vpop.permute.xlu0 %2209
        %v2211 = vsel %vm412, %v2210, 0
        %2213 = vmatprep.subr.mxu0 0.0
        %2214 = vmatpush1.msra.mxu0 %v399
        %2215 = vmatprep.subr.mxu0 0.0
        %2216 = vmatpush1.msra.mxu0 %v400
        %2217 = vmatprep.subr.mxu0 0.0
        %2218 = vmatpush1.msra.mxu0 %v401
        %2219 = vmatprep.subr.mxu0 0.0
        %2220 = vmatpush1.msra.mxu0 %v402
        %2221 = vmatprep.subr.mxu0 0.0
        %2222 = vmatpush1.msra.mxu0 0.0
        %2223 = vmatprep.subr.mxu0 0.0
        %2224 = vmatpush1.msra.mxu0 0.0
        %2225 = vmatprep.subr.mxu0 0.0
        %2226 = vmatpush1.msra.mxu0 0.0
        %2227 = vmatprep.subr.mxu0 0.0
        %2228 = vmatpush1.msra.mxu0 0.0
        %2229 = vmatprep.subr.mxu0 0.0
        %2230 = vmatpush1.msra.mxu0 0.0
        %2231 = vmatprep.subr.mxu0 0.0
        %2232 = vmatpush1.msra.mxu0 0.0
        %2233 = vmatprep.subr.mxu0 0.0
        %2234 = vmatpush1.msra.mxu0 0.0
        %2235 = vmatprep.subr.mxu0 0.0
        %2236 = vmatpush1.msra.mxu0 0.0
        %2237 = vmatprep.subr.mxu0 0.0
        %2238 = vmatpush1.msra.mxu0 0.0
        %2239 = vmatprep.subr.mxu0 0.0
        %2240 = vmatpush1.msra.mxu0 0.0
        %2241 = vmatprep.subr.mxu0 0.0
        %2242 = vmatpush1.msra.mxu0 0.0
        %2243 = vmatprep.subr.mxu0 0.0
        %2244 = vmatpush1.msra.mxu0 0.0
        %2245 = vmatprep.subr.mxu0 0.0
        %2246 = vmatpush1.msra.mxu0 0.0
        %2247 = vmatprep.subr.mxu0 0.0
        %2248 = vmatpush1.msra.mxu0 0.0
        %2249 = vmatprep.subr.mxu0 0.0
        %2250 = vmatpush1.msra.mxu0 0.0
        %2251 = vmatprep.subr.mxu0 0.0
        %2252 = vmatpush1.msra.mxu0 0.0
        %2253 = vmatprep.subr.mxu0 0.0
        %2254 = vmatpush1.msra.mxu0 0.0
        %2255 = vmatprep.subr.mxu0 0.0
        %2256 = vmatpush1.msra.mxu0 0.0
        %2257 = vmatprep.subr.mxu0 0.0
        %2258 = vmatpush1.msra.mxu0 0.0
        %2259 = vmatprep.subr.mxu0 0.0
        %2260 = vmatpush1.msra.mxu0 0.0
        %2261 = vmatprep.subr.mxu0 0.0
        %2262 = vmatpush1.msra.mxu0 0.0
        %2263 = vmatprep.subr.mxu0 0.0
        %2264 = vmatpush1.msra.mxu0 0.0
        %2265 = vmatprep.subr.mxu0 0.0
        %2266 = vmatpush1.msra.mxu0 0.0
        %2267 = vmatprep.subr.mxu0 0.0
        %2268 = vmatpush1.msra.mxu0 0.0
        %2269 = vmatprep.subr.mxu0 0.0
        %2270 = vmatpush1.msra.mxu0 0.0
        %2271 = vmatprep.subr.mxu0 0.0
        %2272 = vmatpush1.msra.mxu0 0.0
        %2273 = vmatprep.subr.mxu0 0.0
        %2274 = vmatpush1.msra.mxu0 0.0
        %2275 = vmatprep.subr.mxu0 0.0
        %2276 = vmatpush1.msra.mxu0 0.0
        %2277 = vmatprep.mubr.f32.mxu0 0.0
        %2278 = vmatmul.mubr.f32.gmra.mrb[0].mxu0 %v2211
        %v2279 = vpop.f32.mrb[0].mxu0
        %v2280 = vadd.f32 %v551, %v2279
        %v2281 = vpop.f32.mrb[0].mxu0
        %2282 = vdwg.mxu0
        %v2284 = vrot.slane %v2280, 7
        %v2287 = vadd.f32 %v392, %v2284
        %v2288 = vadd.f32 %v393, %v2280
        %v2289 = vxor.u32 %v2287, 2147483648
        %v2290 = vxor.u32 %v2288, 2147483648
        %v2291 = vmul.f32 %v2289, 1.442695
        %v2292 = vpow.pop %v2291
        %v2293 = vmul.f32 %v2290, 1.442695
        %v2294 = vpow.pop %v2293
        %v2295 = vadd.f32 %v2292, 1.0
        %v2296 = vadd.f32 %v2294, 1.0
        %v2297 = vrcp.pop %v2295
        %v2298 = vmul.f32 1.0, %v2297
        %v2299 = vrcp.pop %v2296
        %v2300 = vmul.f32 1.0, %v2299
        %2301 = vrot.lane.b32.xlu0 %v2284, 64
        %v2302 = vpop.permute.xlu0 %2301
        %2303 = vrot.lane.b32.xlu0 %v2280, 64
        %v2304 = vpop.permute.xlu0 %2303
        %v2307 = vmul.f32 %v2298, %v2302
        %v2308 = vmul.f32 %v2300, %v2304
        %2311 = vrot.lane.b32.xlu0 %v2307, 64
        %v2312 = vpop.permute.xlu0 %2311
        %2313 = vrot.lane.b32.xlu0 %v2308, 64
        %v2314 = vpop.permute.xlu0 %2313
        %v2317 = vadd.f32 %v392, %v2312
        %v2318 = vadd.f32 %v393, %v2314
        %v2319 = vtanh.pop %v2317
        %v2320 = vtanh.pop %v2318
        %v2321 = vsub.f32 1.0, %v2298
        %v2322 = vsub.f32 1.0, %v2300
        %2325 = vrot.lane.b32.xlu0 %v2319, 96
        %v2326 = vpop.permute.xlu0 %2325
        %2327 = vrot.lane.b32.xlu0 %v2320, 96
        %v2328 = vpop.permute.xlu0 %2327
        %v2331 = vmul.f32 %v2321, %v2326
        %v2332 = vmul.f32 %v2322, %v2328
        %v2333 = vrot.slane %v2064, 1
        %v2336 = vmul.f32 %v2298, %v2333
        %v2337 = vmul.f32 %v2300, %v2207
        %v2338 = vadd.f32 %v2331, %v2336
        %v2339 = vadd.f32 %v2332, %v2337
        %v2342 = vrot.slane %v2202, 6
        %v2343 = vrot.slane %v2203, 5
        %v2344 = vsel %vm692, %v2343, %v2342
        %2345 = vrot.lane.b32.xlu0 %v2344, 96
        %v2346 = vpop.permute.xlu0 %2345
        %v2347 = vsel %vm412, %v2346, 0
        %2349 = vmatprep.subr.mxu0 0.0
        %2350 = vmatpush1.msra.mxu0 %v394
        %2351 = vmatprep.subr.mxu0 0.0
        %2352 = vmatpush1.msra.mxu0 %v395
        %2353 = vmatprep.subr.mxu0 0.0
        %2354 = vmatpush1.msra.mxu0 %v396
        %2355 = vmatprep.subr.mxu0 0.0
        %2356 = vmatpush1.msra.mxu0 %v397
        %2357 = vmatprep.subr.mxu0 0.0
        %2358 = vmatpush1.msra.mxu0 0.0
        %2359 = vmatprep.subr.mxu0 0.0
        %2360 = vmatpush1.msra.mxu0 0.0
        %2361 = vmatprep.subr.mxu0 0.0
        %2362 = vmatpush1.msra.mxu0 0.0
        %2363 = vmatprep.subr.mxu0 0.0
        %2364 = vmatpush1.msra.mxu0 0.0
        %2365 = vmatprep.subr.mxu0 0.0
        %2366 = vmatpush1.msra.mxu0 0.0
        %2367 = vmatprep.subr.mxu0 0.0
        %2368 = vmatpush1.msra.mxu0 0.0
        %2369 = vmatprep.subr.mxu0 0.0
        %2370 = vmatpush1.msra.mxu0 0.0
        %2371 = vmatprep.subr.mxu0 0.0
        %2372 = vmatpush1.msra.mxu0 0.0
        %2373 = vmatprep.subr.mxu0 0.0
        %2374 = vmatpush1.msra.mxu0 0.0
        %2375 = vmatprep.subr.mxu0 0.0
        %2376 = vmatpush1.msra.mxu0 0.0
        %2377 = vmatprep.subr.mxu0 0.0
        %2378 = vmatpush1.msra.mxu0 0.0
        %2379 = vmatprep.subr.mxu0 0.0
        %2380 = vmatpush1.msra.mxu0 0.0
        %2381 = vmatprep.subr.mxu0 0.0
        %2382 = vmatpush1.msra.mxu0 0.0
        %2383 = vmatprep.subr.mxu0 0.0
        %2384 = vmatpush1.msra.mxu0 0.0
        %2385 = vmatprep.subr.mxu0 0.0
        %2386 = vmatpush1.msra.mxu0 0.0
        %2387 = vmatprep.subr.mxu0 0.0
        %2388 = vmatpush1.msra.mxu0 0.0
        %2389 = vmatprep.subr.mxu0 0.0
        %2390 = vmatpush1.msra.mxu0 0.0
        %2391 = vmatprep.subr.mxu0 0.0
        %2392 = vmatpush1.msra.mxu0 0.0
        %2393 = vmatprep.subr.mxu0 0.0
        %2394 = vmatpush1.msra.mxu0 0.0
        %2395 = vmatprep.subr.mxu0 0.0
        %2396 = vmatpush1.msra.mxu0 0.0
        %2397 = vmatprep.subr.mxu0 0.0
        %2398 = vmatpush1.msra.mxu0 0.0
        %2399 = vmatprep.subr.mxu0 0.0
        %2400 = vmatpush1.msra.mxu0 0.0
        %2401 = vmatprep.subr.mxu0 0.0
        %2402 = vmatpush1.msra.mxu0 0.0
        %2403 = vmatprep.subr.mxu0 0.0
        %2404 = vmatpush1.msra.mxu0 0.0
        %2405 = vmatprep.subr.mxu0 0.0
        %2406 = vmatpush1.msra.mxu0 0.0
        %2407 = vmatprep.subr.mxu0 0.0
        %2408 = vmatpush1.msra.mxu0 0.0
        %2409 = vmatprep.subr.mxu0 0.0
        %2410 = vmatpush1.msra.mxu0 0.0
        %2411 = vmatprep.subr.mxu0 0.0
        %2412 = vmatpush1.msra.mxu0 0.0
        %2413 = vmatprep.mubr.f32.mxu0 0.0
        %2414 = vmatmul.mubr.f32.gmra.mrb[0].mxu0 %v2347
        %v2415 = vpop.f32.mrb[0].mxu0
        %v2416 = vadd.f32 %v410, %v2415
        %v2417 = vpop.f32.mrb[0].mxu0
        %2418 = vdwg.mxu0
        %v2420 = vrot.slane %v2416, 1
        %v2421 = vrot.slane %v2416, 2
        %v2424 = vadd.f32 %v390, %v2420
        %v2425 = vadd.f32 %v391, %v2421
        %v2426 = vxor.u32 %v2424, 2147483648
        %v2427 = vxor.u32 %v2425, 2147483648
        %v2428 = vmul.f32 %v2426, 1.442695
        %v2429 = vpow.pop %v2428
        %v2430 = vmul.f32 %v2427, 1.442695
        %v2431 = vpow.pop %v2430
        %v2432 = vadd.f32 %v2429, 1.0
        %v2433 = vadd.f32 %v2431, 1.0
        %v2434 = vrcp.pop %v2432
        %v2435 = vmul.f32 1.0, %v2434
        %v2436 = vrcp.pop %v2433
        %v2437 = vmul.f32 1.0, %v2436
        %2438 = vrot.lane.b32.xlu0 %v2420, 64
        %v2439 = vpop.permute.xlu0 %2438
        %2440 = vrot.lane.b32.xlu0 %v2421, 64
        %v2441 = vpop.permute.xlu0 %2440
        %v2444 = vmul.f32 %v2435, %v2439
        %v2445 = vmul.f32 %v2437, %v2441
        %2448 = vrot.lane.b32.xlu0 %v2444, 64
        %v2449 = vpop.permute.xlu0 %2448
        %2450 = vrot.lane.b32.xlu0 %v2445, 64
        %v2451 = vpop.permute.xlu0 %2450
        %v2454 = vadd.f32 %v390, %v2449
        %v2455 = vadd.f32 %v391, %v2451
        %v2456 = vtanh.pop %v2454
        %v2457 = vtanh.pop %v2455
        %v2458 = vsub.f32 1.0, %v2435
        %v2459 = vsub.f32 1.0, %v2437
        %2462 = vrot.lane.b32.xlu0 %v2456, 96
        %v2463 = vpop.permute.xlu0 %2462
        %2464 = vrot.lane.b32.xlu0 %v2457, 96
        %v2465 = vpop.permute.xlu0 %2464
        %v2468 = vmul.f32 %v2458, %v2463
        %v2469 = vmul.f32 %v2459, %v2465
        %v2470 = vrot.slane %v2202, 7
        %v2471 = vrot.slane %v2203, 7
        %v2474 = vmul.f32 %v2435, %v2470
        %v2475 = vmul.f32 %v2437, %v2471
        %v2476 = vadd.f32 %v2468, %v2474
        %v2477 = vadd.f32 %v2469, %v2475
        %v2480 = vrot.slane %v2338, 1
        %v2481 = vsel %vm692, %v2339, %v2480
        %2482 = vrot.lane.b32.xlu0 %v2481, 96
        %v2483 = vpop.permute.xlu0 %2482
        %v2484 = vsel %vm412, %v2483, 0
        %2486 = vmatprep.subr.mxu0 0.0
        %2487 = vmatpush1.msra.mxu0 %v399
        %2488 = vmatprep.subr.mxu0 0.0
        %2489 = vmatpush1.msra.mxu0 %v400
        %2490 = vmatprep.subr.mxu0 0.0
        %2491 = vmatpush1.msra.mxu0 %v401
        %2492 = vmatprep.subr.mxu0 0.0
        %2493 = vmatpush1.msra.mxu0 %v402
        %2494 = vmatprep.subr.mxu0 0.0
        %2495 = vmatpush1.msra.mxu0 0.0
        %2496 = vmatprep.subr.mxu0 0.0
        %2497 = vmatpush1.msra.mxu0 0.0
        %2498 = vmatprep.subr.mxu0 0.0
        %2499 = vmatpush1.msra.mxu0 0.0
        %2500 = vmatprep.subr.mxu0 0.0
        %2501 = vmatpush1.msra.mxu0 0.0
        %2502 = vmatprep.subr.mxu0 0.0
        %2503 = vmatpush1.msra.mxu0 0.0
        %2504 = vmatprep.subr.mxu0 0.0
        %2505 = vmatpush1.msra.mxu0 0.0
        %2506 = vmatprep.subr.mxu0 0.0
        %2507 = vmatpush1.msra.mxu0 0.0
        %2508 = vmatprep.subr.mxu0 0.0
        %2509 = vmatpush1.msra.mxu0 0.0
        %2510 = vmatprep.subr.mxu0 0.0
        %2511 = vmatpush1.msra.mxu0 0.0
        %2512 = vmatprep.subr.mxu0 0.0
        %2513 = vmatpush1.msra.mxu0 0.0
        %2514 = vmatprep.subr.mxu0 0.0
        %2515 = vmatpush1.msra.mxu0 0.0
        %2516 = vmatprep.subr.mxu0 0.0
        %2517 = vmatpush1.msra.mxu0 0.0
        %2518 = vmatprep.subr.mxu0 0.0
        %2519 = vmatpush1.msra.mxu0 0.0
        %2520 = vmatprep.subr.mxu0 0.0
        %2521 = vmatpush1.msra.mxu0 0.0
        %2522 = vmatprep.subr.mxu0 0.0
        %2523 = vmatpush1.msra.mxu0 0.0
        %2524 = vmatprep.subr.mxu0 0.0
        %2525 = vmatpush1.msra.mxu0 0.0
        %2526 = vmatprep.subr.mxu0 0.0
        %2527 = vmatpush1.msra.mxu0 0.0
        %2528 = vmatprep.subr.mxu0 0.0
        %2529 = vmatpush1.msra.mxu0 0.0
        %2530 = vmatprep.subr.mxu0 0.0
        %2531 = vmatpush1.msra.mxu0 0.0
        %2532 = vmatprep.subr.mxu0 0.0
        %2533 = vmatpush1.msra.mxu0 0.0
        %2534 = vmatprep.subr.mxu0 0.0
        %2535 = vmatpush1.msra.mxu0 0.0
        %2536 = vmatprep.subr.mxu0 0.0
        %2537 = vmatpush1.msra.mxu0 0.0
        %2538 = vmatprep.subr.mxu0 0.0
        %2539 = vmatpush1.msra.mxu0 0.0
        %2540 = vmatprep.subr.mxu0 0.0
        %2541 = vmatpush1.msra.mxu0 0.0
        %2542 = vmatprep.subr.mxu0 0.0
        %2543 = vmatpush1.msra.mxu0 0.0
        %2544 = vmatprep.subr.mxu0 0.0
        %2545 = vmatpush1.msra.mxu0 0.0
        %2546 = vmatprep.subr.mxu0 0.0
        %2547 = vmatpush1.msra.mxu0 0.0
        %2548 = vmatprep.subr.mxu0 0.0
        %2549 = vmatpush1.msra.mxu0 0.0
        %2550 = vmatprep.mubr.f32.mxu0 0.0
        %2551 = vmatmul.mubr.f32.gmra.mrb[0].mxu0 %v2484
        %v2552 = vpop.f32.mrb[0].mxu0
        %v2553 = vadd.f32 %v551, %v2552
        %v2554 = vpop.f32.mrb[0].mxu0
        %2555 = vdwg.mxu0
        %v2557 = vrot.slane %v2553, 1
        %v2560 = vadd.f32 %v392, %v2553
        %v2561 = vadd.f32 %v393, %v2557
        %v2562 = vxor.u32 %v2560, 2147483648
        %v2563 = vxor.u32 %v2561, 2147483648
        %v2564 = vmul.f32 %v2562, 1.442695
        %v2565 = vpow.pop %v2564
        %v2566 = vmul.f32 %v2563, 1.442695
        %v2567 = vpow.pop %v2566
        %v2568 = vadd.f32 %v2565, 1.0
        %v2569 = vadd.f32 %v2567, 1.0
        %v2570 = vrcp.pop %v2568
        %v2571 = vmul.f32 1.0, %v2570
        %v2572 = vrcp.pop %v2569
        %v2573 = vmul.f32 1.0, %v2572
        %2574 = vrot.lane.b32.xlu0 %v2553, 64
        %v2575 = vpop.permute.xlu0 %2574
        %2576 = vrot.lane.b32.xlu0 %v2557, 64
        %v2577 = vpop.permute.xlu0 %2576
        %v2580 = vmul.f32 %v2571, %v2575
        %v2581 = vmul.f32 %v2573, %v2577
        %2584 = vrot.lane.b32.xlu0 %v2580, 64
        %v2585 = vpop.permute.xlu0 %2584
        %2586 = vrot.lane.b32.xlu0 %v2581, 64
        %v2587 = vpop.permute.xlu0 %2586
        %v2590 = vadd.f32 %v392, %v2585
        %v2591 = vadd.f32 %v393, %v2587
        %v2592 = vtanh.pop %v2590
        %v2593 = vtanh.pop %v2591
        %v2594 = vsub.f32 1.0, %v2571
        %v2595 = vsub.f32 1.0, %v2573
        %2598 = vrot.lane.b32.xlu0 %v2592, 96
        %v2599 = vpop.permute.xlu0 %2598
        %2600 = vrot.lane.b32.xlu0 %v2593, 96
        %v2601 = vpop.permute.xlu0 %2600
        %v2604 = vmul.f32 %v2594, %v2599
        %v2605 = vmul.f32 %v2595, %v2601
        %v2606 = vrot.slane %v2339, 1
        %v2609 = vmul.f32 %v2571, %v2480
        %v2610 = vmul.f32 %v2573, %v2606
        %v2611 = vadd.f32 %v2604, %v2609
        %v2612 = vadd.f32 %v2605, %v2610
        %v2615 = vrot.slane %v2477, 7
        %2616 = vrot.lane.b32.xlu0 %v2476, 96
        %v2617 = vpop.permute.xlu0 %2616
        %2618 = vrot.lane.b32.xlu0 %v2615, 96
        %v2619 = vpop.permute.xlu0 %2618
        %vm2622 = vcmask 261127
        %2623 = vst.msk [vmem:[#allocation2 - $0x7] sm:$0x80] %vm2622, %v2617
        %vm2624 = vcmask 253952
        %2625 = vst.msk [vmem:[#allocation2 + $0x1] sm:$0x1] %vm2624, %v2619
        %v2628 = vrot.slane %v2612, 7
        %v2629 = vsel %vm692, %v2628, %v2611
        %2630 = vrot.lane.b32.xlu0 %v2629, 96
        %v2631 = vpop.permute.xlu0 %2630
        %vm2633 = vcmask 254976
        %2634 = vst.msk [vmem:[#allocation3] sm:$0x3] %vm2633, %v2631
        %vm2635 = vcmask 1040384
        %v2636 = vsel %vm2635, %v545, %v823
        %v2637 = vsel %vm2635, %v546, %v824
        %vm2638 = vcmask 1041408
        %v2639 = vsel %vm2638, %v2636, %v1098
        %v2640 = vsel %vm2638, %v2637, %v1099
        %vm2641 = vcmask 1042432
        %v2642 = vsel %vm2641, %v2639, %v1374
        %v2643 = vsel %vm2641, %v2640, %v1375
        %vm2644 = vcmask 1043456
        %v2645 = vsel %vm2644, %v2642, %v1650
        %v2646 = vsel %vm2644, %v2643, %v1651
        %vm2647 = vcmask 1044480
        %v2648 = vsel %vm2647, %v2645, %v1926
        %v2649 = vsel %vm2647, %v2646, %v1927
        %vm2650 = vcmask 1045504
        %v2651 = vsel %vm2650, %v2648, %v2202
        %v2652 = vsel %vm2650, %v2649, %v2203
        %vm2653 = vcmask 1046528
        %v2654 = vsel %vm2653, %v2651, %v2476
        %v2655 = vsel %vm2653, %v2652, %v2477
        %2658 = vrot.lane.b32.xlu0 %v2654, 96
        %v2659 = vpop.permute.xlu0 %2658
        %2660 = vrot.lane.b32.xlu0 %v2655, 96
        %v2661 = vpop.permute.xlu0 %2660
        %2664 = vst.msk [vmem:[%s374] sm:$0xff] %vm412, %v2659
        %2665 = vst.msk [vmem:[%s374 + $0x8] sm:$0xff] %vm412, %v2661
        %v2666 = vsel %vm2635, %v2611, %v2338
        %v2667 = vsel %vm2635, %v2612, %v2339
        %v2668 = vsel %vm2638, %v2666, %v2064
        %v2669 = vsel %vm2638, %v2667, %v2065
        %v2670 = vsel %vm2641, %v2668, %v1788
        %v2671 = vsel %vm2641, %v2669, %v1789
        %v2672 = vsel %vm2644, %v2670, %v1512
        %v2673 = vsel %vm2644, %v2671, %v1513
        %v2674 = vsel %vm2647, %v2672, %v1236
        %v2675 = vsel %vm2647, %v2673, %v1237
        %v2676 = vsel %vm2650, %v2674, %v961
        %v2677 = vsel %vm2650, %v2675, %v962
        %v2678 = vsel %vm2653, %v2676, %v687
        %v2679 = vsel %vm2653, %v2677, %v688
        %2682 = vrot.lane.b32.xlu0 %v2678, 96
        %v2683 = vpop.permute.xlu0 %2682
        %2684 = vrot.lane.b32.xlu0 %v2679, 96
        %v2685 = vpop.permute.xlu0 %2684
        %2688 = vst.msk [vmem:[%s380] sm:$0xff] %vm412, %v2683
        %2689 = vst.msk [vmem:[%s380 + $0x8] sm:$0xff] %vm412, %v2685
        %s2690 = sand.u32 %s165, 1
        %s2691 = sand.u32 %s165, 1
        %s2692 = smul.addr %s2691, 16
        %s2693 = scalar_lea.vmem [#allocation6], %s2692
        %s2694 = sand.u32 %s193, 1
        %s2695 = sand.u32 %s193, 1
        %s2696 = smul.addr %s2695, 16
        %s2697 = scalar_lea.vmem [#allocation7], %s2696
        // Predicated region
        $region125: #{gru_encoder_forward.7} parent=111 // pred_check
          %p2698 = pneg %p175
        $region126: #{gru_encoder_forward.7} parent=111 // pred_check_branch
          %2700 = sbr.rel (%p2698) target = $region128
        $region127: #{gru_encoder_forward.7} parent=111 // pred_region
          %s2701 = smul.addr %s19, 8
          %s2702 = scalar_lea.vmem %s6, %s2701
          // Predicated region
          $region129: #{gru_encoder_forward.7} parent=127 // pred_check
            _
          $region130: #{gru_encoder_forward.7} parent=127 // pred_check_branch
            %2704 = sbr.rel (0) target = $region132
          $region131: #{gru_encoder_forward.7} parent=127 // pred_region
            // Predicated region
            $region133: #{gru_encoder_forward.7} parent=131 // pred_check
              _
            $region134: #{gru_encoder_forward.7} parent=131 // pred_check_branch
              %2706 = sbr.rel (0) target = $region136
            $region135: #{gru_encoder_forward.7} parent=131 // pred_region
              // Predicated region
              $region148: #{gru_encoder_forward.7} parent=135 // pred_check
                _
              $region149: #{gru_encoder_forward.7} parent=135 // pred_check_branch
                %2723 = sbr.rel (0) target = $region151
              $region150: #{gru_encoder_forward.7} parent=135 // pred_region
                loop: start=0, step=1, limit=1
                $region152: #{gru_encoder_forward.7} parent=150 // loop_pre_header
                  _
                $region153: #{gru_encoder_forward.7} parent=150 // loop_header
                  %s2725 = sphi 0, %s2729
                  %p2726 = scmp.ge.s32.totalorder %s2725, 1
                  %s2730 = sphi %s2693, %s2693
                  %s2731 = sphi %s2702, %s2702
                $region154: #{gru_encoder_forward.7} parent=150 // loop_header_branch
                  %2728 = sbr.rel (%p2726) target = $region158
                $region155: #{gru_encoder_forward.7} parent=150 // loop_body
                  %v2732 = vld [vmem:[%s2730] sm:$0xff]
                  %2733 = vst [vmem:[%s2731] sm:$0xff] %v2732
                  %v2734 = vld [vmem:[%s2730 + $0x8] sm:$0xff]
                  %2735 = vst [vmem:[%s2731 + $0x10] sm:$0xff] %v2734
                $region156: #{gru_encoder_forward.7} parent=150 // loop_footer
                  %s2729 = sadd.s32 1, %s2725
                $region157: #{gru_encoder_forward.7} parent=150 // loop_footer_branch
                  %2724 = sbr.rel target = $region153
                $region158: #{gru_encoder_forward.7} parent=150 // loop_exit
                  _
              $region151: #{gru_encoder_forward.7} parent=135 // pred_fallthru
                _
              // Predicated region
              $region159: #{gru_encoder_forward.7} parent=135 // pred_check
                _
              $region160: #{gru_encoder_forward.7} parent=135 // pred_check_branch
                %2737 = sbr.rel target = $region162
              $region161: #{gru_encoder_forward.7} parent=135 // pred_region
                _
              $region162: #{gru_encoder_forward.7} parent=135 // pred_fallthru
                _
            $region136: #{gru_encoder_forward.7} parent=131 // pred_fallthru
              _
            // Predicated region
            $region137: #{gru_encoder_forward.7} parent=131 // pred_check
              _
            $region138: #{gru_encoder_forward.7} parent=131 // pred_check_branch
              %2708 = sbr.rel target = $region140
            $region139: #{gru_encoder_forward.7} parent=131 // pred_region
              loop: start=0, step=1, limit=1
              $region141: #{gru_encoder_forward.7} parent=139 // loop_pre_header
                _
              $region142: #{gru_encoder_forward.7} parent=139 // loop_header
                %s2711 = sphi 0, %s2715
                %p2712 = scmp.ge.s32.totalorder %s2711, 1
                %s2716 = sphi %s2693, %s2693
                %s2717 = sphi %s2702, %s2702
              $region143: #{gru_encoder_forward.7} parent=139 // loop_header_branch
                %2714 = sbr.rel (%p2712) target = $region147
              $region144: #{gru_encoder_forward.7} parent=139 // loop_body
                %v2718 = vld [vmem:[%s2716] sm:$0xff]
                %2719 = vst [vmem:[%s2717] sm:$0xff] %v2718
                %v2720 = vld [vmem:[%s2716 + $0x8] sm:$0xff]
                %2721 = vst [vmem:[%s2717 + $0x10] sm:$0xff] %v2720
              $region145: #{gru_encoder_forward.7} parent=139 // loop_footer
                %s2715 = sadd.s32 1, %s2711
              $region146: #{gru_encoder_forward.7} parent=139 // loop_footer_branch
                %2710 = sbr.rel target = $region142
              $region147: #{gru_encoder_forward.7} parent=139 // loop_exit
                _
            $region140: #{gru_encoder_forward.7} parent=131 // pred_fallthru
              _
          $region132: #{gru_encoder_forward.7} parent=127 // pred_fallthru
            _
          %2738 = vnop
        $region128: #{gru_encoder_forward.7} parent=111 // pred_fallthru
          _
        // Predicated region
        $region163: #{gru_encoder_forward.7} parent=111 // pred_check
          %p2739 = pneg %p203
        $region164: #{gru_encoder_forward.7} parent=111 // pred_check_branch
          %2741 = sbr.rel (%p2739) target = $region166
        $region165: #{gru_encoder_forward.7} parent=111 // pred_region
          %s2742 = ssub.s32 1, %s19
          %s2743 = smul.addr %s2742, 8
          %s2744 = scalar_lea.vmem %s7, %s2743
          // Predicated region
          $region167: #{gru_encoder_forward.7} parent=165 // pred_check
            _
          $region168: #{gru_encoder_forward.7} parent=165 // pred_check_branch
            %2746 = sbr.rel (0) target = $region170
          $region169: #{gru_encoder_forward.7} parent=165 // pred_region
            // Predicated region
            $region171: #{gru_encoder_forward.7} parent=169 // pred_check
              _
            $region172: #{gru_encoder_forward.7} parent=169 // pred_check_branch
              %2748 = sbr.rel (0) target = $region174
            $region173: #{gru_encoder_forward.7} parent=169 // pred_region
              // Predicated region
              $region186: #{gru_encoder_forward.7} parent=173 // pred_check
                _
              $region187: #{gru_encoder_forward.7} parent=173 // pred_check_branch
                %2765 = sbr.rel (0) target = $region189
              $region188: #{gru_encoder_forward.7} parent=173 // pred_region
                loop: start=0, step=1, limit=1
                $region190: #{gru_encoder_forward.7} parent=188 // loop_pre_header
                  _
                $region191: #{gru_encoder_forward.7} parent=188 // loop_header
                  %s2767 = sphi 0, %s2771
                  %p2768 = scmp.ge.s32.totalorder %s2767, 1
                  %s2772 = sphi %s2697, %s2697
                  %s2773 = sphi %s2744, %s2744
                $region192: #{gru_encoder_forward.7} parent=188 // loop_header_branch
                  %2770 = sbr.rel (%p2768) target = $region196
                $region193: #{gru_encoder_forward.7} parent=188 // loop_body
                  %v2774 = vld [vmem:[%s2772] sm:$0xff]
                  %2775 = vst [vmem:[%s2773] sm:$0xff] %v2774
                  %v2776 = vld [vmem:[%s2772 + $0x8] sm:$0xff]
                  %2777 = vst [vmem:[%s2773 + $0x10] sm:$0xff] %v2776
                $region194: #{gru_encoder_forward.7} parent=188 // loop_footer
                  %s2771 = sadd.s32 1, %s2767
                $region195: #{gru_encoder_forward.7} parent=188 // loop_footer_branch
                  %2766 = sbr.rel target = $region191
                $region196: #{gru_encoder_forward.7} parent=188 // loop_exit
                  _
              $region189: #{gru_encoder_forward.7} parent=173 // pred_fallthru
                _
              // Predicated region
              $region197: #{gru_encoder_forward.7} parent=173 // pred_check
                _
              $region198: #{gru_encoder_forward.7} parent=173 // pred_check_branch
                %2779 = sbr.rel target = $region200
              $region199: #{gru_encoder_forward.7} parent=173 // pred_region
                _
              $region200: #{gru_encoder_forward.7} parent=173 // pred_fallthru
                _
            $region174: #{gru_encoder_forward.7} parent=169 // pred_fallthru
              _
            // Predicated region
            $region175: #{gru_encoder_forward.7} parent=169 // pred_check
              _
            $region176: #{gru_encoder_forward.7} parent=169 // pred_check_branch
              %2750 = sbr.rel target = $region178
            $region177: #{gru_encoder_forward.7} parent=169 // pred_region
              loop: start=0, step=1, limit=1
              $region179: #{gru_encoder_forward.7} parent=177 // loop_pre_header
                _
              $region180: #{gru_encoder_forward.7} parent=177 // loop_header
                %s2753 = sphi 0, %s2757
                %p2754 = scmp.ge.s32.totalorder %s2753, 1
                %s2758 = sphi %s2697, %s2697
                %s2759 = sphi %s2744, %s2744
              $region181: #{gru_encoder_forward.7} parent=177 // loop_header_branch
                %2756 = sbr.rel (%p2754) target = $region185
              $region182: #{gru_encoder_forward.7} parent=177 // loop_body
                %v2760 = vld [vmem:[%s2758] sm:$0xff]
                %2761 = vst [vmem:[%s2759] sm:$0xff] %v2760
                %v2762 = vld [vmem:[%s2758 + $0x8] sm:$0xff]
                %2763 = vst [vmem:[%s2759 + $0x10] sm:$0xff] %v2762
              $region183: #{gru_encoder_forward.7} parent=177 // loop_footer
                %s2757 = sadd.s32 1, %s2753
              $region184: #{gru_encoder_forward.7} parent=177 // loop_footer_branch
                %2752 = sbr.rel target = $region180
              $region185: #{gru_encoder_forward.7} parent=177 // loop_exit
                _
            $region178: #{gru_encoder_forward.7} parent=169 // pred_fallthru
              _
          $region170: #{gru_encoder_forward.7} parent=165 // pred_fallthru
            _
          %2780 = vnop
        $region166: #{gru_encoder_forward.7} parent=111 // pred_fallthru
          _
      $region112: #{gru_encoder_forward.7} parent=5 // pred_fallthru
        _
      %p2781 = scmp.le.s32.totalorder 2, %s14
      // Predicated region
      $region201: #{gru_encoder_forward.7} parent=5 // pred_check
        %p2782 = pneg %p2781
      $region202: #{gru_encoder_forward.7} parent=5 // pred_check_branch
        %2784 = sbr.rel (%p2782) target = $region204
      $region203: #{gru_encoder_forward.7} parent=5 // pred_region
        %s2785 = ssub.s32 %s14, 2
        // Predicated region
        $region205: #{gru_encoder_forward.7} parent=203 // pred_check
          %p2786 = pneg %p181
        $region206: #{gru_encoder_forward.7} parent=203 // pred_check_branch
          %2788 = sbr.rel (%p2786) target = $region208
        $region207: #{gru_encoder_forward.7} parent=203 // pred_region
          %s2789 = sand.u32 %s166, 1
          %s2790 = sand.u32 %s166, 1
          %s2791 = smul.addr %s2790, 16
          %s2792 = scalar_lea.vmem [#allocation6], %s2791
        $region208: #{gru_encoder_forward.7} parent=203 // pred_fallthru
          _
        // Predicated region
        $region209: #{gru_encoder_forward.7} parent=203 // pred_check
          %p2793 = pneg %p209
        $region210: #{gru_encoder_forward.7} parent=203 // pred_check_branch
          %2795 = sbr.rel (%p2793) target = $region212
        $region211: #{gru_encoder_forward.7} parent=203 // pred_region
          %s2796 = sand.u32 %s194, 1
          %s2797 = sand.u32 %s194, 1
          %s2798 = smul.addr %s2797, 16
          %s2799 = scalar_lea.vmem [#allocation7], %s2798
        $region212: #{gru_encoder_forward.7} parent=203 // pred_fallthru
          _
      $region204: #{gru_encoder_forward.7} parent=5 // pred_fallthru
        _
    $region6: #{gru_encoder_forward.7} parent=1 // loop_footer
      %s18 = sadd.s32 1, %s14
    $region7: #{gru_encoder_forward.7} parent=1 // loop_footer_branch
      %13 = sbr.rel target = $region3
    $region8: #{gru_encoder_forward.7} parent=1 // loop_exit
      _

</llo_original>
